<compile_context>
chip_gen: v7x
topology: tpu7x:2x2x1
jax: 0.10.0
libtpu: 0.0.40
codegen_flags: <defaults>
</compile_context>

<pallas_src>
import functools

import numpy as np
import jax
import jax.numpy as jnp
from jax import lax
from jax.experimental import pallas as pl
from jax.experimental.pallas import tpu as pltpu

BN_EPS = 1e-5
LANE = 128


def _round_up(x, m):
    return (x + m - 1) // m * m


def _fold_bn(gamma, beta, mean, var):
    scale = gamma / jnp.sqrt(var + BN_EPS)
    bias = beta - mean * scale
    return scale.astype(jnp.float32), bias.astype(jnp.float32)


def _pad_to(a, shape):
    return jnp.pad(a, [(0, s - d) for d, s in zip(a.shape, shape)])


# ------------------------- fused Pallas kernel -------------------------

def _bottleneck_kernel(x_ref, w1_ref, b1_ref, w2_ref, b2_ref, w3_ref, b3_ref,
                       o_ref, t_ref, *, TH, H, W, dil):
    # x_ref : (H+2d, W+2d, Cp)  spatially + channel padded image (f32)
    # w1    : (Cp, WCH) bf16 (BN scale folded),   b1: (1, WCH) f32
    # w2    : (3, 3, WCH, WCH) bf16,              b2: (1, WCH) f32
    # w3    : (WCH, Cp) bf16,                     b3: (1, Cp)  f32
    # o_ref : (TH, W, Cp) f32
    # t_ref : VMEM scratch (TH+2d, W+2d, WCH) f32  (conv1 output incl. halo)
    h = pl.program_id(1)
    r0 = pl.multiple_of(h * TH, TH)          # first padded row of this halo window
    Rwin = TH + 2 * dil
    Wp = W + 2 * dil
    Cp = x_ref.shape[-1]
    WCH = w1_ref.shape[-1]

    # ---------------- conv1 (1x1) + bn1 + relu over the halo window ----------
    xwin = x_ref[pl.ds(r0, Rwin), :, :]                            # (Rwin, Wp, Cp) f32
    t = jnp.dot(xwin.reshape(Rwin * Wp, Cp).astype(jnp.bfloat16),
                w1_ref[...], preferred_element_type=jnp.float32)
    t = jnp.maximum(t + b1_ref[...], 0.0).reshape(Rwin, Wp, WCH)

    # conv2 zero-pads its input: zero positions that fall outside the image.
    rows = r0 + lax.broadcasted_iota(jnp.int32, (Rwin, Wp, WCH), 0)
    cols = lax.broadcasted_iota(jnp.int32, (Rwin, Wp, WCH), 1)
    interior = ((rows >= dil) & (rows < H + dil) &
                (cols >= dil) & (cols < W + dil))
    t_ref[...] = jnp.where(interior, t, 0.0)

    # ---------------- conv2 (3x3, dilation) + bn2 + relu ---------------------
    acc = jnp.zeros((TH * W, WCH), jnp.float32)
    for ky in range(3):
        for kx in range(3):
            patch = t_ref[ky * dil:ky * dil + TH, kx * dil:kx * dil + W, :]
            acc = acc + jnp.dot(
                patch.reshape(TH * W, WCH).astype(jnp.bfloat16),
                w2_ref[ky, kx], preferred_element_type=jnp.float32)
    u = jnp.maximum(acc + b2_ref[...], 0.0)

    # ---------------- conv3 (1x1) + bn3 + residual add + relu ----------------
    ident = xwin[dil:dil + TH, dil:dil + W, :].reshape(TH * W, Cp)  # exact f32
    y = jnp.dot(u.astype(jnp.bfloat16), w3_ref[...],
                preferred_element_type=jnp.float32)
    o_ref[...] = jnp.maximum(y + b3_ref[...] + ident, 0.0).reshape(TH, W, Cp)


# ------------------------------- wrapper --------------------------------

def _row_tile(H):
    for th in (8, 4, 2, 1):
        if H % th == 0:
            return th
    return 1


def bottleneck_forward(x_nchw, params, *, stride=1, dilation=1, groups=1):
    assert stride == 1 and groups == 1, \
        "only the downsample=None (stride=1, groups=1) path is implemented"
    N, Cin, H, W = x_nchw.shape
    width = params["w1"].shape[1]
    outC = params["w3"].shape[1]
    assert outC == Cin, "downsample=None requires inplanes == planes*expansion"

    d = dilation
    s1, b1 = _fold_bn(*params["bn1"])
    s2, b2 = _fold_bn(*params["bn2"])
    s3, b3 = _fold_bn(*params["bn3"])

    # Fold BN scale into the conv weights, pad channels to the 128-lane width,
    # cast weights to bf16 for the MXU.  Biases stay f32.
    Cp = _round_up(Cin, LANE)
    WCH = _round_up(width, LANE)
    w1 = _pad_to(params["w1"] * s1[None, :], (Cp, WCH)).astype(jnp.bfloat16)
    w2 = _pad_to(params["w2"] * s2[None, None, None, :],
                 (3, 3, WCH, WCH)).astype(jnp.bfloat16)
    w3 = _pad_to(params["w3"] * s3[None, :], (WCH, Cp)).astype(jnp.bfloat16)
    b1p = _pad_to(b1[None, :], (1, WCH))
    b2p = _pad_to(b2[None, :], (1, WCH))
    b3p = _pad_to(b3[None, :], (1, Cp))

    # NCHW -> NHWC, channel pad to Cp, spatial halo of `dilation`.
    x = jnp.transpose(x_nchw, (0, 2, 3, 1)).astype(jnp.float32)
    xp = jnp.pad(x, ((0, 0), (d, d), (d, d), (0, Cp - Cin)))
    Hp, Wp = H + 2 * d, W + 2 * d

    TH = _row_tile(H)
    nH = H // TH

    kern = functools.partial(_bottleneck_kernel, TH=TH, H=H, W=W, dil=d)

    flops = 2 * N * H * W * (Cp * WCH + 9 * WCH * WCH + WCH * Cp)
    bytes_accessed = ((xp.size + N * H * W * Cp) * 4
                      + (w1.size + w2.size + w3.size) * 2)

    out_p = pl.pallas_call(
        kern,
        grid=(N, nH),
        in_specs=[
            pl.BlockSpec((None, Hp, Wp, Cp), lambda n, h: (n, 0, 0, 0)),
            pl.BlockSpec((Cp, WCH), lambda n, h: (0, 0)),
            pl.BlockSpec((1, WCH), lambda n, h: (0, 0)),
            pl.BlockSpec((3, 3, WCH, WCH), lambda n, h: (0, 0, 0, 0)),
            pl.BlockSpec((1, WCH), lambda n, h: (0, 0)),
            pl.BlockSpec((WCH, Cp), lambda n, h: (0, 0)),
            pl.BlockSpec((1, Cp), lambda n, h: (0, 0)),
        ],
        out_specs=pl.BlockSpec((None, TH, W, Cp), lambda n, h: (n, h, 0, 0)),
        out_shape=jax.ShapeDtypeStruct((N, H, W, Cp), jnp.float32),
        scratch_shapes=[pltpu.VMEM((TH + 2 * d, Wp, WCH), jnp.float32)],
        compiler_params=pltpu.CompilerParams(
            dimension_semantics=("parallel", "parallel"),
            vmem_limit_bytes=32 * 1024 * 1024),
        cost_estimate=pl.CostEstimate(flops=flops, transcendentals=0,
                                      bytes_accessed=bytes_accessed),
    )(xp, w1, b1p, w2, b2p, w3, b3p)

    out = out_p[..., :outC]                      # drop lane padding
    return jnp.transpose(out, (0, 3, 1, 2))      # NHWC -> NCHW


# --------------------------- pure-JAX reference ---------------------------

def bottleneck_ref(x_nchw, params, *, stride=1, dilation=1):
    hp = lax.Precision.HIGHEST
    dn = ("NCHW", "OIHW", "NCHW")

    def bn(y, gamma, beta, mean, var):
        sh = (1, -1, 1, 1)
        return (y - mean.reshape(sh)) / jnp.sqrt(var.reshape(sh) + BN_EPS) \
            * gamma.reshape(sh) + beta.reshape(sh)

    w1 = params["w1"].T[:, :, None, None]                 # (Cout, Cin, 1, 1)
    w2 = jnp.transpose(params["w2"], (3, 2, 0, 1))        # HWIO -> OIHW
    w3 = params["w3"].T[:, :, None, None]

    out = lax.conv_general_dilated(x_nchw, w1, (1, 1), "VALID",
                                   dimension_numbers=dn, precision=hp)
    out = jax.nn.relu(bn(out, *params["bn1"]))
    out = lax.conv_general_dilated(out, w2, (stride, stride),
                                   [(dilation, dilation), (dilation, dilation)],
                                   rhs_dilation=(dilation, dilation),
                                   dimension_numbers=dn, precision=hp)
    out = jax.nn.relu(bn(out, *params["bn2"]))
    out = lax.conv_general_dilated(out, w3, (1, 1), "VALID",
                                   dimension_numbers=dn, precision=hp)
    out = bn(out, *params["bn3"])
    out = out + x_nchw
    return jax.nn.relu(out)


# --------------------------------- main -----------------------------------

if __name__ == "__main__":
    # Bottleneck(downsample=None): inplanes == planes * expansion, stride=1.
    N, inplanes, H, W = 2, 16, 16, 16
    planes = 4
    base_width, groups, stride = 64, 1, 1
    width = int(planes * (base_width / 64.0)) * groups     # = 4
    out_ch = planes * 4                                     # = 16 == inplanes

    key = jax.random.PRNGKey(0)
    ks = jax.random.split(key, 8)

    def bn_params(k, c):
        k1, k2, k3, k4 = jax.random.split(k, 4)
        gamma = jax.random.uniform(k1, (c,), jnp.float32, 0.5, 1.5)
        beta = jax.random.normal(k2, (c,), jnp.float32) * 0.1
        mean = jax.random.normal(k3, (c,), jnp.float32) * 0.1
        var = jax.random.uniform(k4, (c,), jnp.float32, 0.5, 1.5)
        return (gamma, beta, mean, var)

    params = {
        # conv1: PyTorch (width, inplanes, 1, 1) -> stored (inplanes, width)
        "w1": jax.random.normal(ks[0], (inplanes, width), jnp.float32) * 0.1,
        # conv2: PyTorch (width, width, 3, 3) -> stored HWIO (3, 3, width, width)
        "w2": jax.random.normal(ks[1], (3, 3, width, width), jnp.float32) * 0.1,
        # conv3: PyTorch (out_ch, width, 1, 1) -> stored (width, out_ch)
        "w3": jax.random.normal(ks[2], (width, out_ch), jnp.float32) * 0.1,
        "bn1": bn_params(ks[3], width),
        "bn2": bn_params(ks[4], width),
        "bn3": bn_params(ks[5], out_ch),
    }

    x = jax.random.normal(ks[6], (N, inplanes, H, W), jnp.float32)

    # dilation=1 (standard ResNet) and dilation=2 (Deeplab-style dilated block)
    for dilation in (1, 2):
        out = jax.block_until_ready(
            bottleneck_forward(x, params, stride=stride, dilation=dilation))
        ref = jax.block_until_ready(
            bottleneck_ref(x, params, stride=stride, dilation=dilation))
        np.testing.assert_allclose(np.asarray(out), np.asarray(ref),
                                   rtol=2e-2, atol=2e-2)
        assert out.shape == (N, out_ch, H, W)

    print("KERNEL_OK")
</pallas_src>

<mosaic_0001>
module attributes {stable_mosaic.version = 11 : i64} {
  func.func @_bottleneck_kernel(%arg0: i32, %arg1: i32, %arg2: memref<1x18x18x128xf32, #tpu.memory_space<vmem>>, %arg3: memref<128x128xbf16, #tpu.memory_space<vmem>>, %arg4: memref<1x128xf32, #tpu.memory_space<vmem>>, %arg5: memref<3x3x128x128xbf16, #tpu.memory_space<vmem>>, %arg6: memref<1x128xf32, #tpu.memory_space<vmem>>, %arg7: memref<128x128xbf16, #tpu.memory_space<vmem>>, %arg8: memref<1x128xf32, #tpu.memory_space<vmem>>, %arg9: memref<1x8x16x128xf32, #tpu.memory_space<vmem>>, %arg10: memref<10x18x128xf32, #tpu.memory_space<vmem>>) attributes {dimension_semantics = [#tpu.dimension_semantics<parallel>, #tpu.dimension_semantics<parallel>], iteration_bounds = array<i64: 2, 2>, scalar_prefetch = 0 : i64, scratch_operands = 1 : i64, tpu.core_type = #tpu.core_type<tc>, window_params = [{transform_indices = @transform_0, window_bounds = array<i64: 1, 18, 18, 128>}, {pipeline_mode = #tpu.pipeline_mode<synchronous>, transform_indices = @transform_1, window_bounds = array<i64: 128, 128>}, {pipeline_mode = #tpu.pipeline_mode<synchronous>, transform_indices = @transform_2, window_bounds = array<i64: 1, 128>}, {pipeline_mode = #tpu.pipeline_mode<synchronous>, transform_indices = @transform_3, window_bounds = array<i64: 3, 3, 128, 128>}, {pipeline_mode = #tpu.pipeline_mode<synchronous>, transform_indices = @transform_4, window_bounds = array<i64: 1, 128>}, {pipeline_mode = #tpu.pipeline_mode<synchronous>, transform_indices = @transform_5, window_bounds = array<i64: 128, 128>}, {pipeline_mode = #tpu.pipeline_mode<synchronous>, transform_indices = @transform_6, window_bounds = array<i64: 1, 128>}, {transform_indices = @transform_7, window_bounds = array<i64: 1, 8, 16, 128>}]} {
    %c8_i32 = arith.constant 8 : i32
    %0 = arith.muli %arg1, %c8_i32 : i32
    %1 = tpu.assume_multiple %0, 8 : i32
    %c0 = arith.constant 0 : index
    %2 = arith.index_cast %1 : i32 to index
    %c0_0 = arith.constant 0 : index
    %c0_1 = arith.constant 0 : index
    %3 = vector.load %arg2[%c0, %2, %c0_0, %c0_1] : memref<1x18x18x128xf32, #tpu.memory_space<vmem>>, vector<1x10x18x128xf32>
    %4 = vector.shape_cast %3 : vector<1x10x18x128xf32> to vector<10x18x128xf32>
    %5 = vector.shape_cast %4 : vector<10x18x128xf32> to vector<180x128xf32>
    %6 = arith.truncf %5 : vector<180x128xf32> to vector<180x128xbf16>
    %c0_2 = arith.constant 0 : index
    %c0_3 = arith.constant 0 : index
    %7 = vector.load %arg3[%c0_2, %c0_3] : memref<128x128xbf16, #tpu.memory_space<vmem>>, vector<128x128xbf16>
    %cst = arith.constant dense<0.000000e+00> : vector<180x128xf32>
    %8 = tpu.matmul %6, %7, %cst {dimension_numbers = #tpu.dot_dimension_numbers<[1], [0], [0], [1], [0, 0, 1, 1], [], []>} : vector<180x128xbf16>, vector<128x128xbf16>, vector<180x128xf32> -> vector<180x128xf32>
    %c0_4 = arith.constant 0 : index
    %c0_5 = arith.constant 0 : index
    %9 = vector.load %arg4[%c0_4, %c0_5] : memref<1x128xf32, #tpu.memory_space<vmem>>, vector<1x128xf32>
    %10 = vector.broadcast %9 : vector<1x128xf32> to vector<180x128xf32>
    %11 = arith.addf %8, %10 : vector<180x128xf32>
    %cst_6 = arith.constant 0.000000e+00 : f32
    %12 = vector.broadcast %cst_6 : f32 to vector<180x128xf32>
    %13 = arith.maximumf %11, %12 : vector<180x128xf32>
    %14 = vector.shape_cast %13 : vector<180x128xf32> to vector<10x18x128xf32>
    %15 = tpu.iota {dimensions = array<i32: 0>} : vector<10x18x128xi32>
    %16 = vector.broadcast %1 : i32 to vector<10x18x128xi32>
    %17 = arith.addi %16, %15 : vector<10x18x128xi32>
    %18 = tpu.iota {dimensions = array<i32: 1>} : vector<10x18x128xi32>
    %c1_i32 = arith.constant 1 : i32
    %19 = vector.broadcast %c1_i32 : i32 to vector<10x18x128xi32>
    %20 = arith.cmpi sge, %17, %19 : vector<10x18x128xi32>
    %c17_i32 = arith.constant 17 : i32
    %21 = vector.broadcast %c17_i32 : i32 to vector<10x18x128xi32>
    %22 = arith.cmpi slt, %17, %21 : vector<10x18x128xi32>
    %23 = arith.andi %20, %22 : vector<10x18x128xi1>
    %c1_i32_7 = arith.constant 1 : i32
    %24 = vector.broadcast %c1_i32_7 : i32 to vector<10x18x128xi32>
    %25 = arith.cmpi sge, %18, %24 : vector<10x18x128xi32>
    %26 = arith.andi %23, %25 : vector<10x18x128xi1>
    %c17_i32_8 = arith.constant 17 : i32
    %27 = vector.broadcast %c17_i32_8 : i32 to vector<10x18x128xi32>
    %28 = arith.cmpi slt, %18, %27 : vector<10x18x128xi32>
    %29 = arith.andi %26, %28 : vector<10x18x128xi1>
    %cst_9 = arith.constant 0.000000e+00 : f32
    %30 = vector.broadcast %cst_9 : f32 to vector<10x18x128xf32>
    %31 = arith.select %29, %14, %30 : vector<10x18x128xi1>, vector<10x18x128xf32>
    %c0_10 = arith.constant 0 : index
    %c0_11 = arith.constant 0 : index
    %c0_12 = arith.constant 0 : index
    %32 = vector.load %arg10[%c0_10, %c0_11, %c0_12] : memref<10x18x128xf32, #tpu.memory_space<vmem>>, vector<10x18x128xf32>
    tpu.vector_store %arg10[%c0_10, %c0_11, %c0_12], %31 {strides = array<i32>} : memref<10x18x128xf32, #tpu.memory_space<vmem>>, vector<10x18x128xf32>,
    %cst_13 = arith.constant 0.000000e+00 : f32
    %33 = vector.broadcast %cst_13 : f32 to vector<128x128xf32>
    %c0_14 = arith.constant 0 : index
    %c0_15 = arith.constant 0 : index
    %c0_16 = arith.constant 0 : index
    %34 = vector.load %arg10[%c0_14, %c0_15, %c0_16] : memref<10x18x128xf32, #tpu.memory_space<vmem>>, vector<8x16x128xf32>
    %35 = vector.shape_cast %34 : vector<8x16x128xf32> to vector<128x128xf32>
    %36 = arith.truncf %35 : vector<128x128xf32> to vector<128x128xbf16>
    %c0_17 = arith.constant 0 : index
    %c0_18 = arith.constant 0 : index
    %c0_19 = arith.constant 0 : index
    %c0_20 = arith.constant 0 : index
    %37 = vector.load %arg5[%c0_17, %c0_18, %c0_19, %c0_20] : memref<3x3x128x128xbf16, #tpu.memory_space<vmem>>, vector<1x1x128x128xbf16>
    %38 = vector.shape_cast %37 : vector<1x1x128x128xbf16> to vector<128x128xbf16>
    %cst_21 = arith.constant dense<0.000000e+00> : vector<128x128xf32>
    %39 = tpu.matmul %36, %38, %cst_21 {dimension_numbers = #tpu.dot_dimension_numbers<[1], [0], [0], [1], [0, 0, 1, 1], [], []>} : vector<128x128xbf16>, vector<128x128xbf16>, vector<128x128xf32> -> vector<128x128xf32>
    %40 = arith.addf %33, %39 : vector<128x128xf32>
    %c0_22 = arith.constant 0 : index
    %c1 = arith.constant 1 : index
    %c0_23 = arith.constant 0 : index
    %41 = vector.load %arg10[%c0_22, %c1, %c0_23] : memref<10x18x128xf32, #tpu.memory_space<vmem>>, vector<8x16x128xf32>
    %42 = vector.shape_cast %41 : vector<8x16x128xf32> to vector<128x128xf32>
    %43 = arith.truncf %42 : vector<128x128xf32> to vector<128x128xbf16>
    %c0_24 = arith.constant 0 : index
    %c1_25 = arith.constant 1 : index
    %c0_26 = arith.constant 0 : index
    %c0_27 = arith.constant 0 : index
    %44 = vector.load %arg5[%c0_24, %c1_25, %c0_26, %c0_27] : memref<3x3x128x128xbf16, #tpu.memory_space<vmem>>, vector<1x1x128x128xbf16>
    %45 = vector.shape_cast %44 : vector<1x1x128x128xbf16> to vector<128x128xbf16>
    %cst_28 = arith.constant dense<0.000000e+00> : vector<128x128xf32>
    %46 = tpu.matmul %43, %45, %cst_28 {dimension_numbers = #tpu.dot_dimension_numbers<[1], [0], [0], [1], [0, 0, 1, 1], [], []>} : vector<128x128xbf16>, vector<128x128xbf16>, vector<128x128xf32> -> vector<128x128xf32>
    %47 = arith.addf %40, %46 : vector<128x128xf32>
    %c0_29 = arith.constant 0 : index
    %c2 = arith.constant 2 : index
    %c0_30 = arith.constant 0 : index
    %48 = vector.load %arg10[%c0_29, %c2, %c0_30] : memref<10x18x128xf32, #tpu.memory_space<vmem>>, vector<8x16x128xf32>
    %49 = vector.shape_cast %48 : vector<8x16x128xf32> to vector<128x128xf32>
    %50 = arith.truncf %49 : vector<128x128xf32> to vector<128x128xbf16>
    %c0_31 = arith.constant 0 : index
    %c2_32 = arith.constant 2 : index
    %c0_33 = arith.constant 0 : index
    %c0_34 = arith.constant 0 : index
    %51 = vector.load %arg5[%c0_31, %c2_32, %c0_33, %c0_34] : memref<3x3x128x128xbf16, #tpu.memory_space<vmem>>, vector<1x1x128x128xbf16>
    %52 = vector.shape_cast %51 : vector<1x1x128x128xbf16> to vector<128x128xbf16>
    %cst_35 = arith.constant dense<0.000000e+00> : vector<128x128xf32>
    %53 = tpu.matmul %50, %52, %cst_35 {dimension_numbers = #tpu.dot_dimension_numbers<[1], [0], [0], [1], [0, 0, 1, 1], [], []>} : vector<128x128xbf16>, vector<128x128xbf16>, vector<128x128xf32> -> vector<128x128xf32>
    %54 = arith.addf %47, %53 : vector<128x128xf32>
    %c1_36 = arith.constant 1 : index
    %c0_37 = arith.constant 0 : index
    %c0_38 = arith.constant 0 : index
    %55 = vector.load %arg10[%c1_36, %c0_37, %c0_38] : memref<10x18x128xf32, #tpu.memory_space<vmem>>, vector<8x16x128xf32>
    %56 = vector.shape_cast %55 : vector<8x16x128xf32> to vector<128x128xf32>
    %57 = arith.truncf %56 : vector<128x128xf32> to vector<128x128xbf16>
    %c1_39 = arith.constant 1 : index
    %c0_40 = arith.constant 0 : index
    %c0_41 = arith.constant 0 : index
    %c0_42 = arith.constant 0 : index
    %58 = vector.load %arg5[%c1_39, %c0_40, %c0_41, %c0_42] : memref<3x3x128x128xbf16, #tpu.memory_space<vmem>>, vector<1x1x128x128xbf16>
    %59 = vector.shape_cast %58 : vector<1x1x128x128xbf16> to vector<128x128xbf16>
    %cst_43 = arith.constant dense<0.000000e+00> : vector<128x128xf32>
    %60 = tpu.matmul %57, %59, %cst_43 {dimension_numbers = #tpu.dot_dimension_numbers<[1], [0], [0], [1], [0, 0, 1, 1], [], []>} : vector<128x128xbf16>, vector<128x128xbf16>, vector<128x128xf32> -> vector<128x128xf32>
    %61 = arith.addf %54, %60 : vector<128x128xf32>
    %c1_44 = arith.constant 1 : index
    %c1_45 = arith.constant 1 : index
    %c0_46 = arith.constant 0 : index
    %62 = vector.load %arg10[%c1_44, %c1_45, %c0_46] : memref<10x18x128xf32, #tpu.memory_space<vmem>>, vector<8x16x128xf32>
    %63 = vector.shape_cast %62 : vector<8x16x128xf32> to vector<128x128xf32>
    %64 = arith.truncf %63 : vector<128x128xf32> to vector<128x128xbf16>
    %c1_47 = arith.constant 1 : index
    %c1_48 = arith.constant 1 : index
    %c0_49 = arith.constant 0 : index
    %c0_50 = arith.constant 0 : index
    %65 = vector.load %arg5[%c1_47, %c1_48, %c0_49, %c0_50] : memref<3x3x128x128xbf16, #tpu.memory_space<vmem>>, vector<1x1x128x128xbf16>
    %66 = vector.shape_cast %65 : vector<1x1x128x128xbf16> to vector<128x128xbf16>
    %cst_51 = arith.constant dense<0.000000e+00> : vector<128x128xf32>
    %67 = tpu.matmul %64, %66, %cst_51 {dimension_numbers = #tpu.dot_dimension_numbers<[1], [0], [0], [1], [0, 0, 1, 1], [], []>} : vector<128x128xbf16>, vector<128x128xbf16>, vector<128x128xf32> -> vector<128x128xf32>
    %68 = arith.addf %61, %67 : vector<128x128xf32>
    %c1_52 = arith.constant 1 : index
    %c2_53 = arith.constant 2 : index
    %c0_54 = arith.constant 0 : index
    %69 = vector.load %arg10[%c1_52, %c2_53, %c0_54] : memref<10x18x128xf32, #tpu.memory_space<vmem>>, vector<8x16x128xf32>
    %70 = vector.shape_cast %69 : vector<8x16x128xf32> to vector<128x128xf32>
    %71 = arith.truncf %70 : vector<128x128xf32> to vector<128x128xbf16>
    %c1_55 = arith.constant 1 : index
    %c2_56 = arith.constant 2 : index
    %c0_57 = arith.constant 0 : index
    %c0_58 = arith.constant 0 : index
    %72 = vector.load %arg5[%c1_55, %c2_56, %c0_57, %c0_58] : memref<3x3x128x128xbf16, #tpu.memory_space<vmem>>, vector<1x1x128x128xbf16>
    %73 = vector.shape_cast %72 : vector<1x1x128x128xbf16> to vector<128x128xbf16>
    %cst_59 = arith.constant dense<0.000000e+00> : vector<128x128xf32>
    %74 = tpu.matmul %71, %73, %cst_59 {dimension_numbers = #tpu.dot_dimension_numbers<[1], [0], [0], [1], [0, 0, 1, 1], [], []>} : vector<128x128xbf16>, vector<128x128xbf16>, vector<128x128xf32> -> vector<128x128xf32>
    %75 = arith.addf %68, %74 : vector<128x128xf32>
    %c2_60 = arith.constant 2 : index
    %c0_61 = arith.constant 0 : index
    %c0_62 = arith.constant 0 : index
    %76 = vector.load %arg10[%c2_60, %c0_61, %c0_62] : memref<10x18x128xf32, #tpu.memory_space<vmem>>, vector<8x16x128xf32>
    %77 = vector.shape_cast %76 : vector<8x16x128xf32> to vector<128x128xf32>
    %78 = arith.truncf %77 : vector<128x128xf32> to vector<128x128xbf16>
    %c2_63 = arith.constant 2 : index
    %c0_64 = arith.constant 0 : index
    %c0_65 = arith.constant 0 : index
    %c0_66 = arith.constant 0 : index
    %79 = vector.load %arg5[%c2_63, %c0_64, %c0_65, %c0_66] : memref<3x3x128x128xbf16, #tpu.memory_space<vmem>>, vector<1x1x128x128xbf16>
    %80 = vector.shape_cast %79 : vector<1x1x128x128xbf16> to vector<128x128xbf16>
    %cst_67 = arith.constant dense<0.000000e+00> : vector<128x128xf32>
    %81 = tpu.matmul %78, %80, %cst_67 {dimension_numbers = #tpu.dot_dimension_numbers<[1], [0], [0], [1], [0, 0, 1, 1], [], []>} : vector<128x128xbf16>, vector<128x128xbf16>, vector<128x128xf32> -> vector<128x128xf32>
    %82 = arith.addf %75, %81 : vector<128x128xf32>
    %c2_68 = arith.constant 2 : index
    %c1_69 = arith.constant 1 : index
    %c0_70 = arith.constant 0 : index
    %83 = vector.load %arg10[%c2_68, %c1_69, %c0_70] : memref<10x18x128xf32, #tpu.memory_space<vmem>>, vector<8x16x128xf32>
    %84 = vector.shape_cast %83 : vector<8x16x128xf32> to vector<128x128xf32>
    %85 = arith.truncf %84 : vector<128x128xf32> to vector<128x128xbf16>
    %c2_71 = arith.constant 2 : index
    %c1_72 = arith.constant 1 : index
    %c0_73 = arith.constant 0 : index
    %c0_74 = arith.constant 0 : index
    %86 = vector.load %arg5[%c2_71, %c1_72, %c0_73, %c0_74] : memref<3x3x128x128xbf16, #tpu.memory_space<vmem>>, vector<1x1x128x128xbf16>
    %87 = vector.shape_cast %86 : vector<1x1x128x128xbf16> to vector<128x128xbf16>
    %cst_75 = arith.constant dense<0.000000e+00> : vector<128x128xf32>
    %88 = tpu.matmul %85, %87, %cst_75 {dimension_numbers = #tpu.dot_dimension_numbers<[1], [0], [0], [1], [0, 0, 1, 1], [], []>} : vector<128x128xbf16>, vector<128x128xbf16>, vector<128x128xf32> -> vector<128x128xf32>
    %89 = arith.addf %82, %88 : vector<128x128xf32>
    %c2_76 = arith.constant 2 : index
    %c2_77 = arith.constant 2 : index
    %c0_78 = arith.constant 0 : index
    %90 = vector.load %arg10[%c2_76, %c2_77, %c0_78] : memref<10x18x128xf32, #tpu.memory_space<vmem>>, vector<8x16x128xf32>
    %91 = vector.shape_cast %90 : vector<8x16x128xf32> to vector<128x128xf32>
    %92 = arith.truncf %91 : vector<128x128xf32> to vector<128x128xbf16>
    %c2_79 = arith.constant 2 : index
    %c2_80 = arith.constant 2 : index
    %c0_81 = arith.constant 0 : index
    %c0_82 = arith.constant 0 : index
    %93 = vector.load %arg5[%c2_79, %c2_80, %c0_81, %c0_82] : memref<3x3x128x128xbf16, #tpu.memory_space<vmem>>, vector<1x1x128x128xbf16>
    %94 = vector.shape_cast %93 : vector<1x1x128x128xbf16> to vector<128x128xbf16>
    %cst_83 = arith.constant dense<0.000000e+00> : vector<128x128xf32>
    %95 = tpu.matmul %92, %94, %cst_83 {dimension_numbers = #tpu.dot_dimension_numbers<[1], [0], [0], [1], [0, 0, 1, 1], [], []>} : vector<128x128xbf16>, vector<128x128xbf16>, vector<128x128xf32> -> vector<128x128xf32>
    %96 = arith.addf %89, %95 : vector<128x128xf32>
    %c0_84 = arith.constant 0 : index
    %c0_85 = arith.constant 0 : index
    %97 = vector.load %arg6[%c0_84, %c0_85] : memref<1x128xf32, #tpu.memory_space<vmem>>, vector<1x128xf32>
    %98 = vector.broadcast %97 : vector<1x128xf32> to vector<128x128xf32>
    %99 = arith.addf %96, %98 : vector<128x128xf32>
    %cst_86 = arith.constant 0.000000e+00 : f32
    %100 = vector.broadcast %cst_86 : f32 to vector<128x128xf32>
    %101 = arith.maximumf %99, %100 : vector<128x128xf32>
    %102 = vector.extract_strided_slice %4 {offsets = [1, 1, 0], sizes = [8, 16, 128], strides = [1, 1, 1]} : vector<10x18x128xf32> to vector<8x16x128xf32>
    %103 = vector.shape_cast %102 : vector<8x16x128xf32> to vector<128x128xf32>
    %104 = arith.truncf %101 : vector<128x128xf32> to vector<128x128xbf16>
    %c0_87 = arith.constant 0 : index
    %c0_88 = arith.constant 0 : index
    %105 = vector.load %arg7[%c0_87, %c0_88] : memref<128x128xbf16, #tpu.memory_space<vmem>>, vector<128x128xbf16>
    %cst_89 = arith.constant dense<0.000000e+00> : vector<128x128xf32>
    %106 = tpu.matmul %104, %105, %cst_89 {dimension_numbers = #tpu.dot_dimension_numbers<[1], [0], [0], [1], [0, 0, 1, 1], [], []>} : vector<128x128xbf16>, vector<128x128xbf16>, vector<128x128xf32> -> vector<128x128xf32>
    %c0_90 = arith.constant 0 : index
    %c0_91 = arith.constant 0 : index
    %107 = vector.load %arg8[%c0_90, %c0_91] : memref<1x128xf32, #tpu.memory_space<vmem>>, vector<1x128xf32>
    %108 = vector.broadcast %107 : vector<1x128xf32> to vector<128x128xf32>
    %109 = arith.addf %106, %108 : vector<128x128xf32>
    %110 = arith.addf %109, %103 : vector<128x128xf32>
    %cst_92 = arith.constant 0.000000e+00 : f32
    %111 = vector.broadcast %cst_92 : f32 to vector<128x128xf32>
    %112 = arith.maximumf %110, %111 : vector<128x128xf32>
    %113 = vector.shape_cast %112 : vector<128x128xf32> to vector<8x16x128xf32>
    %c0_93 = arith.constant 0 : index
    %c0_94 = arith.constant 0 : index
    %c0_95 = arith.constant 0 : index
    %c0_96 = arith.constant 0 : index
    %114 = vector.load %arg9[%c0_93, %c0_94, %c0_95, %c0_96] : memref<1x8x16x128xf32, #tpu.memory_space<vmem>>, vector<1x8x16x128xf32>
    %115 = vector.shape_cast %114 : vector<1x8x16x128xf32> to vector<8x16x128xf32>
    %116 = vector.shape_cast %113 : vector<8x16x128xf32> to vector<1x8x16x128xf32>
    tpu.vector_store %arg9[%c0_93, %c0_94, %c0_95, %c0_96], %116 {strides = array<i32>} : memref<1x8x16x128xf32, #tpu.memory_space<vmem>>, vector<1x8x16x128xf32>,
    return
  }
  func.func @transform_0(%arg0: i32, %arg1: i32) -> (i32, i32, i32, i32) {
    %c0_i32 = arith.constant 0 : i32
    %c0_i32_0 = arith.constant 0 : i32
    %c0_i32_1 = arith.constant 0 : i32
    %c0_i32_2 = arith.constant 0 : i32
    return %arg0, %c0_i32, %c0_i32_0, %c0_i32_1 : i32, i32, i32, i32
  }
  func.func @transform_1(%arg0: i32, %arg1: i32) -> (i32, i32) {
    %c0_i32 = arith.constant 0 : i32
    %c0_i32_0 = arith.constant 0 : i32
    %c0_i32_1 = arith.constant 0 : i32
    return %c0_i32, %c0_i32_0 : i32, i32
  }
  func.func @transform_2(%arg0: i32, %arg1: i32) -> (i32, i32) {
    %c0_i32 = arith.constant 0 : i32
    %c0_i32_0 = arith.constant 0 : i32
    %c0_i32_1 = arith.constant 0 : i32
    return %c0_i32, %c0_i32_0 : i32, i32
  }
  func.func @transform_3(%arg0: i32, %arg1: i32) -> (i32, i32, i32, i32) {
    %c0_i32 = arith.constant 0 : i32
    %c0_i32_0 = arith.constant 0 : i32
    %c0_i32_1 = arith.constant 0 : i32
    %c0_i32_2 = arith.constant 0 : i32
    %c0_i32_3 = arith.constant 0 : i32
    return %c0_i32, %c0_i32_0, %c0_i32_1, %c0_i32_2 : i32, i32, i32, i32
  }
  func.func @transform_4(%arg0: i32, %arg1: i32) -> (i32, i32) {
    %c0_i32 = arith.constant 0 : i32
    %c0_i32_0 = arith.constant 0 : i32
    %c0_i32_1 = arith.constant 0 : i32
    return %c0_i32, %c0_i32_0 : i32, i32
  }
  func.func @transform_5(%arg0: i32, %arg1: i32) -> (i32, i32) {
    %c0_i32 = arith.constant 0 : i32
    %c0_i32_0 = arith.constant 0 : i32
    %c0_i32_1 = arith.constant 0 : i32
    return %c0_i32, %c0_i32_0 : i32, i32
  }
  func.func @transform_6(%arg0: i32, %arg1: i32) -> (i32, i32) {
    %c0_i32 = arith.constant 0 : i32
    %c0_i32_0 = arith.constant 0 : i32
    %c0_i32_1 = arith.constant 0 : i32
    return %c0_i32, %c0_i32_0 : i32, i32
  }
  func.func @transform_7(%arg0: i32, %arg1: i32) -> (i32, i32, i32, i32) {
    %c0_i32 = arith.constant 0 : i32
    %c0_i32_0 = arith.constant 0 : i32
    %c0_i32_1 = arith.constant 0 : i32
    return %arg0, %arg1, %c0_i32, %c0_i32_0 : i32, i32, i32, i32
  }
}

</mosaic_0001>

<llo_original>
// kernel: tpu_custom_call.1
$region0: #{tpu_custom_call.1}
  #allocation0 [shape = 'u32[]', space=smem, size = 0x4, offset = 0x4, fixed_abs, tag = 'smem constant byte address 0x4 - core index']
  #allocation1 [shape = 'u32[144,128]{1,0:T(1,128)}', space=vmem, size = 0x12000, scoped, tag = 'internal scratch']
  #allocation2 [shape = 'f32[10,18,128]{2,1,0:T(8,128)}', space=vmem, size = 0x1e000, scoped, tag = 'scratch operand']
  %s0 = inlined_call_operand.vmem [shape: f32[2,18,18,128], index: 0, kind: input, shape index: {}]
  %s1 = inlined_call_operand.vmem [shape: bf16[128,128], index: 1, kind: input, shape index: {}]
  %s2 = inlined_call_operand.vmem [shape: f32[1,128], index: 2, kind: input, shape index: {}]
  %s3 = inlined_call_operand.vmem [shape: bf16[3,3,128,128], index: 3, kind: input, shape index: {}]
  %s4 = inlined_call_operand.vmem [shape: f32[1,128], index: 4, kind: input, shape index: {}]
  %s5 = inlined_call_operand.vmem [shape: bf16[128,128], index: 5, kind: input, shape index: {}]
  %s6 = inlined_call_operand.vmem [shape: f32[1,128], index: 6, kind: input, shape index: {}]
  %s7 = inlined_call_operand.hbm [shape: f32[2,16,16,128], index: 7, kind: output, shape index: {}]
  %s8 = sld [smem:[#allocation0]]
  $region61: #{tpu_custom_call.1} parent=0
    _
  %s10 = ssub.s32 1, %s8
  %s11 = scalar_select 0, %s10, %s8
  $region1: #{tpu_custom_call.1} parent=0
    #allocation3 [shape = 'u8[131072]{0}', space=vmem, size = 0x20000, scoped, tag = 'output window, operand 0']
    #allocation4 [shape = 's32[2]{0}', space=sflag, size = 0x8, scoped, tag = 'scoped memory for tpu_custom_call.1']
    %12 = vsyncpa [#allocation4], 0
    %s13 = scalar_lea.sflag [#allocation4], 1
    %14 = vsyncpa %s13, 0
    loop: start=0, step=1, limit=6
    $region2: #{tpu_custom_call.1} parent=1 // loop_pre_header
      _
    $region3: #{tpu_custom_call.1} parent=1 // loop_header
      %s16 = sphi 0, %s20
      %p17 = scmp.ge.s32.totalorder %s16, 6
      %s23 = sphi 0, %s35
      %s24 = sphi 0, %s31
      %s25 = sphi 0, %s23
      %s26 = sphi 0, %s24
      %s27 = sphi 0, %s25
      %s28 = sphi 0, %s26
      %s38 = sphi 0, %s40
      %s41 = sphi 0, %s38
      %s42 = sphi 0, %s41
      %s58 = sphi 0, %s42
      %s62 = sphi 0, %s62
      %s64 = sphi 0, %s62
      %s65 = sphi 0, %s64
      %s79 = sphi 0, %s65
      %s83 = sphi 0, %s83
      %s85 = sphi 0, %s83
      %s86 = sphi 0, %s85
      %s100 = sphi 0, %s86
      %s104 = sphi 0, %s104
      %s106 = sphi 0, %s104
      %s107 = sphi 0, %s106
      %s121 = sphi 0, %s107
      %s125 = sphi 0, %s125
      %s127 = sphi 0, %s125
      %s128 = sphi 0, %s127
      %s142 = sphi 0, %s128
      %s146 = sphi 0, %s146
      %s148 = sphi 0, %s146
      %s149 = sphi 0, %s148
      %s163 = sphi 0, %s149
      %s167 = sphi 0, %s167
      %s169 = sphi 0, %s167
      %s170 = sphi 0, %s169
      %s184 = sphi 0, %s170
      %s192 = sphi 0, %s194
      %s195 = sphi 0, %s192
      %s196 = sphi 0, %s195
      %s212 = sphi 0, %s196
    $region4: #{tpu_custom_call.1} parent=1 // loop_header_branch
      %19 = sbr.rel (%p17) target = $region8
    $region5: #{tpu_custom_call.1} parent=1 // loop_body
      %s21 = ssub.s32 %s16, 1
      %s22 = ssub.s32 %s16, 2
      %s29 = sadd.s32 1, %s24
      %p30 = scmp.ge.s32.totalorder %s29, 2
      %s31 = scalar_select %p30, 0, %s29
      %s32 = sadd.s32 1, %s23
      %s33 = scalar_select %p30, %s32, %s23
      %p34 = scmp.ge.s32.totalorder %s33, 2
      %s35 = scalar_select %p34, 0, %s33
      %s36 = ssub.s32 %s23, %s35
      %p37 = scmp.eq.s32.totalorder %s36, 0
      %s39 = sadd.s32 %s38, 1
      %s40 = scalar_select %p37, %s38, %s39
      %p43 = pneg %p37
      %p44 = scmp.eq.s32.totalorder %s16, 3
      %p45 = por %p43, %p44
      %p46 = scmp.ne.s32.totalorder %s38, %s41
      %p47 = scmp.eq.s32.totalorder %s16, 0
      %p48 = por %p46, %p47
      %p49 = scmp.ne.s32.totalorder %s38, %s41
      %p50 = scmp.eq.s32.totalorder %s21, 3
      %p51 = por %p49, %p50
      %p52 = scmp.ne.s32.totalorder %s41, %s42
      %p53 = scmp.eq.s32.totalorder %s21, 0
      %p54 = por %p52, %p53
      %p55 = scmp.ne.s32.totalorder %s41, %s42
      %p56 = scmp.eq.s32.totalorder %s22, 3
      %p57 = por %p55, %p56
      %p59 = scmp.ne.s32.totalorder %s42, %s58
      %p60 = scmp.eq.s32.totalorder %s22, 0
      %p61 = por %p59, %p60
      %s63 = sadd.s32 %s62, 1
      %p66 = scmp.eq.s32.totalorder %s16, 3
      %p67 = scmp.ne.s32.totalorder %s62, %s64
      %p68 = scmp.eq.s32.totalorder %s16, 0
      %p69 = por %p67, %p68
      %p70 = scmp.ne.s32.totalorder %s62, %s64
      %p71 = scmp.eq.s32.totalorder %s21, 3
      %p72 = por %p70, %p71
      %p73 = scmp.ne.s32.totalorder %s64, %s65
      %p74 = scmp.eq.s32.totalorder %s21, 0
      %p75 = por %p73, %p74
      %p76 = scmp.ne.s32.totalorder %s64, %s65
      %p77 = scmp.eq.s32.totalorder %s22, 3
      %p78 = por %p76, %p77
      %p80 = scmp.ne.s32.totalorder %s65, %s79
      %p81 = scmp.eq.s32.totalorder %s22, 0
      %p82 = por %p80, %p81
      %s84 = sadd.s32 %s83, 1
      %p87 = scmp.eq.s32.totalorder %s16, 3
      %p88 = scmp.ne.s32.totalorder %s83, %s85
      %p89 = scmp.eq.s32.totalorder %s16, 0
      %p90 = por %p88, %p89
      %p91 = scmp.ne.s32.totalorder %s83, %s85
      %p92 = scmp.eq.s32.totalorder %s21, 3
      %p93 = por %p91, %p92
      %p94 = scmp.ne.s32.totalorder %s85, %s86
      %p95 = scmp.eq.s32.totalorder %s21, 0
      %p96 = por %p94, %p95
      %p97 = scmp.ne.s32.totalorder %s85, %s86
      %p98 = scmp.eq.s32.totalorder %s22, 3
      %p99 = por %p97, %p98
      %p101 = scmp.ne.s32.totalorder %s86, %s100
      %p102 = scmp.eq.s32.totalorder %s22, 0
      %p103 = por %p101, %p102
      %s105 = sadd.s32 %s104, 1
      %p108 = scmp.eq.s32.totalorder %s16, 3
      %p109 = scmp.ne.s32.totalorder %s104, %s106
      %p110 = scmp.eq.s32.totalorder %s16, 0
      %p111 = por %p109, %p110
      %p112 = scmp.ne.s32.totalorder %s104, %s106
      %p113 = scmp.eq.s32.totalorder %s21, 3
      %p114 = por %p112, %p113
      %p115 = scmp.ne.s32.totalorder %s106, %s107
      %p116 = scmp.eq.s32.totalorder %s21, 0
      %p117 = por %p115, %p116
      %p118 = scmp.ne.s32.totalorder %s106, %s107
      %p119 = scmp.eq.s32.totalorder %s22, 3
      %p120 = por %p118, %p119
      %p122 = scmp.ne.s32.totalorder %s107, %s121
      %p123 = scmp.eq.s32.totalorder %s22, 0
      %p124 = por %p122, %p123
      %s126 = sadd.s32 %s125, 1
      %p129 = scmp.eq.s32.totalorder %s16, 3
      %p130 = scmp.ne.s32.totalorder %s125, %s127
      %p131 = scmp.eq.s32.totalorder %s16, 0
      %p132 = por %p130, %p131
      %p133 = scmp.ne.s32.totalorder %s125, %s127
      %p134 = scmp.eq.s32.totalorder %s21, 3
      %p135 = por %p133, %p134
      %p136 = scmp.ne.s32.totalorder %s127, %s128
      %p137 = scmp.eq.s32.totalorder %s21, 0
      %p138 = por %p136, %p137
      %p139 = scmp.ne.s32.totalorder %s127, %s128
      %p140 = scmp.eq.s32.totalorder %s22, 3
      %p141 = por %p139, %p140
      %p143 = scmp.ne.s32.totalorder %s128, %s142
      %p144 = scmp.eq.s32.totalorder %s22, 0
      %p145 = por %p143, %p144
      %s147 = sadd.s32 %s146, 1
      %p150 = scmp.eq.s32.totalorder %s16, 3
      %p151 = scmp.ne.s32.totalorder %s146, %s148
      %p152 = scmp.eq.s32.totalorder %s16, 0
      %p153 = por %p151, %p152
      %p154 = scmp.ne.s32.totalorder %s146, %s148
      %p155 = scmp.eq.s32.totalorder %s21, 3
      %p156 = por %p154, %p155
      %p157 = scmp.ne.s32.totalorder %s148, %s149
      %p158 = scmp.eq.s32.totalorder %s21, 0
      %p159 = por %p157, %p158
      %p160 = scmp.ne.s32.totalorder %s148, %s149
      %p161 = scmp.eq.s32.totalorder %s22, 3
      %p162 = por %p160, %p161
      %p164 = scmp.ne.s32.totalorder %s149, %s163
      %p165 = scmp.eq.s32.totalorder %s22, 0
      %p166 = por %p164, %p165
      %s168 = sadd.s32 %s167, 1
      %p171 = scmp.eq.s32.totalorder %s16, 3
      %p172 = scmp.ne.s32.totalorder %s167, %s169
      %p173 = scmp.eq.s32.totalorder %s16, 0
      %p174 = por %p172, %p173
      %p175 = scmp.ne.s32.totalorder %s167, %s169
      %p176 = scmp.eq.s32.totalorder %s21, 3
      %p177 = por %p175, %p176
      %p178 = scmp.ne.s32.totalorder %s169, %s170
      %p179 = scmp.eq.s32.totalorder %s21, 0
      %p180 = por %p178, %p179
      %p181 = scmp.ne.s32.totalorder %s169, %s170
      %p182 = scmp.eq.s32.totalorder %s22, 3
      %p183 = por %p181, %p182
      %p185 = scmp.ne.s32.totalorder %s170, %s184
      %p186 = scmp.eq.s32.totalorder %s22, 0
      %p187 = por %p185, %p186
      %s188 = ssub.s32 %s23, %s35
      %s189 = ssub.s32 %s24, %s31
      %s190 = sor.u32 %s188, %s189
      %p191 = scmp.eq.s32.totalorder %s190, 0
      %s193 = sadd.s32 %s192, 1
      %s194 = scalar_select %p191, %s192, %s193
      %p197 = pneg %p191
      %p198 = scmp.eq.s32.totalorder %s16, 3
      %p199 = por %p197, %p198
      %p200 = scmp.ne.s32.totalorder %s192, %s195
      %p201 = scmp.eq.s32.totalorder %s16, 0
      %p202 = por %p200, %p201
      %p203 = scmp.ne.s32.totalorder %s192, %s195
      %p204 = scmp.eq.s32.totalorder %s21, 3
      %p205 = por %p203, %p204
      %p206 = scmp.ne.s32.totalorder %s195, %s196
      %p207 = scmp.eq.s32.totalorder %s21, 0
      %p208 = por %p206, %p207
      %p209 = scmp.ne.s32.totalorder %s195, %s196
      %p210 = scmp.eq.s32.totalorder %s22, 3
      %p211 = por %p209, %p210
      %p213 = scmp.ne.s32.totalorder %s196, %s212
      %p214 = scmp.eq.s32.totalorder %s22, 0
      %p215 = por %p213, %p214
      %p216 = scmp.le.s32.totalorder 1, %s16
      %p217 = scmp.lt.s32.totalorder %s16, 5
      %p218 = pnand %p216, %p217
      %p219 = pneg %p218
      // Predicated region
      $region9: #{tpu_custom_call.1} parent=5 // pred_check
        _
      $region10: #{tpu_custom_call.1} parent=5 // pred_check_branch
        %221 = sbr.rel (%p218) target = $region12
      $region11: #{tpu_custom_call.1} parent=5 // pred_region
        %s222 = ssub.s32 %s16, 1
        // Predicated region
        $region13: #{tpu_custom_call.1} parent=11 // pred_check
          %p223 = pneg %p75
        $region14: #{tpu_custom_call.1} parent=11 // pred_check_branch
          %225 = sbr.rel (%p223) target = $region16
        $region15: #{tpu_custom_call.1} parent=11 // pred_region
          _
        $region16: #{tpu_custom_call.1} parent=11 // pred_fallthru
          _
        // Predicated region
        $region17: #{tpu_custom_call.1} parent=11 // pred_check
          %p226 = pneg %p96
        $region18: #{tpu_custom_call.1} parent=11 // pred_check_branch
          %228 = sbr.rel (%p226) target = $region20
        $region19: #{tpu_custom_call.1} parent=11 // pred_region
          _
        $region20: #{tpu_custom_call.1} parent=11 // pred_fallthru
          _
        // Predicated region
        $region21: #{tpu_custom_call.1} parent=11 // pred_check
          %p229 = pneg %p117
        $region22: #{tpu_custom_call.1} parent=11 // pred_check_branch
          %231 = sbr.rel (%p229) target = $region24
        $region23: #{tpu_custom_call.1} parent=11 // pred_region
          _
        $region24: #{tpu_custom_call.1} parent=11 // pred_fallthru
          _
        // Predicated region
        $region25: #{tpu_custom_call.1} parent=11 // pred_check
          %p232 = pneg %p138
        $region26: #{tpu_custom_call.1} parent=11 // pred_check_branch
          %234 = sbr.rel (%p232) target = $region28
        $region27: #{tpu_custom_call.1} parent=11 // pred_region
          _
        $region28: #{tpu_custom_call.1} parent=11 // pred_fallthru
          _
        // Predicated region
        $region29: #{tpu_custom_call.1} parent=11 // pred_check
          %p235 = pneg %p159
        $region30: #{tpu_custom_call.1} parent=11 // pred_check_branch
          %237 = sbr.rel (%p235) target = $region32
        $region31: #{tpu_custom_call.1} parent=11 // pred_region
          _
        $region32: #{tpu_custom_call.1} parent=11 // pred_fallthru
          _
        // Predicated region
        $region33: #{tpu_custom_call.1} parent=11 // pred_check
          %p238 = pneg %p180
        $region34: #{tpu_custom_call.1} parent=11 // pred_check_branch
          %240 = sbr.rel (%p238) target = $region36
        $region35: #{tpu_custom_call.1} parent=11 // pred_region
          _
        $region36: #{tpu_custom_call.1} parent=11 // pred_fallthru
          _
      $region12: #{tpu_custom_call.1} parent=5 // pred_fallthru
        _
      %p241 = scmp.lt.s32.totalorder %s16, 4
      // Predicated region
      $region37: #{tpu_custom_call.1} parent=5 // pred_check
        %p242 = pneg %p241
      $region38: #{tpu_custom_call.1} parent=5 // pred_check_branch
        %244 = sbr.rel (%p242) target = $region40
      $region39: #{tpu_custom_call.1} parent=5 // pred_region
        // Predicated region
        $region41: #{tpu_custom_call.1} parent=39 // pred_check
          %p245 = pneg %p48
        $region42: #{tpu_custom_call.1} parent=39 // pred_check_branch
          %247 = sbr.rel (%p245) target = $region44
        $region43: #{tpu_custom_call.1} parent=39 // pred_region
          %p248 = scmp.lt.s32.totalorder %s23, 1
          %s249 = scalar_select %p248, %s23, 1
          %s250 = smul.addr %s249, 54
          %s251 = smul.addr %s250, 8
          %s252 = scalar_lea.vmem %s0, %s251
        $region44: #{tpu_custom_call.1} parent=39 // pred_fallthru
          _
      $region40: #{tpu_custom_call.1} parent=5 // pred_fallthru
        _
      %p253 = scmp.le.s32.totalorder 1, %s16
      %p254 = scmp.lt.s32.totalorder %s16, 5
      %p255 = pnand %p253, %p254
      %p256 = pneg %p255
      // Predicated region
      $region45: #{tpu_custom_call.1} parent=5 // pred_check
        _
      $region46: #{tpu_custom_call.1} parent=5 // pred_check_branch
        %258 = sbr.rel (%p255) target = $region48
      $region47: #{tpu_custom_call.1} parent=5 // pred_region
        %s259 = ssub.s32 %s16, 1
        %p260 = scmp.lt.s32.totalorder %s25, 1
        %s261 = scalar_select %p260, %s25, 1
        %s262 = smul.addr %s261, 54
        %s263 = smul.addr %s262, 8
        %s264 = scalar_lea.vmem %s0, %s263
        %p265 = pneg %p54
        %p266 = pneg %p51
        %p267 = pneg %p75
        %p268 = pneg %p72
        %p269 = pneg %p96
        %p270 = pneg %p93
        %p271 = pneg %p117
        %p272 = pneg %p114
        %p273 = pneg %p138
        %p274 = pneg %p135
        %p275 = pneg %p159
        %p276 = pneg %p156
        %p277 = pneg %p180
        %p278 = pneg %p177
        %p279 = pneg %p208
        %p280 = pneg %p205
        %s281 = sand.u32 %s195, 1
        %s282 = scalar_lea.sflag [#allocation4], %s281
        %s283 = sand.u32 %s195, 1
        %s284 = smul.addr %s283, 128
        %s285 = scalar_lea.vmem [#allocation3], %s284
        %p286 = scmp.lt.s32.totalorder %s25, 1
        %s287 = scalar_select %p286, %s25, 1
        %s288 = smul.addr %s287, 54
        %s289 = smul.addr %s288, 8
        %s290 = scalar_lea.vmem %s0, %s289
        %s291 = smul.u32 8, %s26
        %s293 = smul.u32 %s26, 8
        %s294 = smul.u32 %s293, 24
        %s295 = scalar_lea.vmem %s290, %s294
        %v296 = vld [vmem:[%s295] sm:$0xff]
        %v297 = vld [vmem:[%s295 + $0x8] sm:$0xff]
        %v298 = vld [vmem:[%s295 + $0x10] sm:$0x3]
        %v299 = vld [vmem:[%s295 + $0x18] sm:$0xff]
        %v300 = vld [vmem:[%s295 + $0x20] sm:$0xff]
        %v301 = vld [vmem:[%s295 + $0x28] sm:$0x3]
        %v302 = vld [vmem:[%s295 + $0x30] sm:$0xff]
        %v303 = vld [vmem:[%s295 + $0x38] sm:$0xff]
        %v304 = vld [vmem:[%s295 + $0x40] sm:$0x3]
        %v305 = vld [vmem:[%s295 + $0x48] sm:$0xff]
        %v306 = vld [vmem:[%s295 + $0x50] sm:$0xff]
        %v307 = vld [vmem:[%s295 + $0x58] sm:$0x3]
        %v308 = vld [vmem:[%s295 + $0x60] sm:$0xff]
        %v309 = vld [vmem:[%s295 + $0x68] sm:$0xff]
        %v310 = vld [vmem:[%s295 + $0x70] sm:$0x3]
        %v311 = vld [vmem:[%s295 + $0x78] sm:$0xff]
        %v312 = vld [vmem:[%s295 + $0x80] sm:$0xff]
        %v313 = vld [vmem:[%s295 + $0x88] sm:$0x3]
        %v314 = vld [vmem:[%s295 + $0x90] sm:$0xff]
        %v315 = vld [vmem:[%s295 + $0x98] sm:$0xff]
        %v316 = vld [vmem:[%s295 + $0xa0] sm:$0x3]
        %v317 = vld [vmem:[%s295 + $0xa8] sm:$0xff]
        %v318 = vld [vmem:[%s295 + $0xb0] sm:$0xff]
        %v319 = vld [vmem:[%s295 + $0xb8] sm:$0x3]
        %v320 = vld [vmem:[%s295 + $0xc0] sm:$0xff]
        %v321 = vld [vmem:[%s295 + $0xc8] sm:$0xff]
        %v322 = vld [vmem:[%s295 + $0xd0] sm:$0x3]
        %v323 = vld [vmem:[%s295 + $0xd8] sm:$0xff]
        %v324 = vld [vmem:[%s295 + $0xe0] sm:$0xff]
        %v325 = vld [vmem:[%s295 + $0xe8] sm:$0x3]
        %v356 = vcombine.high %v296, %v296
        %v358 = vunpack.c.l.s4 1983009808
        %v359 = vunpack.c.0.s8 %v358
        %v360 = vlaneseq
        %v361 = vshrl.u32 %v360, 7
        %v362 = vsub.s32 %v359, %v361
        %v363 = vrot.slane %v296, %v362
        %v365 = vunpack.c.l.s4 1983009808
        %v366 = vunpack.c.0.s8 %v365
        %v367 = vlaneseq
        %v368 = vshrl.u32 %v367, 7
        %v369 = vsub.s32 %v366, %v368
        %v370 = vrot.slane %v356, %v369
        %v371 = vcombine.high %v363, %v363
        %v372 = vcombine.high %v370, %v370
        %v373 = vcombine.high %v297, %v297
        %v375 = vunpack.c.l.s4 1983009808
        %v376 = vunpack.c.0.s8 %v375
        %v377 = vlaneseq
        %v378 = vshrl.u32 %v377, 7
        %v379 = vsub.s32 %v376, %v378
        %v380 = vrot.slane %v297, %v379
        %v382 = vunpack.c.l.s4 1983009808
        %v383 = vunpack.c.0.s8 %v382
        %v384 = vlaneseq
        %v385 = vshrl.u32 %v384, 7
        %v386 = vsub.s32 %v383, %v385
        %v387 = vrot.slane %v373, %v386
        %v388 = vcombine.high %v380, %v380
        %v389 = vcombine.high %v387, %v387
        %v391 = vunpack.c.l.s4 1983009808
        %v392 = vunpack.c.0.s8 %v391
        %v393 = vlaneseq
        %v394 = vshrl.u32 %v393, 7
        %v395 = vsub.s32 %v392, %v394
        %v396 = vrot.slane %v298, %v395
        %v397 = vcombine.high %v299, %v299
        %v399 = vunpack.c.l.s4 1983009808
        %v400 = vunpack.c.0.s8 %v399
        %v401 = vlaneseq
        %v402 = vshrl.u32 %v401, 7
        %v403 = vsub.s32 %v400, %v402
        %v404 = vrot.slane %v299, %v403
        %v406 = vunpack.c.l.s4 1983009808
        %v407 = vunpack.c.0.s8 %v406
        %v408 = vlaneseq
        %v409 = vshrl.u32 %v408, 7
        %v410 = vsub.s32 %v407, %v409
        %v411 = vrot.slane %v397, %v410
        %v412 = vcombine.high %v404, %v404
        %v413 = vcombine.high %v411, %v411
        %v414 = vcombine.high %v300, %v300
        %v416 = vunpack.c.l.s4 1983009808
        %v417 = vunpack.c.0.s8 %v416
        %v418 = vlaneseq
        %v419 = vshrl.u32 %v418, 7
        %v420 = vsub.s32 %v417, %v419
        %v421 = vrot.slane %v300, %v420
        %v423 = vunpack.c.l.s4 1983009808
        %v424 = vunpack.c.0.s8 %v423
        %v425 = vlaneseq
        %v426 = vshrl.u32 %v425, 7
        %v427 = vsub.s32 %v424, %v426
        %v428 = vrot.slane %v414, %v427
        %v429 = vcombine.high %v421, %v421
        %v430 = vcombine.high %v428, %v428
        %v432 = vunpack.c.l.s4 1983009808
        %v433 = vunpack.c.0.s8 %v432
        %v434 = vlaneseq
        %v435 = vshrl.u32 %v434, 7
        %v436 = vsub.s32 %v433, %v435
        %v437 = vrot.slane %v301, %v436
        %v438 = vcombine.high %v302, %v302
        %v440 = vunpack.c.l.s4 1983009808
        %v441 = vunpack.c.0.s8 %v440
        %v442 = vlaneseq
        %v443 = vshrl.u32 %v442, 7
        %v444 = vsub.s32 %v441, %v443
        %v445 = vrot.slane %v302, %v444
        %v447 = vunpack.c.l.s4 1983009808
        %v448 = vunpack.c.0.s8 %v447
        %v449 = vlaneseq
        %v450 = vshrl.u32 %v449, 7
        %v451 = vsub.s32 %v448, %v450
        %v452 = vrot.slane %v438, %v451
        %v453 = vcombine.high %v445, %v445
        %v454 = vcombine.high %v452, %v452
        %v455 = vcombine.high %v303, %v303
        %v457 = vunpack.c.l.s4 1983009808
        %v458 = vunpack.c.0.s8 %v457
        %v459 = vlaneseq
        %v460 = vshrl.u32 %v459, 7
        %v461 = vsub.s32 %v458, %v460
        %v462 = vrot.slane %v303, %v461
        %v464 = vunpack.c.l.s4 1983009808
        %v465 = vunpack.c.0.s8 %v464
        %v466 = vlaneseq
        %v467 = vshrl.u32 %v466, 7
        %v468 = vsub.s32 %v465, %v467
        %v469 = vrot.slane %v455, %v468
        %v470 = vcombine.high %v462, %v462
        %v471 = vcombine.high %v469, %v469
        %v473 = vunpack.c.l.s4 1983009808
        %v474 = vunpack.c.0.s8 %v473
        %v475 = vlaneseq
        %v476 = vshrl.u32 %v475, 7
        %v477 = vsub.s32 %v474, %v476
        %v478 = vrot.slane %v304, %v477
        %v479 = vcombine.high %v305, %v305
        %v481 = vunpack.c.l.s4 1983009808
        %v482 = vunpack.c.0.s8 %v481
        %v483 = vlaneseq
        %v484 = vshrl.u32 %v483, 7
        %v485 = vsub.s32 %v482, %v484
        %v486 = vrot.slane %v305, %v485
        %v488 = vunpack.c.l.s4 1983009808
        %v489 = vunpack.c.0.s8 %v488
        %v490 = vlaneseq
        %v491 = vshrl.u32 %v490, 7
        %v492 = vsub.s32 %v489, %v491
        %v493 = vrot.slane %v479, %v492
        %v494 = vcombine.high %v486, %v486
        %v495 = vcombine.high %v493, %v493
        %v496 = vcombine.high %v306, %v306
        %v498 = vunpack.c.l.s4 1983009808
        %v499 = vunpack.c.0.s8 %v498
        %v500 = vlaneseq
        %v501 = vshrl.u32 %v500, 7
        %v502 = vsub.s32 %v499, %v501
        %v503 = vrot.slane %v306, %v502
        %v505 = vunpack.c.l.s4 1983009808
        %v506 = vunpack.c.0.s8 %v505
        %v507 = vlaneseq
        %v508 = vshrl.u32 %v507, 7
        %v509 = vsub.s32 %v506, %v508
        %v510 = vrot.slane %v496, %v509
        %v511 = vcombine.high %v503, %v503
        %v512 = vcombine.high %v510, %v510
        %v514 = vunpack.c.l.s4 1983009808
        %v515 = vunpack.c.0.s8 %v514
        %v516 = vlaneseq
        %v517 = vshrl.u32 %v516, 7
        %v518 = vsub.s32 %v515, %v517
        %v519 = vrot.slane %v307, %v518
        %v520 = vcombine.high %v308, %v308
        %v522 = vunpack.c.l.s4 1983009808
        %v523 = vunpack.c.0.s8 %v522
        %v524 = vlaneseq
        %v525 = vshrl.u32 %v524, 7
        %v526 = vsub.s32 %v523, %v525
        %v527 = vrot.slane %v308, %v526
        %v529 = vunpack.c.l.s4 1983009808
        %v530 = vunpack.c.0.s8 %v529
        %v531 = vlaneseq
        %v532 = vshrl.u32 %v531, 7
        %v533 = vsub.s32 %v530, %v532
        %v534 = vrot.slane %v520, %v533
        %v535 = vcombine.high %v527, %v527
        %v536 = vcombine.high %v534, %v534
        %v537 = vcombine.high %v309, %v309
        %v539 = vunpack.c.l.s4 1983009808
        %v540 = vunpack.c.0.s8 %v539
        %v541 = vlaneseq
        %v542 = vshrl.u32 %v541, 7
        %v543 = vsub.s32 %v540, %v542
        %v544 = vrot.slane %v309, %v543
        %v546 = vunpack.c.l.s4 1983009808
        %v547 = vunpack.c.0.s8 %v546
        %v548 = vlaneseq
        %v549 = vshrl.u32 %v548, 7
        %v550 = vsub.s32 %v547, %v549
        %v551 = vrot.slane %v537, %v550
        %v552 = vcombine.high %v544, %v544
        %v553 = vcombine.high %v551, %v551
        %v555 = vunpack.c.l.s4 1983009808
        %v556 = vunpack.c.0.s8 %v555
        %v557 = vlaneseq
        %v558 = vshrl.u32 %v557, 7
        %v559 = vsub.s32 %v556, %v558
        %v560 = vrot.slane %v310, %v559
        %v561 = vcombine.high %v311, %v311
        %v563 = vunpack.c.l.s4 1983009808
        %v564 = vunpack.c.0.s8 %v563
        %v565 = vlaneseq
        %v566 = vshrl.u32 %v565, 7
        %v567 = vsub.s32 %v564, %v566
        %v568 = vrot.slane %v311, %v567
        %v570 = vunpack.c.l.s4 1983009808
        %v571 = vunpack.c.0.s8 %v570
        %v572 = vlaneseq
        %v573 = vshrl.u32 %v572, 7
        %v574 = vsub.s32 %v571, %v573
        %v575 = vrot.slane %v561, %v574
        %v576 = vcombine.high %v568, %v568
        %v577 = vcombine.high %v575, %v575
        %v578 = vcombine.high %v312, %v312
        %v580 = vunpack.c.l.s4 1983009808
        %v581 = vunpack.c.0.s8 %v580
        %v582 = vlaneseq
        %v583 = vshrl.u32 %v582, 7
        %v584 = vsub.s32 %v581, %v583
        %v585 = vrot.slane %v312, %v584
        %v587 = vunpack.c.l.s4 1983009808
        %v588 = vunpack.c.0.s8 %v587
        %v589 = vlaneseq
        %v590 = vshrl.u32 %v589, 7
        %v591 = vsub.s32 %v588, %v590
        %v592 = vrot.slane %v578, %v591
        %v593 = vcombine.high %v585, %v585
        %v594 = vcombine.high %v592, %v592
        %v596 = vunpack.c.l.s4 1983009808
        %v597 = vunpack.c.0.s8 %v596
        %v598 = vlaneseq
        %v599 = vshrl.u32 %v598, 7
        %v600 = vsub.s32 %v597, %v599
        %v601 = vrot.slane %v313, %v600
        %v602 = vcombine.high %v314, %v314
        %v604 = vunpack.c.l.s4 1983009808
        %v605 = vunpack.c.0.s8 %v604
        %v606 = vlaneseq
        %v607 = vshrl.u32 %v606, 7
        %v608 = vsub.s32 %v605, %v607
        %v609 = vrot.slane %v314, %v608
        %v611 = vunpack.c.l.s4 1983009808
        %v612 = vunpack.c.0.s8 %v611
        %v613 = vlaneseq
        %v614 = vshrl.u32 %v613, 7
        %v615 = vsub.s32 %v612, %v614
        %v616 = vrot.slane %v602, %v615
        %v617 = vcombine.high %v609, %v609
        %v618 = vcombine.high %v616, %v616
        %v619 = vcombine.high %v315, %v315
        %v621 = vunpack.c.l.s4 1983009808
        %v622 = vunpack.c.0.s8 %v621
        %v623 = vlaneseq
        %v624 = vshrl.u32 %v623, 7
        %v625 = vsub.s32 %v622, %v624
        %v626 = vrot.slane %v315, %v625
        %v628 = vunpack.c.l.s4 1983009808
        %v629 = vunpack.c.0.s8 %v628
        %v630 = vlaneseq
        %v631 = vshrl.u32 %v630, 7
        %v632 = vsub.s32 %v629, %v631
        %v633 = vrot.slane %v619, %v632
        %v634 = vcombine.high %v626, %v626
        %v635 = vcombine.high %v633, %v633
        %v637 = vunpack.c.l.s4 1983009808
        %v638 = vunpack.c.0.s8 %v637
        %v639 = vlaneseq
        %v640 = vshrl.u32 %v639, 7
        %v641 = vsub.s32 %v638, %v640
        %v642 = vrot.slane %v316, %v641
        %v643 = vcombine.high %v317, %v317
        %v645 = vunpack.c.l.s4 1983009808
        %v646 = vunpack.c.0.s8 %v645
        %v647 = vlaneseq
        %v648 = vshrl.u32 %v647, 7
        %v649 = vsub.s32 %v646, %v648
        %v650 = vrot.slane %v317, %v649
        %v652 = vunpack.c.l.s4 1983009808
        %v653 = vunpack.c.0.s8 %v652
        %v654 = vlaneseq
        %v655 = vshrl.u32 %v654, 7
        %v656 = vsub.s32 %v653, %v655
        %v657 = vrot.slane %v643, %v656
        %v658 = vcombine.high %v650, %v650
        %v659 = vcombine.high %v657, %v657
        %v660 = vcombine.high %v318, %v318
        %v662 = vunpack.c.l.s4 1983009808
        %v663 = vunpack.c.0.s8 %v662
        %v664 = vlaneseq
        %v665 = vshrl.u32 %v664, 7
        %v666 = vsub.s32 %v663, %v665
        %v667 = vrot.slane %v318, %v666
        %v669 = vunpack.c.l.s4 1983009808
        %v670 = vunpack.c.0.s8 %v669
        %v671 = vlaneseq
        %v672 = vshrl.u32 %v671, 7
        %v673 = vsub.s32 %v670, %v672
        %v674 = vrot.slane %v660, %v673
        %v675 = vcombine.high %v667, %v667
        %v676 = vcombine.high %v674, %v674
        %v678 = vunpack.c.l.s4 1983009808
        %v679 = vunpack.c.0.s8 %v678
        %v680 = vlaneseq
        %v681 = vshrl.u32 %v680, 7
        %v682 = vsub.s32 %v679, %v681
        %v683 = vrot.slane %v319, %v682
        %v684 = vcombine.high %v320, %v320
        %v686 = vunpack.c.l.s4 1983009808
        %v687 = vunpack.c.0.s8 %v686
        %v688 = vlaneseq
        %v689 = vshrl.u32 %v688, 7
        %v690 = vsub.s32 %v687, %v689
        %v691 = vrot.slane %v320, %v690
        %v693 = vunpack.c.l.s4 1983009808
        %v694 = vunpack.c.0.s8 %v693
        %v695 = vlaneseq
        %v696 = vshrl.u32 %v695, 7
        %v697 = vsub.s32 %v694, %v696
        %v698 = vrot.slane %v684, %v697
        %v699 = vcombine.high %v691, %v691
        %v700 = vcombine.high %v698, %v698
        %v701 = vcombine.high %v321, %v321
        %v703 = vunpack.c.l.s4 1983009808
        %v704 = vunpack.c.0.s8 %v703
        %v705 = vlaneseq
        %v706 = vshrl.u32 %v705, 7
        %v707 = vsub.s32 %v704, %v706
        %v708 = vrot.slane %v321, %v707
        %v710 = vunpack.c.l.s4 1983009808
        %v711 = vunpack.c.0.s8 %v710
        %v712 = vlaneseq
        %v713 = vshrl.u32 %v712, 7
        %v714 = vsub.s32 %v711, %v713
        %v715 = vrot.slane %v701, %v714
        %v716 = vcombine.high %v708, %v708
        %v717 = vcombine.high %v715, %v715
        %v719 = vunpack.c.l.s4 1983009808
        %v720 = vunpack.c.0.s8 %v719
        %v721 = vlaneseq
        %v722 = vshrl.u32 %v721, 7
        %v723 = vsub.s32 %v720, %v722
        %v724 = vrot.slane %v322, %v723
        %v725 = vcombine.high %v323, %v323
        %v727 = vunpack.c.l.s4 1983009808
        %v728 = vunpack.c.0.s8 %v727
        %v729 = vlaneseq
        %v730 = vshrl.u32 %v729, 7
        %v731 = vsub.s32 %v728, %v730
        %v732 = vrot.slane %v323, %v731
        %v734 = vunpack.c.l.s4 1983009808
        %v735 = vunpack.c.0.s8 %v734
        %v736 = vlaneseq
        %v737 = vshrl.u32 %v736, 7
        %v738 = vsub.s32 %v735, %v737
        %v739 = vrot.slane %v725, %v738
        %v740 = vcombine.high %v732, %v732
        %v741 = vcombine.high %v739, %v739
        %v742 = vcombine.high %v324, %v324
        %v744 = vunpack.c.l.s4 1983009808
        %v745 = vunpack.c.0.s8 %v744
        %v746 = vlaneseq
        %v747 = vshrl.u32 %v746, 7
        %v748 = vsub.s32 %v745, %v747
        %v749 = vrot.slane %v324, %v748
        %v751 = vunpack.c.l.s4 1983009808
        %v752 = vunpack.c.0.s8 %v751
        %v753 = vlaneseq
        %v754 = vshrl.u32 %v753, 7
        %v755 = vsub.s32 %v752, %v754
        %v756 = vrot.slane %v742, %v755
        %v757 = vcombine.high %v749, %v749
        %v758 = vcombine.high %v756, %v756
        %v760 = vunpack.c.l.s4 1983009808
        %v761 = vunpack.c.0.s8 %v760
        %v762 = vlaneseq
        %v763 = vshrl.u32 %v762, 7
        %v764 = vsub.s32 %v761, %v763
        %v765 = vrot.slane %v325, %v764
        %v766 = vcombine.low %v363, %v371
        %v767 = vcombine.low %v370, %v372
        %v769 = vunpack.c.l.s4 1983009808
        %v770 = vunpack.c.0.s8 %v769
        %v771 = vlaneseq
        %v772 = vshrl.u32 %v771, 7
        %v773 = vsub.s32 %v770, %v772
        %v774 = vrot.slane %v766, %v773
        %v776 = vunpack.c.l.s4 1983009808
        %v777 = vunpack.c.0.s8 %v776
        %v778 = vlaneseq
        %v779 = vshrl.u32 %v778, 7
        %v780 = vsub.s32 %v777, %v779
        %v781 = vrot.slane %v767, %v780
        %v782 = vcombine.low %v774, %v781
        %v783 = vcombine.low %v380, %v388
        %v784 = vcombine.low %v387, %v389
        %v786 = vunpack.c.l.s4 1983009808
        %v787 = vunpack.c.0.s8 %v786
        %v788 = vlaneseq
        %v789 = vshrl.u32 %v788, 7
        %v790 = vsub.s32 %v787, %v789
        %v791 = vrot.slane %v783, %v790
        %v793 = vunpack.c.l.s4 1983009808
        %v794 = vunpack.c.0.s8 %v793
        %v795 = vlaneseq
        %v796 = vshrl.u32 %v795, 7
        %v797 = vsub.s32 %v794, %v796
        %v798 = vrot.slane %v784, %v797
        %v799 = vcombine.low %v791, %v798
        %v800 = vcombine.low %v396, %v404
        %v801 = vcombine.low %v412, %v411
        %v803 = vunpack.c.l.s4 1983009808
        %v804 = vunpack.c.0.s8 %v803
        %v805 = vlaneseq
        %v806 = vshrl.u32 %v805, 7
        %v807 = vsub.s32 %v804, %v806
        %v808 = vrot.slane %v800, %v807
        %v810 = vunpack.c.l.s4 1983009808
        %v811 = vunpack.c.0.s8 %v810
        %v812 = vlaneseq
        %v813 = vshrl.u32 %v812, 7
        %v814 = vsub.s32 %v811, %v813
        %v815 = vrot.slane %v801, %v814
        %v816 = vcombine.low %v808, %v815
        %v817 = vcombine.low %v413, %v421
        %v818 = vcombine.low %v429, %v428
        %v820 = vunpack.c.l.s4 1983009808
        %v821 = vunpack.c.0.s8 %v820
        %v822 = vlaneseq
        %v823 = vshrl.u32 %v822, 7
        %v824 = vsub.s32 %v821, %v823
        %v825 = vrot.slane %v817, %v824
        %v827 = vunpack.c.l.s4 1983009808
        %v828 = vunpack.c.0.s8 %v827
        %v829 = vlaneseq
        %v830 = vshrl.u32 %v829, 7
        %v831 = vsub.s32 %v828, %v830
        %v832 = vrot.slane %v818, %v831
        %v833 = vcombine.low %v825, %v832
        %v834 = vcombine.low %v430, %v437
        %v835 = vcombine.low %v445, %v453
        %v837 = vunpack.c.l.s4 1983009808
        %v838 = vunpack.c.0.s8 %v837
        %v839 = vlaneseq
        %v840 = vshrl.u32 %v839, 7
        %v841 = vsub.s32 %v838, %v840
        %v842 = vrot.slane %v834, %v841
        %v844 = vunpack.c.l.s4 1983009808
        %v845 = vunpack.c.0.s8 %v844
        %v846 = vlaneseq
        %v847 = vshrl.u32 %v846, 7
        %v848 = vsub.s32 %v845, %v847
        %v849 = vrot.slane %v835, %v848
        %v850 = vcombine.low %v842, %v849
        %v851 = vcombine.low %v452, %v454
        %v852 = vcombine.low %v462, %v470
        %v854 = vunpack.c.l.s4 1983009808
        %v855 = vunpack.c.0.s8 %v854
        %v856 = vlaneseq
        %v857 = vshrl.u32 %v856, 7
        %v858 = vsub.s32 %v855, %v857
        %v859 = vrot.slane %v851, %v858
        %v861 = vunpack.c.l.s4 1983009808
        %v862 = vunpack.c.0.s8 %v861
        %v863 = vlaneseq
        %v864 = vshrl.u32 %v863, 7
        %v865 = vsub.s32 %v862, %v864
        %v866 = vrot.slane %v852, %v865
        %v867 = vcombine.low %v859, %v866
        %v868 = vcombine.low %v469, %v471
        %v869 = vcombine.low %v478, %v486
        %v871 = vunpack.c.l.s4 1983009808
        %v872 = vunpack.c.0.s8 %v871
        %v873 = vlaneseq
        %v874 = vshrl.u32 %v873, 7
        %v875 = vsub.s32 %v872, %v874
        %v876 = vrot.slane %v868, %v875
        %v878 = vunpack.c.l.s4 1983009808
        %v879 = vunpack.c.0.s8 %v878
        %v880 = vlaneseq
        %v881 = vshrl.u32 %v880, 7
        %v882 = vsub.s32 %v879, %v881
        %v883 = vrot.slane %v869, %v882
        %v884 = vcombine.low %v876, %v883
        %v885 = vcombine.low %v494, %v493
        %v886 = vcombine.low %v495, %v503
        %v888 = vunpack.c.l.s4 1983009808
        %v889 = vunpack.c.0.s8 %v888
        %v890 = vlaneseq
        %v891 = vshrl.u32 %v890, 7
        %v892 = vsub.s32 %v889, %v891
        %v893 = vrot.slane %v885, %v892
        %v895 = vunpack.c.l.s4 1983009808
        %v896 = vunpack.c.0.s8 %v895
        %v897 = vlaneseq
        %v898 = vshrl.u32 %v897, 7
        %v899 = vsub.s32 %v896, %v898
        %v900 = vrot.slane %v886, %v899
        %v901 = vcombine.low %v893, %v900
        %v902 = vcombine.low %v511, %v510
        %v903 = vcombine.low %v512, %v519
        %v905 = vunpack.c.l.s4 1983009808
        %v906 = vunpack.c.0.s8 %v905
        %v907 = vlaneseq
        %v908 = vshrl.u32 %v907, 7
        %v909 = vsub.s32 %v906, %v908
        %v910 = vrot.slane %v902, %v909
        %v912 = vunpack.c.l.s4 1983009808
        %v913 = vunpack.c.0.s8 %v912
        %v914 = vlaneseq
        %v915 = vshrl.u32 %v914, 7
        %v916 = vsub.s32 %v913, %v915
        %v917 = vrot.slane %v903, %v916
        %v918 = vcombine.low %v910, %v917
        %v919 = vcombine.low %v527, %v535
        %v920 = vcombine.low %v534, %v536
        %v922 = vunpack.c.l.s4 1983009808
        %v923 = vunpack.c.0.s8 %v922
        %v924 = vlaneseq
        %v925 = vshrl.u32 %v924, 7
        %v926 = vsub.s32 %v923, %v925
        %v927 = vrot.slane %v919, %v926
        %v929 = vunpack.c.l.s4 1983009808
        %v930 = vunpack.c.0.s8 %v929
        %v931 = vlaneseq
        %v932 = vshrl.u32 %v931, 7
        %v933 = vsub.s32 %v930, %v932
        %v934 = vrot.slane %v920, %v933
        %v935 = vcombine.low %v927, %v934
        %v936 = vcombine.low %v544, %v552
        %v937 = vcombine.low %v551, %v553
        %v939 = vunpack.c.l.s4 1983009808
        %v940 = vunpack.c.0.s8 %v939
        %v941 = vlaneseq
        %v942 = vshrl.u32 %v941, 7
        %v943 = vsub.s32 %v940, %v942
        %v944 = vrot.slane %v936, %v943
        %v946 = vunpack.c.l.s4 1983009808
        %v947 = vunpack.c.0.s8 %v946
        %v948 = vlaneseq
        %v949 = vshrl.u32 %v948, 7
        %v950 = vsub.s32 %v947, %v949
        %v951 = vrot.slane %v937, %v950
        %v952 = vcombine.low %v944, %v951
        %v953 = vcombine.low %v560, %v568
        %v954 = vcombine.low %v576, %v575
        %v956 = vunpack.c.l.s4 1983009808
        %v957 = vunpack.c.0.s8 %v956
        %v958 = vlaneseq
        %v959 = vshrl.u32 %v958, 7
        %v960 = vsub.s32 %v957, %v959
        %v961 = vrot.slane %v953, %v960
        %v963 = vunpack.c.l.s4 1983009808
        %v964 = vunpack.c.0.s8 %v963
        %v965 = vlaneseq
        %v966 = vshrl.u32 %v965, 7
        %v967 = vsub.s32 %v964, %v966
        %v968 = vrot.slane %v954, %v967
        %v969 = vcombine.low %v961, %v968
        %v970 = vcombine.low %v577, %v585
        %v971 = vcombine.low %v593, %v592
        %v973 = vunpack.c.l.s4 1983009808
        %v974 = vunpack.c.0.s8 %v973
        %v975 = vlaneseq
        %v976 = vshrl.u32 %v975, 7
        %v977 = vsub.s32 %v974, %v976
        %v978 = vrot.slane %v970, %v977
        %v980 = vunpack.c.l.s4 1983009808
        %v981 = vunpack.c.0.s8 %v980
        %v982 = vlaneseq
        %v983 = vshrl.u32 %v982, 7
        %v984 = vsub.s32 %v981, %v983
        %v985 = vrot.slane %v971, %v984
        %v986 = vcombine.low %v978, %v985
        %v987 = vcombine.low %v594, %v601
        %v988 = vcombine.low %v609, %v617
        %v990 = vunpack.c.l.s4 1983009808
        %v991 = vunpack.c.0.s8 %v990
        %v992 = vlaneseq
        %v993 = vshrl.u32 %v992, 7
        %v994 = vsub.s32 %v991, %v993
        %v995 = vrot.slane %v987, %v994
        %v997 = vunpack.c.l.s4 1983009808
        %v998 = vunpack.c.0.s8 %v997
        %v999 = vlaneseq
        %v1000 = vshrl.u32 %v999, 7
        %v1001 = vsub.s32 %v998, %v1000
        %v1002 = vrot.slane %v988, %v1001
        %v1003 = vcombine.low %v995, %v1002
        %v1004 = vcombine.low %v616, %v618
        %v1005 = vcombine.low %v626, %v634
        %v1007 = vunpack.c.l.s4 1983009808
        %v1008 = vunpack.c.0.s8 %v1007
        %v1009 = vlaneseq
        %v1010 = vshrl.u32 %v1009, 7
        %v1011 = vsub.s32 %v1008, %v1010
        %v1012 = vrot.slane %v1004, %v1011
        %v1014 = vunpack.c.l.s4 1983009808
        %v1015 = vunpack.c.0.s8 %v1014
        %v1016 = vlaneseq
        %v1017 = vshrl.u32 %v1016, 7
        %v1018 = vsub.s32 %v1015, %v1017
        %v1019 = vrot.slane %v1005, %v1018
        %v1020 = vcombine.low %v1012, %v1019
        %v1021 = vcombine.low %v633, %v635
        %v1022 = vcombine.low %v642, %v650
        %v1024 = vunpack.c.l.s4 1983009808
        %v1025 = vunpack.c.0.s8 %v1024
        %v1026 = vlaneseq
        %v1027 = vshrl.u32 %v1026, 7
        %v1028 = vsub.s32 %v1025, %v1027
        %v1029 = vrot.slane %v1021, %v1028
        %v1031 = vunpack.c.l.s4 1983009808
        %v1032 = vunpack.c.0.s8 %v1031
        %v1033 = vlaneseq
        %v1034 = vshrl.u32 %v1033, 7
        %v1035 = vsub.s32 %v1032, %v1034
        %v1036 = vrot.slane %v1022, %v1035
        %v1037 = vcombine.low %v1029, %v1036
        %v1038 = vcombine.low %v658, %v657
        %v1039 = vcombine.low %v659, %v667
        %v1041 = vunpack.c.l.s4 1983009808
        %v1042 = vunpack.c.0.s8 %v1041
        %v1043 = vlaneseq
        %v1044 = vshrl.u32 %v1043, 7
        %v1045 = vsub.s32 %v1042, %v1044
        %v1046 = vrot.slane %v1038, %v1045
        %v1048 = vunpack.c.l.s4 1983009808
        %v1049 = vunpack.c.0.s8 %v1048
        %v1050 = vlaneseq
        %v1051 = vshrl.u32 %v1050, 7
        %v1052 = vsub.s32 %v1049, %v1051
        %v1053 = vrot.slane %v1039, %v1052
        %v1054 = vcombine.low %v1046, %v1053
        %v1055 = vcombine.low %v675, %v674
        %v1056 = vcombine.low %v676, %v683
        %v1058 = vunpack.c.l.s4 1983009808
        %v1059 = vunpack.c.0.s8 %v1058
        %v1060 = vlaneseq
        %v1061 = vshrl.u32 %v1060, 7
        %v1062 = vsub.s32 %v1059, %v1061
        %v1063 = vrot.slane %v1055, %v1062
        %v1065 = vunpack.c.l.s4 1983009808
        %v1066 = vunpack.c.0.s8 %v1065
        %v1067 = vlaneseq
        %v1068 = vshrl.u32 %v1067, 7
        %v1069 = vsub.s32 %v1066, %v1068
        %v1070 = vrot.slane %v1056, %v1069
        %v1071 = vcombine.low %v1063, %v1070
        %v1072 = vcombine.low %v691, %v699
        %v1073 = vcombine.low %v698, %v700
        %v1075 = vunpack.c.l.s4 1983009808
        %v1076 = vunpack.c.0.s8 %v1075
        %v1077 = vlaneseq
        %v1078 = vshrl.u32 %v1077, 7
        %v1079 = vsub.s32 %v1076, %v1078
        %v1080 = vrot.slane %v1072, %v1079
        %v1082 = vunpack.c.l.s4 1983009808
        %v1083 = vunpack.c.0.s8 %v1082
        %v1084 = vlaneseq
        %v1085 = vshrl.u32 %v1084, 7
        %v1086 = vsub.s32 %v1083, %v1085
        %v1087 = vrot.slane %v1073, %v1086
        %v1088 = vcombine.low %v1080, %v1087
        %v1089 = vcombine.low %v708, %v716
        %v1090 = vcombine.low %v715, %v717
        %v1092 = vunpack.c.l.s4 1983009808
        %v1093 = vunpack.c.0.s8 %v1092
        %v1094 = vlaneseq
        %v1095 = vshrl.u32 %v1094, 7
        %v1096 = vsub.s32 %v1093, %v1095
        %v1097 = vrot.slane %v1089, %v1096
        %v1099 = vunpack.c.l.s4 1983009808
        %v1100 = vunpack.c.0.s8 %v1099
        %v1101 = vlaneseq
        %v1102 = vshrl.u32 %v1101, 7
        %v1103 = vsub.s32 %v1100, %v1102
        %v1104 = vrot.slane %v1090, %v1103
        %v1105 = vcombine.low %v1097, %v1104
        %v1106 = vcombine.low %v724, %v732
        %v1107 = vcombine.low %v740, %v739
        %v1109 = vunpack.c.l.s4 1983009808
        %v1110 = vunpack.c.0.s8 %v1109
        %v1111 = vlaneseq
        %v1112 = vshrl.u32 %v1111, 7
        %v1113 = vsub.s32 %v1110, %v1112
        %v1114 = vrot.slane %v1106, %v1113
        %v1116 = vunpack.c.l.s4 1983009808
        %v1117 = vunpack.c.0.s8 %v1116
        %v1118 = vlaneseq
        %v1119 = vshrl.u32 %v1118, 7
        %v1120 = vsub.s32 %v1117, %v1119
        %v1121 = vrot.slane %v1107, %v1120
        %v1122 = vcombine.low %v1114, %v1121
        %v1123 = vcombine.low %v741, %v749
        %v1124 = vcombine.low %v757, %v756
        %v1126 = vunpack.c.l.s4 1983009808
        %v1127 = vunpack.c.0.s8 %v1126
        %v1128 = vlaneseq
        %v1129 = vshrl.u32 %v1128, 7
        %v1130 = vsub.s32 %v1127, %v1129
        %v1131 = vrot.slane %v1123, %v1130
        %v1133 = vunpack.c.l.s4 1983009808
        %v1134 = vunpack.c.0.s8 %v1133
        %v1135 = vlaneseq
        %v1136 = vshrl.u32 %v1135, 7
        %v1137 = vsub.s32 %v1134, %v1136
        %v1138 = vrot.slane %v1124, %v1137
        %v1139 = vcombine.low %v1131, %v1138
        %v1140 = vcombine.low %v758, %v765
        %v1142 = vunpack.c.l.s4 1983009808
        %v1143 = vunpack.c.0.s8 %v1142
        %v1144 = vlaneseq
        %v1145 = vshrl.u32 %v1144, 7
        %v1146 = vsub.s32 %v1143, %v1145
        %v1147 = vrot.slane %v1140, %v1146
        %v1171 = vpack.c.bf16 %v799, %v782
        %v1172 = vpack.c.bf16 %v833, %v816
        %v1173 = vpack.c.bf16 %v867, %v850
        %v1174 = vpack.c.bf16 %v901, %v884
        %v1175 = vpack.c.bf16 %v935, %v918
        %v1176 = vpack.c.bf16 %v969, %v952
        %v1177 = vpack.c.bf16 %v1003, %v986
        %v1178 = vpack.c.bf16 %v1037, %v1020
        %v1179 = vpack.c.bf16 %v1071, %v1054
        %v1180 = vpack.c.bf16 %v1105, %v1088
        %v1181 = vpack.c.bf16 %v1139, %v1122
        %v1182 = vpack.c.bf16 %v1147, %v1147
        %v1183 = vld [vmem:[%s1] sm:$0xf]
        %v1184 = vld [vmem:[%s1 + $0x4] sm:$0xf]
        %v1185 = vld [vmem:[%s1 + $0x8] sm:$0xf]
        %v1186 = vld [vmem:[%s1 + $0xc] sm:$0xf]
        %v1187 = vld [vmem:[%s1 + $0x10] sm:$0xf]
        %v1188 = vld [vmem:[%s1 + $0x14] sm:$0xf]
        %v1189 = vld [vmem:[%s1 + $0x18] sm:$0xf]
        %v1190 = vld [vmem:[%s1 + $0x1c] sm:$0xf]
        %v1191 = vld [vmem:[%s1 + $0x20] sm:$0xf]
        %v1192 = vld [vmem:[%s1 + $0x24] sm:$0xf]
        %v1193 = vld [vmem:[%s1 + $0x28] sm:$0xf]
        %v1194 = vld [vmem:[%s1 + $0x2c] sm:$0xf]
        %v1195 = vld [vmem:[%s1 + $0x30] sm:$0xf]
        %v1196 = vld [vmem:[%s1 + $0x34] sm:$0xf]
        %v1197 = vld [vmem:[%s1 + $0x38] sm:$0xf]
        %v1198 = vld [vmem:[%s1 + $0x3c] sm:$0xf]
        %v1199 = vld [vmem:[%s2] sm:$0x1]
        %v1201 = vlaneseq
        %v1202 = vshrl.u32 %v1201, 7
        %v1203 = vsub.s32 0, %v1202
        %v1204 = vrot.slane %v1199, %v1203
        %v1222 = vunpack.c.l.b16 %v1183
        %v1223 = vunpack.c.l.b16 %v1184
        %v1224 = vunpack.c.l.b16 %v1185
        %v1225 = vunpack.c.l.b16 %v1186
        %v1226 = vunpack.c.l.b16 %v1187
        %v1227 = vunpack.c.l.b16 %v1188
        %v1228 = vunpack.c.l.b16 %v1189
        %v1229 = vunpack.c.l.b16 %v1190
        %v1230 = vunpack.c.l.b16 %v1191
        %v1231 = vunpack.c.l.b16 %v1192
        %v1232 = vunpack.c.l.b16 %v1193
        %v1233 = vunpack.c.l.b16 %v1194
        %v1234 = vunpack.c.l.b16 %v1195
        %v1235 = vunpack.c.l.b16 %v1196
        %v1236 = vunpack.c.l.b16 %v1197
        %v1237 = vunpack.c.l.b16 %v1198
        %v1238 = vpack.c.b16 %v1223, %v1222
        %v1239 = vpack.c.b16 %v1225, %v1224
        %v1240 = vpack.c.b16 %v1227, %v1226
        %v1241 = vpack.c.b16 %v1229, %v1228
        %v1242 = vpack.c.b16 %v1231, %v1230
        %v1243 = vpack.c.b16 %v1233, %v1232
        %v1244 = vpack.c.b16 %v1235, %v1234
        %v1245 = vpack.c.b16 %v1237, %v1236
        %1254 = vmatprep.subr.bf16.mxu0 0
        %1255 = vmatpush1.bf16.msra.mxu0 %v1238
        %1256 = vmatprep.subr.bf16.mxu0 0
        %1257 = vmatpush1.bf16.msra.mxu0 %v1239
        %1258 = vmatprep.subr.bf16.mxu0 0
        %1259 = vmatpush1.bf16.msra.mxu0 %v1240
        %1260 = vmatprep.subr.bf16.mxu0 0
        %1261 = vmatpush1.bf16.msra.mxu0 %v1241
        %1262 = vmatprep.subr.bf16.mxu0 0
        %1263 = vmatpush1.bf16.msra.mxu0 %v1242
        %1264 = vmatprep.subr.bf16.mxu0 0
        %1265 = vmatpush1.bf16.msra.mxu0 %v1243
        %1266 = vmatprep.subr.bf16.mxu0 0
        %1267 = vmatpush1.bf16.msra.mxu0 %v1244
        %1268 = vmatprep.subr.bf16.mxu0 0
        %1269 = vmatpush1.bf16.msra.mxu0 %v1245
        %1270 = vmatprep.subr.bf16.mxu0 0
        %1271 = vmatpush1.bf16.msra.mxu0 0
        %1272 = vmatprep.subr.bf16.mxu0 0
        %1273 = vmatpush1.bf16.msra.mxu0 0
        %1274 = vmatprep.subr.bf16.mxu0 0
        %1275 = vmatpush1.bf16.msra.mxu0 0
        %1276 = vmatprep.subr.bf16.mxu0 0
        %1277 = vmatpush1.bf16.msra.mxu0 0
        %1278 = vmatprep.subr.bf16.mxu0 0
        %1279 = vmatpush1.bf16.msra.mxu0 0
        %1280 = vmatprep.subr.bf16.mxu0 0
        %1281 = vmatpush1.bf16.msra.mxu0 0
        %1282 = vmatprep.subr.bf16.mxu0 0
        %1283 = vmatpush1.bf16.msra.mxu0 0
        %1284 = vmatprep.subr.bf16.mxu0 0
        %1285 = vmatpush1.bf16.msra.mxu0 0
        %1286 = vmatprep.mubr.bf16.mxu0 0
        %1287 = vmatmul.mubr.bf16.gmra.mrb[0].mxu0 %v1171
        %v1288 = vpop.f32.mrb[0].mxu0
        %v1289 = vadd.f32 %v1204, %v1288
        %v1290 = vpop.f32.mrb[0].mxu0
        %v1291 = vpop.f32.mrb[0].mxu0
        %v1292 = vadd.f32 %v1204, %v1291
        %v1293 = vpop.f32.mrb[0].mxu0
        %1294 = vmatprep.mubr.bf16.mxu0 0
        %1295 = vmatmul.mubr.bf16.gmra.mrb[0].mxu0 %v1172
        %v1296 = vpop.f32.mrb[0].mxu0
        %v1297 = vadd.f32 %v1204, %v1296
        %v1298 = vpop.f32.mrb[0].mxu0
        %v1299 = vpop.f32.mrb[0].mxu0
        %v1300 = vadd.f32 %v1204, %v1299
        %v1301 = vpop.f32.mrb[0].mxu0
        %1302 = vmatprep.mubr.bf16.mxu0 0
        %1303 = vmatmul.mubr.bf16.gmra.mrb[0].mxu0 %v1173
        %v1304 = vpop.f32.mrb[0].mxu0
        %v1305 = vadd.f32 %v1204, %v1304
        %v1306 = vpop.f32.mrb[0].mxu0
        %v1307 = vpop.f32.mrb[0].mxu0
        %v1308 = vadd.f32 %v1204, %v1307
        %v1309 = vpop.f32.mrb[0].mxu0
        %1310 = vmatprep.mubr.bf16.mxu0 0
        %1311 = vmatmul.mubr.bf16.gmra.mrb[0].mxu0 %v1174
        %v1312 = vpop.f32.mrb[0].mxu0
        %v1313 = vadd.f32 %v1204, %v1312
        %v1314 = vpop.f32.mrb[0].mxu0
        %v1315 = vpop.f32.mrb[0].mxu0
        %v1316 = vadd.f32 %v1204, %v1315
        %v1317 = vpop.f32.mrb[0].mxu0
        %1318 = vmatprep.mubr.bf16.mxu0 0
        %1319 = vmatmul.mubr.bf16.gmra.mrb[0].mxu0 %v1175
        %v1320 = vpop.f32.mrb[0].mxu0
        %v1321 = vadd.f32 %v1204, %v1320
        %v1322 = vpop.f32.mrb[0].mxu0
        %v1323 = vpop.f32.mrb[0].mxu0
        %v1324 = vadd.f32 %v1204, %v1323
        %v1325 = vpop.f32.mrb[0].mxu0
        %1326 = vmatprep.mubr.bf16.mxu0 0
        %1327 = vmatmul.mubr.bf16.gmra.mrb[0].mxu0 %v1176
        %v1328 = vpop.f32.mrb[0].mxu0
        %v1329 = vadd.f32 %v1204, %v1328
        %v1330 = vpop.f32.mrb[0].mxu0
        %v1331 = vpop.f32.mrb[0].mxu0
        %v1332 = vadd.f32 %v1204, %v1331
        %v1333 = vpop.f32.mrb[0].mxu0
        %1334 = vmatprep.mubr.bf16.mxu0 0
        %1335 = vmatmul.mubr.bf16.gmra.mrb[0].mxu0 %v1177
        %v1336 = vpop.f32.mrb[0].mxu0
        %v1337 = vadd.f32 %v1204, %v1336
        %v1338 = vpop.f32.mrb[0].mxu0
        %v1339 = vpop.f32.mrb[0].mxu0
        %v1340 = vadd.f32 %v1204, %v1339
        %v1341 = vpop.f32.mrb[0].mxu0
        %1342 = vmatprep.mubr.bf16.mxu0 0
        %1343 = vmatmul.mubr.bf16.gmra.mrb[0].mxu0 %v1178
        %v1344 = vpop.f32.mrb[0].mxu0
        %v1345 = vadd.f32 %v1204, %v1344
        %v1346 = vpop.f32.mrb[0].mxu0
        %v1347 = vpop.f32.mrb[0].mxu0
        %v1348 = vadd.f32 %v1204, %v1347
        %v1349 = vpop.f32.mrb[0].mxu0
        %1350 = vmatprep.mubr.bf16.mxu0 0
        %1351 = vmatmul.mubr.bf16.gmra.mrb[0].mxu0 %v1179
        %v1352 = vpop.f32.mrb[0].mxu0
        %v1353 = vadd.f32 %v1204, %v1352
        %v1354 = vpop.f32.mrb[0].mxu0
        %v1355 = vpop.f32.mrb[0].mxu0
        %v1356 = vadd.f32 %v1204, %v1355
        %v1357 = vpop.f32.mrb[0].mxu0
        %1358 = vmatprep.mubr.bf16.mxu0 0
        %1359 = vmatmul.mubr.bf16.gmra.mrb[0].mxu0 %v1180
        %v1360 = vpop.f32.mrb[0].mxu0
        %v1361 = vadd.f32 %v1204, %v1360
        %v1362 = vpop.f32.mrb[0].mxu0
        %v1363 = vpop.f32.mrb[0].mxu0
        %v1364 = vadd.f32 %v1204, %v1363
        %v1365 = vpop.f32.mrb[0].mxu0
        %1366 = vmatprep.mubr.bf16.mxu0 0
        %1367 = vmatmul.mubr.bf16.gmra.mrb[0].mxu0 %v1181
        %v1368 = vpop.f32.mrb[0].mxu0
        %v1369 = vadd.f32 %v1204, %v1368
        %v1370 = vpop.f32.mrb[0].mxu0
        %v1371 = vpop.f32.mrb[0].mxu0
        %v1372 = vadd.f32 %v1204, %v1371
        %v1373 = vpop.f32.mrb[0].mxu0
        %1374 = vmatprep.mubr.bf16.mxu0 0
        %1375 = vmatmul.mubr.bf16.gmra.mrb[0].mxu0 %v1182
        %v1376 = vpop.f32.mrb[0].mxu0
        %v1377 = vadd.f32 %v1204, %v1376
        %v1378 = vpop.f32.mrb[0].mxu0
        %v1379 = vpop.f32.mrb[0].mxu0
        %v1380 = vpop.f32.mrb[0].mxu0
        %1381 = vdwg.mxu0
        %v1382 = vmax.f32 %v1289, 0.0
        %v1383 = vmax.f32 %v1292, 0.0
        %v1384 = vmax.f32 %v1297, 0.0
        %v1385 = vmax.f32 %v1300, 0.0
        %v1386 = vmax.f32 %v1305, 0.0
        %v1387 = vmax.f32 %v1308, 0.0
        %v1388 = vmax.f32 %v1313, 0.0
        %v1389 = vmax.f32 %v1316, 0.0
        %v1390 = vmax.f32 %v1321, 0.0
        %v1391 = vmax.f32 %v1324, 0.0
        %v1392 = vmax.f32 %v1329, 0.0
        %v1393 = vmax.f32 %v1332, 0.0
        %v1394 = vmax.f32 %v1337, 0.0
        %v1395 = vmax.f32 %v1340, 0.0
        %v1396 = vmax.f32 %v1345, 0.0
        %v1397 = vmax.f32 %v1348, 0.0
        %v1398 = vmax.f32 %v1353, 0.0
        %v1399 = vmax.f32 %v1356, 0.0
        %v1400 = vmax.f32 %v1361, 0.0
        %v1401 = vmax.f32 %v1364, 0.0
        %v1402 = vmax.f32 %v1369, 0.0
        %v1403 = vmax.f32 %v1372, 0.0
        %v1404 = vmax.f32 %v1377, 0.0
        %v1428 = vcombine.high %v1382, %v1382
        %v1430 = vunpack.c.l.s4 1983009808
        %v1431 = vunpack.c.0.s8 %v1430
        %v1432 = vlaneseq
        %v1433 = vshrl.u32 %v1432, 7
        %v1434 = vsub.s32 %v1431, %v1433
        %v1435 = vrot.slane %v1382, %v1434
        %v1437 = vunpack.c.l.s4 1983009808
        %v1438 = vunpack.c.0.s8 %v1437
        %v1439 = vlaneseq
        %v1440 = vshrl.u32 %v1439, 7
        %v1441 = vsub.s32 %v1438, %v1440
        %v1442 = vrot.slane %v1428, %v1441
        %v1443 = vcombine.high %v1435, %v1435
        %v1444 = vcombine.high %v1442, %v1442
        %v1445 = vcombine.high %v1383, %v1383
        %v1447 = vunpack.c.l.s4 1983009808
        %v1448 = vunpack.c.0.s8 %v1447
        %v1449 = vlaneseq
        %v1450 = vshrl.u32 %v1449, 7
        %v1451 = vsub.s32 %v1448, %v1450
        %v1452 = vrot.slane %v1383, %v1451
        %v1454 = vunpack.c.l.s4 1983009808
        %v1455 = vunpack.c.0.s8 %v1454
        %v1456 = vlaneseq
        %v1457 = vshrl.u32 %v1456, 7
        %v1458 = vsub.s32 %v1455, %v1457
        %v1459 = vrot.slane %v1445, %v1458
        %v1460 = vcombine.high %v1452, %v1452
        %v1461 = vcombine.high %v1459, %v1459
        %v1462 = vcombine.high %v1384, %v1384
        %v1464 = vunpack.c.l.s4 1983009808
        %v1465 = vunpack.c.0.s8 %v1464
        %v1466 = vlaneseq
        %v1467 = vshrl.u32 %v1466, 7
        %v1468 = vsub.s32 %v1465, %v1467
        %v1469 = vrot.slane %v1384, %v1468
        %v1471 = vunpack.c.l.s4 1983009808
        %v1472 = vunpack.c.0.s8 %v1471
        %v1473 = vlaneseq
        %v1474 = vshrl.u32 %v1473, 7
        %v1475 = vsub.s32 %v1472, %v1474
        %v1476 = vrot.slane %v1462, %v1475
        %v1477 = vcombine.high %v1469, %v1469
        %v1478 = vcombine.high %v1476, %v1476
        %v1479 = vcombine.high %v1385, %v1385
        %v1481 = vunpack.c.l.s4 1983009808
        %v1482 = vunpack.c.0.s8 %v1481
        %v1483 = vlaneseq
        %v1484 = vshrl.u32 %v1483, 7
        %v1485 = vsub.s32 %v1482, %v1484
        %v1486 = vrot.slane %v1385, %v1485
        %v1488 = vunpack.c.l.s4 1983009808
        %v1489 = vunpack.c.0.s8 %v1488
        %v1490 = vlaneseq
        %v1491 = vshrl.u32 %v1490, 7
        %v1492 = vsub.s32 %v1489, %v1491
        %v1493 = vrot.slane %v1479, %v1492
        %v1494 = vcombine.high %v1486, %v1486
        %v1495 = vcombine.high %v1493, %v1493
        %v1496 = vcombine.high %v1386, %v1386
        %v1498 = vunpack.c.l.s4 1983009808
        %v1499 = vunpack.c.0.s8 %v1498
        %v1500 = vlaneseq
        %v1501 = vshrl.u32 %v1500, 7
        %v1502 = vsub.s32 %v1499, %v1501
        %v1503 = vrot.slane %v1386, %v1502
        %v1505 = vunpack.c.l.s4 1983009808
        %v1506 = vunpack.c.0.s8 %v1505
        %v1507 = vlaneseq
        %v1508 = vshrl.u32 %v1507, 7
        %v1509 = vsub.s32 %v1506, %v1508
        %v1510 = vrot.slane %v1496, %v1509
        %v1511 = vcombine.high %v1503, %v1503
        %v1512 = vcombine.high %v1510, %v1510
        %v1513 = vcombine.high %v1387, %v1387
        %v1515 = vunpack.c.l.s4 1983009808
        %v1516 = vunpack.c.0.s8 %v1515
        %v1517 = vlaneseq
        %v1518 = vshrl.u32 %v1517, 7
        %v1519 = vsub.s32 %v1516, %v1518
        %v1520 = vrot.slane %v1387, %v1519
        %v1522 = vunpack.c.l.s4 1983009808
        %v1523 = vunpack.c.0.s8 %v1522
        %v1524 = vlaneseq
        %v1525 = vshrl.u32 %v1524, 7
        %v1526 = vsub.s32 %v1523, %v1525
        %v1527 = vrot.slane %v1513, %v1526
        %v1528 = vcombine.high %v1520, %v1520
        %v1529 = vcombine.high %v1527, %v1527
        %v1530 = vcombine.high %v1388, %v1388
        %v1532 = vunpack.c.l.s4 1983009808
        %v1533 = vunpack.c.0.s8 %v1532
        %v1534 = vlaneseq
        %v1535 = vshrl.u32 %v1534, 7
        %v1536 = vsub.s32 %v1533, %v1535
        %v1537 = vrot.slane %v1388, %v1536
        %v1539 = vunpack.c.l.s4 1983009808
        %v1540 = vunpack.c.0.s8 %v1539
        %v1541 = vlaneseq
        %v1542 = vshrl.u32 %v1541, 7
        %v1543 = vsub.s32 %v1540, %v1542
        %v1544 = vrot.slane %v1530, %v1543
        %v1545 = vcombine.high %v1537, %v1537
        %v1546 = vcombine.high %v1544, %v1544
        %v1547 = vcombine.high %v1389, %v1389
        %v1549 = vunpack.c.l.s4 1983009808
        %v1550 = vunpack.c.0.s8 %v1549
        %v1551 = vlaneseq
        %v1552 = vshrl.u32 %v1551, 7
        %v1553 = vsub.s32 %v1550, %v1552
        %v1554 = vrot.slane %v1389, %v1553
        %v1556 = vunpack.c.l.s4 1983009808
        %v1557 = vunpack.c.0.s8 %v1556
        %v1558 = vlaneseq
        %v1559 = vshrl.u32 %v1558, 7
        %v1560 = vsub.s32 %v1557, %v1559
        %v1561 = vrot.slane %v1547, %v1560
        %v1562 = vcombine.high %v1554, %v1554
        %v1563 = vcombine.high %v1561, %v1561
        %v1564 = vcombine.high %v1390, %v1390
        %v1566 = vunpack.c.l.s4 1983009808
        %v1567 = vunpack.c.0.s8 %v1566
        %v1568 = vlaneseq
        %v1569 = vshrl.u32 %v1568, 7
        %v1570 = vsub.s32 %v1567, %v1569
        %v1571 = vrot.slane %v1390, %v1570
        %v1573 = vunpack.c.l.s4 1983009808
        %v1574 = vunpack.c.0.s8 %v1573
        %v1575 = vlaneseq
        %v1576 = vshrl.u32 %v1575, 7
        %v1577 = vsub.s32 %v1574, %v1576
        %v1578 = vrot.slane %v1564, %v1577
        %v1579 = vcombine.high %v1571, %v1571
        %v1580 = vcombine.high %v1578, %v1578
        %v1581 = vcombine.high %v1391, %v1391
        %v1583 = vunpack.c.l.s4 1983009808
        %v1584 = vunpack.c.0.s8 %v1583
        %v1585 = vlaneseq
        %v1586 = vshrl.u32 %v1585, 7
        %v1587 = vsub.s32 %v1584, %v1586
        %v1588 = vrot.slane %v1391, %v1587
        %v1590 = vunpack.c.l.s4 1983009808
        %v1591 = vunpack.c.0.s8 %v1590
        %v1592 = vlaneseq
        %v1593 = vshrl.u32 %v1592, 7
        %v1594 = vsub.s32 %v1591, %v1593
        %v1595 = vrot.slane %v1581, %v1594
        %v1596 = vcombine.high %v1588, %v1588
        %v1597 = vcombine.high %v1595, %v1595
        %v1598 = vcombine.high %v1392, %v1392
        %v1600 = vunpack.c.l.s4 1983009808
        %v1601 = vunpack.c.0.s8 %v1600
        %v1602 = vlaneseq
        %v1603 = vshrl.u32 %v1602, 7
        %v1604 = vsub.s32 %v1601, %v1603
        %v1605 = vrot.slane %v1392, %v1604
        %v1607 = vunpack.c.l.s4 1983009808
        %v1608 = vunpack.c.0.s8 %v1607
        %v1609 = vlaneseq
        %v1610 = vshrl.u32 %v1609, 7
        %v1611 = vsub.s32 %v1608, %v1610
        %v1612 = vrot.slane %v1598, %v1611
        %v1613 = vcombine.high %v1605, %v1605
        %v1614 = vcombine.high %v1612, %v1612
        %v1615 = vcombine.high %v1393, %v1393
        %v1617 = vunpack.c.l.s4 1983009808
        %v1618 = vunpack.c.0.s8 %v1617
        %v1619 = vlaneseq
        %v1620 = vshrl.u32 %v1619, 7
        %v1621 = vsub.s32 %v1618, %v1620
        %v1622 = vrot.slane %v1393, %v1621
        %v1624 = vunpack.c.l.s4 1983009808
        %v1625 = vunpack.c.0.s8 %v1624
        %v1626 = vlaneseq
        %v1627 = vshrl.u32 %v1626, 7
        %v1628 = vsub.s32 %v1625, %v1627
        %v1629 = vrot.slane %v1615, %v1628
        %v1630 = vcombine.high %v1622, %v1622
        %v1631 = vcombine.high %v1629, %v1629
        %v1632 = vcombine.high %v1394, %v1394
        %v1634 = vunpack.c.l.s4 1983009808
        %v1635 = vunpack.c.0.s8 %v1634
        %v1636 = vlaneseq
        %v1637 = vshrl.u32 %v1636, 7
        %v1638 = vsub.s32 %v1635, %v1637
        %v1639 = vrot.slane %v1394, %v1638
        %v1641 = vunpack.c.l.s4 1983009808
        %v1642 = vunpack.c.0.s8 %v1641
        %v1643 = vlaneseq
        %v1644 = vshrl.u32 %v1643, 7
        %v1645 = vsub.s32 %v1642, %v1644
        %v1646 = vrot.slane %v1632, %v1645
        %v1647 = vcombine.high %v1639, %v1639
        %v1648 = vcombine.high %v1646, %v1646
        %v1649 = vcombine.high %v1395, %v1395
        %v1651 = vunpack.c.l.s4 1983009808
        %v1652 = vunpack.c.0.s8 %v1651
        %v1653 = vlaneseq
        %v1654 = vshrl.u32 %v1653, 7
        %v1655 = vsub.s32 %v1652, %v1654
        %v1656 = vrot.slane %v1395, %v1655
        %v1658 = vunpack.c.l.s4 1983009808
        %v1659 = vunpack.c.0.s8 %v1658
        %v1660 = vlaneseq
        %v1661 = vshrl.u32 %v1660, 7
        %v1662 = vsub.s32 %v1659, %v1661
        %v1663 = vrot.slane %v1649, %v1662
        %v1664 = vcombine.high %v1656, %v1656
        %v1665 = vcombine.high %v1663, %v1663
        %v1666 = vcombine.high %v1396, %v1396
        %v1668 = vunpack.c.l.s4 1983009808
        %v1669 = vunpack.c.0.s8 %v1668
        %v1670 = vlaneseq
        %v1671 = vshrl.u32 %v1670, 7
        %v1672 = vsub.s32 %v1669, %v1671
        %v1673 = vrot.slane %v1396, %v1672
        %v1675 = vunpack.c.l.s4 1983009808
        %v1676 = vunpack.c.0.s8 %v1675
        %v1677 = vlaneseq
        %v1678 = vshrl.u32 %v1677, 7
        %v1679 = vsub.s32 %v1676, %v1678
        %v1680 = vrot.slane %v1666, %v1679
        %v1681 = vcombine.high %v1673, %v1673
        %v1682 = vcombine.high %v1680, %v1680
        %v1683 = vcombine.high %v1397, %v1397
        %v1685 = vunpack.c.l.s4 1983009808
        %v1686 = vunpack.c.0.s8 %v1685
        %v1687 = vlaneseq
        %v1688 = vshrl.u32 %v1687, 7
        %v1689 = vsub.s32 %v1686, %v1688
        %v1690 = vrot.slane %v1397, %v1689
        %v1692 = vunpack.c.l.s4 1983009808
        %v1693 = vunpack.c.0.s8 %v1692
        %v1694 = vlaneseq
        %v1695 = vshrl.u32 %v1694, 7
        %v1696 = vsub.s32 %v1693, %v1695
        %v1697 = vrot.slane %v1683, %v1696
        %v1698 = vcombine.high %v1690, %v1690
        %v1699 = vcombine.high %v1697, %v1697
        %v1700 = vcombine.high %v1398, %v1398
        %v1702 = vunpack.c.l.s4 1983009808
        %v1703 = vunpack.c.0.s8 %v1702
        %v1704 = vlaneseq
        %v1705 = vshrl.u32 %v1704, 7
        %v1706 = vsub.s32 %v1703, %v1705
        %v1707 = vrot.slane %v1398, %v1706
        %v1709 = vunpack.c.l.s4 1983009808
        %v1710 = vunpack.c.0.s8 %v1709
        %v1711 = vlaneseq
        %v1712 = vshrl.u32 %v1711, 7
        %v1713 = vsub.s32 %v1710, %v1712
        %v1714 = vrot.slane %v1700, %v1713
        %v1715 = vcombine.high %v1707, %v1707
        %v1716 = vcombine.high %v1714, %v1714
        %v1717 = vcombine.high %v1399, %v1399
        %v1719 = vunpack.c.l.s4 1983009808
        %v1720 = vunpack.c.0.s8 %v1719
        %v1721 = vlaneseq
        %v1722 = vshrl.u32 %v1721, 7
        %v1723 = vsub.s32 %v1720, %v1722
        %v1724 = vrot.slane %v1399, %v1723
        %v1726 = vunpack.c.l.s4 1983009808
        %v1727 = vunpack.c.0.s8 %v1726
        %v1728 = vlaneseq
        %v1729 = vshrl.u32 %v1728, 7
        %v1730 = vsub.s32 %v1727, %v1729
        %v1731 = vrot.slane %v1717, %v1730
        %v1732 = vcombine.high %v1724, %v1724
        %v1733 = vcombine.high %v1731, %v1731
        %v1734 = vcombine.high %v1400, %v1400
        %v1736 = vunpack.c.l.s4 1983009808
        %v1737 = vunpack.c.0.s8 %v1736
        %v1738 = vlaneseq
        %v1739 = vshrl.u32 %v1738, 7
        %v1740 = vsub.s32 %v1737, %v1739
        %v1741 = vrot.slane %v1400, %v1740
        %v1743 = vunpack.c.l.s4 1983009808
        %v1744 = vunpack.c.0.s8 %v1743
        %v1745 = vlaneseq
        %v1746 = vshrl.u32 %v1745, 7
        %v1747 = vsub.s32 %v1744, %v1746
        %v1748 = vrot.slane %v1734, %v1747
        %v1749 = vcombine.high %v1741, %v1741
        %v1750 = vcombine.high %v1748, %v1748
        %v1751 = vcombine.high %v1401, %v1401
        %v1753 = vunpack.c.l.s4 1983009808
        %v1754 = vunpack.c.0.s8 %v1753
        %v1755 = vlaneseq
        %v1756 = vshrl.u32 %v1755, 7
        %v1757 = vsub.s32 %v1754, %v1756
        %v1758 = vrot.slane %v1401, %v1757
        %v1760 = vunpack.c.l.s4 1983009808
        %v1761 = vunpack.c.0.s8 %v1760
        %v1762 = vlaneseq
        %v1763 = vshrl.u32 %v1762, 7
        %v1764 = vsub.s32 %v1761, %v1763
        %v1765 = vrot.slane %v1751, %v1764
        %v1766 = vcombine.high %v1758, %v1758
        %v1767 = vcombine.high %v1765, %v1765
        %v1768 = vcombine.high %v1402, %v1402
        %v1770 = vunpack.c.l.s4 1983009808
        %v1771 = vunpack.c.0.s8 %v1770
        %v1772 = vlaneseq
        %v1773 = vshrl.u32 %v1772, 7
        %v1774 = vsub.s32 %v1771, %v1773
        %v1775 = vrot.slane %v1402, %v1774
        %v1777 = vunpack.c.l.s4 1983009808
        %v1778 = vunpack.c.0.s8 %v1777
        %v1779 = vlaneseq
        %v1780 = vshrl.u32 %v1779, 7
        %v1781 = vsub.s32 %v1778, %v1780
        %v1782 = vrot.slane %v1768, %v1781
        %v1783 = vcombine.high %v1775, %v1775
        %v1784 = vcombine.high %v1782, %v1782
        %v1785 = vcombine.high %v1403, %v1403
        %v1787 = vunpack.c.l.s4 1983009808
        %v1788 = vunpack.c.0.s8 %v1787
        %v1789 = vlaneseq
        %v1790 = vshrl.u32 %v1789, 7
        %v1791 = vsub.s32 %v1788, %v1790
        %v1792 = vrot.slane %v1403, %v1791
        %v1794 = vunpack.c.l.s4 1983009808
        %v1795 = vunpack.c.0.s8 %v1794
        %v1796 = vlaneseq
        %v1797 = vshrl.u32 %v1796, 7
        %v1798 = vsub.s32 %v1795, %v1797
        %v1799 = vrot.slane %v1785, %v1798
        %v1800 = vcombine.high %v1792, %v1792
        %v1801 = vcombine.high %v1799, %v1799
        %v1803 = vunpack.c.l.s4 1983009808
        %v1804 = vunpack.c.0.s8 %v1803
        %v1805 = vlaneseq
        %v1806 = vshrl.u32 %v1805, 7
        %v1807 = vsub.s32 %v1804, %v1806
        %v1808 = vrot.slane %v1404, %v1807
        %v1809 = vcombine.high %v1808, %v1808
        %v1810 = vstv %s293
        %v1811 = vadd.s32 %v1810, 1
        %v1812 = vadd.s32 %v1810, 2
        %v1813 = vadd.s32 %v1810, 3
        %v1814 = vadd.s32 %v1810, 4
        %v1815 = vadd.s32 %v1810, 5
        %v1816 = vadd.s32 %v1810, 6
        %v1817 = vadd.s32 %v1810, 7
        %v1818 = vadd.s32 %v1810, 8
        %v1819 = vadd.s32 %v1810, 9
        %v1820 = vlaneseq
        %v1821 = vshrl.u32 %v1820, 7
        %v1822 = vadd.s32 %v1821, 8
        %v1823 = vadd.s32 %v1821, 16
        %vm1824 = vcmp.ge.s32.totalorder %v1810, 1
        %vm1825 = vcmp.ge.s32.totalorder %v1811, 1
        %vm1826 = vcmp.ge.s32.totalorder %v1812, 1
        %vm1827 = vcmp.ge.s32.totalorder %v1813, 1
        %vm1828 = vcmp.ge.s32.totalorder %v1814, 1
        %vm1829 = vcmp.ge.s32.totalorder %v1815, 1
        %vm1830 = vcmp.ge.s32.totalorder %v1816, 1
        %vm1831 = vcmp.ge.s32.totalorder %v1817, 1
        %vm1832 = vcmp.ge.s32.totalorder %v1818, 1
        %vm1833 = vcmp.ge.s32.totalorder %v1819, 1
        %vm1834 = vcmp.lt.s32.totalorder %v1810, 17
        %vm1835 = vcmp.lt.s32.totalorder %v1811, 17
        %vm1836 = vcmp.lt.s32.totalorder %v1812, 17
        %vm1837 = vcmp.lt.s32.totalorder %v1813, 17
        %vm1838 = vcmp.lt.s32.totalorder %v1814, 17
        %vm1839 = vcmp.lt.s32.totalorder %v1815, 17
        %vm1840 = vcmp.lt.s32.totalorder %v1816, 17
        %vm1841 = vcmp.lt.s32.totalorder %v1817, 17
        %vm1842 = vcmp.lt.s32.totalorder %v1818, 17
        %vm1843 = vcmp.lt.s32.totalorder %v1819, 17
        %vm1844 = vmand %vm1824, %vm1834
        %vm1845 = vmand %vm1825, %vm1835
        %vm1846 = vmand %vm1826, %vm1836
        %vm1847 = vmand %vm1827, %vm1837
        %vm1848 = vmand %vm1828, %vm1838
        %vm1849 = vmand %vm1829, %vm1839
        %vm1850 = vmand %vm1830, %vm1840
        %vm1851 = vmand %vm1831, %vm1841
        %vm1852 = vmand %vm1832, %vm1842
        %vm1853 = vmand %vm1833, %vm1843
        %vm1854 = vcmp.ge.s32.totalorder %v1821, 1
        %vm1855 = vcmp.ge.s32.totalorder %v1822, 1
        %vm1856 = vcmp.ge.s32.totalorder %v1823, 1
        %vm1857 = vmand %vm1844, %vm1854
        %vm1858 = vmand %vm1844, %vm1855
        %vm1859 = vmand %vm1844, %vm1856
        %vm1860 = vmand %vm1845, %vm1854
        %vm1861 = vmand %vm1845, %vm1855
        %vm1862 = vmand %vm1845, %vm1856
        %vm1863 = vmand %vm1846, %vm1854
        %vm1864 = vmand %vm1846, %vm1855
        %vm1865 = vmand %vm1846, %vm1856
        %vm1866 = vmand %vm1847, %vm1854
        %vm1867 = vmand %vm1847, %vm1855
        %vm1868 = vmand %vm1847, %vm1856
        %vm1869 = vmand %vm1848, %vm1854
        %vm1870 = vmand %vm1848, %vm1855
        %vm1871 = vmand %vm1848, %vm1856
        %vm1872 = vmand %vm1849, %vm1854
        %vm1873 = vmand %vm1849, %vm1855
        %vm1874 = vmand %vm1849, %vm1856
        %vm1875 = vmand %vm1850, %vm1854
        %vm1876 = vmand %vm1850, %vm1855
        %vm1877 = vmand %vm1850, %vm1856
        %vm1878 = vmand %vm1851, %vm1854
        %vm1879 = vmand %vm1851, %vm1855
        %vm1880 = vmand %vm1851, %vm1856
        %vm1881 = vmand %vm1852, %vm1854
        %vm1882 = vmand %vm1852, %vm1855
        %vm1883 = vmand %vm1852, %vm1856
        %vm1884 = vmand %vm1853, %vm1854
        %vm1885 = vmand %vm1853, %vm1855
        %vm1886 = vmand %vm1853, %vm1856
        %vm1887 = vcmp.lt.s32.totalorder %v1821, 17
        %vm1888 = vcmp.lt.s32.totalorder %v1822, 17
        %vm1889 = vcmp.lt.s32.totalorder %v1823, 17
        %vm1890 = vmand %vm1857, %vm1887
        %vm1891 = vmand %vm1858, %vm1888
        %vm1892 = vmand %vm1859, %vm1889
        %vm1893 = vmand %vm1860, %vm1887
        %vm1894 = vmand %vm1861, %vm1888
        %vm1895 = vmand %vm1862, %vm1889
        %vm1896 = vmand %vm1863, %vm1887
        %vm1897 = vmand %vm1864, %vm1888
        %vm1898 = vmand %vm1865, %vm1889
        %vm1899 = vmand %vm1866, %vm1887
        %vm1900 = vmand %vm1867, %vm1888
        %vm1901 = vmand %vm1868, %vm1889
        %vm1902 = vmand %vm1869, %vm1887
        %vm1903 = vmand %vm1870, %vm1888
        %vm1904 = vmand %vm1871, %vm1889
        %vm1905 = vmand %vm1872, %vm1887
        %vm1906 = vmand %vm1873, %vm1888
        %vm1907 = vmand %vm1874, %vm1889
        %vm1908 = vmand %vm1875, %vm1887
        %vm1909 = vmand %vm1876, %vm1888
        %vm1910 = vmand %vm1877, %vm1889
        %vm1911 = vmand %vm1878, %vm1887
        %vm1912 = vmand %vm1879, %vm1888
        %vm1913 = vmand %vm1880, %vm1889
        %vm1914 = vmand %vm1881, %vm1887
        %vm1915 = vmand %vm1882, %vm1888
        %vm1916 = vmand %vm1883, %vm1889
        %vm1917 = vmand %vm1884, %vm1887
        %vm1918 = vmand %vm1885, %vm1888
        %vm1919 = vmand %vm1886, %vm1889
        %v1920 = vcombine.low %v1435, %v1443
        %v1921 = vcombine.low %v1442, %v1444
        %v1923 = vunpack.c.l.s4 1983009808
        %v1924 = vunpack.c.0.s8 %v1923
        %v1925 = vlaneseq
        %v1926 = vshrl.u32 %v1925, 7
        %v1927 = vsub.s32 %v1924, %v1926
        %v1928 = vrot.slane %v1920, %v1927
        %v1930 = vunpack.c.l.s4 1983009808
        %v1931 = vunpack.c.0.s8 %v1930
        %v1932 = vlaneseq
        %v1933 = vshrl.u32 %v1932, 7
        %v1934 = vsub.s32 %v1931, %v1933
        %v1935 = vrot.slane %v1921, %v1934
        %v1936 = vcombine.low %v1928, %v1935
        %v1937 = vcombine.low %v1452, %v1460
        %v1938 = vcombine.low %v1459, %v1461
        %v1940 = vunpack.c.l.s4 1983009808
        %v1941 = vunpack.c.0.s8 %v1940
        %v1942 = vlaneseq
        %v1943 = vshrl.u32 %v1942, 7
        %v1944 = vsub.s32 %v1941, %v1943
        %v1945 = vrot.slane %v1937, %v1944
        %v1947 = vunpack.c.l.s4 1983009808
        %v1948 = vunpack.c.0.s8 %v1947
        %v1949 = vlaneseq
        %v1950 = vshrl.u32 %v1949, 7
        %v1951 = vsub.s32 %v1948, %v1950
        %v1952 = vrot.slane %v1938, %v1951
        %v1953 = vcombine.low %v1945, %v1952
        %v1955 = vunpack.c.l.s4 1983009808
        %v1956 = vunpack.c.0.s8 %v1955
        %v1957 = vlaneseq
        %v1958 = vshrl.u32 %v1957, 7
        %v1959 = vsub.s32 %v1956, %v1958
        %v1960 = vrot.slane %v1469, %v1959
        %v1961 = vcombine.low %v1477, %v1476
        %v1962 = vcombine.low %v1478, %v1486
        %v1964 = vunpack.c.l.s4 1983009808
        %v1965 = vunpack.c.0.s8 %v1964
        %v1966 = vlaneseq
        %v1967 = vshrl.u32 %v1966, 7
        %v1968 = vsub.s32 %v1965, %v1967
        %v1969 = vrot.slane %v1961, %v1968
        %v1971 = vunpack.c.l.s4 1983009808
        %v1972 = vunpack.c.0.s8 %v1971
        %v1973 = vlaneseq
        %v1974 = vshrl.u32 %v1973, 7
        %v1975 = vsub.s32 %v1972, %v1974
        %v1976 = vrot.slane %v1962, %v1975
        %v1977 = vcombine.low %v1969, %v1976
        %v1978 = vcombine.low %v1494, %v1493
        %v1979 = vcombine.low %v1495, %v1503
        %v1981 = vunpack.c.l.s4 1983009808
        %v1982 = vunpack.c.0.s8 %v1981
        %v1983 = vlaneseq
        %v1984 = vshrl.u32 %v1983, 7
        %v1985 = vsub.s32 %v1982, %v1984
        %v1986 = vrot.slane %v1978, %v1985
        %v1988 = vunpack.c.l.s4 1983009808
        %v1989 = vunpack.c.0.s8 %v1988
        %v1990 = vlaneseq
        %v1991 = vshrl.u32 %v1990, 7
        %v1992 = vsub.s32 %v1989, %v1991
        %v1993 = vrot.slane %v1979, %v1992
        %v1994 = vcombine.low %v1986, %v1993
        %v1996 = vunpack.c.l.s4 1983009808
        %v1997 = vunpack.c.0.s8 %v1996
        %v1998 = vlaneseq
        %v1999 = vshrl.u32 %v1998, 7
        %v2000 = vsub.s32 %v1997, %v1999
        %v2001 = vrot.slane %v1511, %v2000
        %v2002 = vcombine.low %v1510, %v1512
        %v2003 = vcombine.low %v1520, %v1528
        %v2005 = vunpack.c.l.s4 1983009808
        %v2006 = vunpack.c.0.s8 %v2005
        %v2007 = vlaneseq
        %v2008 = vshrl.u32 %v2007, 7
        %v2009 = vsub.s32 %v2006, %v2008
        %v2010 = vrot.slane %v2002, %v2009
        %v2012 = vunpack.c.l.s4 1983009808
        %v2013 = vunpack.c.0.s8 %v2012
        %v2014 = vlaneseq
        %v2015 = vshrl.u32 %v2014, 7
        %v2016 = vsub.s32 %v2013, %v2015
        %v2017 = vrot.slane %v2003, %v2016
        %v2018 = vcombine.low %v2010, %v2017
        %v2019 = vcombine.low %v1527, %v1529
        %v2020 = vcombine.low %v1537, %v1545
        %v2022 = vunpack.c.l.s4 1983009808
        %v2023 = vunpack.c.0.s8 %v2022
        %v2024 = vlaneseq
        %v2025 = vshrl.u32 %v2024, 7
        %v2026 = vsub.s32 %v2023, %v2025
        %v2027 = vrot.slane %v2019, %v2026
        %v2029 = vunpack.c.l.s4 1983009808
        %v2030 = vunpack.c.0.s8 %v2029
        %v2031 = vlaneseq
        %v2032 = vshrl.u32 %v2031, 7
        %v2033 = vsub.s32 %v2030, %v2032
        %v2034 = vrot.slane %v2020, %v2033
        %v2035 = vcombine.low %v2027, %v2034
        %v2037 = vunpack.c.l.s4 1983009808
        %v2038 = vunpack.c.0.s8 %v2037
        %v2039 = vlaneseq
        %v2040 = vshrl.u32 %v2039, 7
        %v2041 = vsub.s32 %v2038, %v2040
        %v2042 = vrot.slane %v1544, %v2041
        %v2043 = vcombine.low %v1546, %v1554
        %v2044 = vcombine.low %v1562, %v1561
        %v2046 = vunpack.c.l.s4 1983009808
        %v2047 = vunpack.c.0.s8 %v2046
        %v2048 = vlaneseq
        %v2049 = vshrl.u32 %v2048, 7
        %v2050 = vsub.s32 %v2047, %v2049
        %v2051 = vrot.slane %v2043, %v2050
        %v2053 = vunpack.c.l.s4 1983009808
        %v2054 = vunpack.c.0.s8 %v2053
        %v2055 = vlaneseq
        %v2056 = vshrl.u32 %v2055, 7
        %v2057 = vsub.s32 %v2054, %v2056
        %v2058 = vrot.slane %v2044, %v2057
        %v2059 = vcombine.low %v2051, %v2058
        %v2060 = vcombine.low %v1563, %v1571
        %v2061 = vcombine.low %v1579, %v1578
        %v2063 = vunpack.c.l.s4 1983009808
        %v2064 = vunpack.c.0.s8 %v2063
        %v2065 = vlaneseq
        %v2066 = vshrl.u32 %v2065, 7
        %v2067 = vsub.s32 %v2064, %v2066
        %v2068 = vrot.slane %v2060, %v2067
        %v2070 = vunpack.c.l.s4 1983009808
        %v2071 = vunpack.c.0.s8 %v2070
        %v2072 = vlaneseq
        %v2073 = vshrl.u32 %v2072, 7
        %v2074 = vsub.s32 %v2071, %v2073
        %v2075 = vrot.slane %v2061, %v2074
        %v2076 = vcombine.low %v2068, %v2075
        %v2078 = vunpack.c.l.s4 1983009808
        %v2079 = vunpack.c.0.s8 %v2078
        %v2080 = vlaneseq
        %v2081 = vshrl.u32 %v2080, 7
        %v2082 = vsub.s32 %v2079, %v2081
        %v2083 = vrot.slane %v1580, %v2082
        %v2084 = vcombine.low %v1588, %v1596
        %v2085 = vcombine.low %v1595, %v1597
        %v2087 = vunpack.c.l.s4 1983009808
        %v2088 = vunpack.c.0.s8 %v2087
        %v2089 = vlaneseq
        %v2090 = vshrl.u32 %v2089, 7
        %v2091 = vsub.s32 %v2088, %v2090
        %v2092 = vrot.slane %v2084, %v2091
        %v2094 = vunpack.c.l.s4 1983009808
        %v2095 = vunpack.c.0.s8 %v2094
        %v2096 = vlaneseq
        %v2097 = vshrl.u32 %v2096, 7
        %v2098 = vsub.s32 %v2095, %v2097
        %v2099 = vrot.slane %v2085, %v2098
        %v2100 = vcombine.low %v2092, %v2099
        %v2101 = vcombine.low %v1605, %v1613
        %v2102 = vcombine.low %v1612, %v1614
        %v2104 = vunpack.c.l.s4 1983009808
        %v2105 = vunpack.c.0.s8 %v2104
        %v2106 = vlaneseq
        %v2107 = vshrl.u32 %v2106, 7
        %v2108 = vsub.s32 %v2105, %v2107
        %v2109 = vrot.slane %v2101, %v2108
        %v2111 = vunpack.c.l.s4 1983009808
        %v2112 = vunpack.c.0.s8 %v2111
        %v2113 = vlaneseq
        %v2114 = vshrl.u32 %v2113, 7
        %v2115 = vsub.s32 %v2112, %v2114
        %v2116 = vrot.slane %v2102, %v2115
        %v2117 = vcombine.low %v2109, %v2116
        %v2119 = vunpack.c.l.s4 1983009808
        %v2120 = vunpack.c.0.s8 %v2119
        %v2121 = vlaneseq
        %v2122 = vshrl.u32 %v2121, 7
        %v2123 = vsub.s32 %v2120, %v2122
        %v2124 = vrot.slane %v1622, %v2123
        %v2125 = vcombine.low %v1630, %v1629
        %v2126 = vcombine.low %v1631, %v1639
        %v2128 = vunpack.c.l.s4 1983009808
        %v2129 = vunpack.c.0.s8 %v2128
        %v2130 = vlaneseq
        %v2131 = vshrl.u32 %v2130, 7
        %v2132 = vsub.s32 %v2129, %v2131
        %v2133 = vrot.slane %v2125, %v2132
        %v2135 = vunpack.c.l.s4 1983009808
        %v2136 = vunpack.c.0.s8 %v2135
        %v2137 = vlaneseq
        %v2138 = vshrl.u32 %v2137, 7
        %v2139 = vsub.s32 %v2136, %v2138
        %v2140 = vrot.slane %v2126, %v2139
        %v2141 = vcombine.low %v2133, %v2140
        %v2142 = vcombine.low %v1647, %v1646
        %v2143 = vcombine.low %v1648, %v1656
        %v2145 = vunpack.c.l.s4 1983009808
        %v2146 = vunpack.c.0.s8 %v2145
        %v2147 = vlaneseq
        %v2148 = vshrl.u32 %v2147, 7
        %v2149 = vsub.s32 %v2146, %v2148
        %v2150 = vrot.slane %v2142, %v2149
        %v2152 = vunpack.c.l.s4 1983009808
        %v2153 = vunpack.c.0.s8 %v2152
        %v2154 = vlaneseq
        %v2155 = vshrl.u32 %v2154, 7
        %v2156 = vsub.s32 %v2153, %v2155
        %v2157 = vrot.slane %v2143, %v2156
        %v2158 = vcombine.low %v2150, %v2157
        %v2160 = vunpack.c.l.s4 1983009808
        %v2161 = vunpack.c.0.s8 %v2160
        %v2162 = vlaneseq
        %v2163 = vshrl.u32 %v2162, 7
        %v2164 = vsub.s32 %v2161, %v2163
        %v2165 = vrot.slane %v1664, %v2164
        %v2166 = vcombine.low %v1663, %v1665
        %v2167 = vcombine.low %v1673, %v1681
        %v2169 = vunpack.c.l.s4 1983009808
        %v2170 = vunpack.c.0.s8 %v2169
        %v2171 = vlaneseq
        %v2172 = vshrl.u32 %v2171, 7
        %v2173 = vsub.s32 %v2170, %v2172
        %v2174 = vrot.slane %v2166, %v2173
        %v2176 = vunpack.c.l.s4 1983009808
        %v2177 = vunpack.c.0.s8 %v2176
        %v2178 = vlaneseq
        %v2179 = vshrl.u32 %v2178, 7
        %v2180 = vsub.s32 %v2177, %v2179
        %v2181 = vrot.slane %v2167, %v2180
        %v2182 = vcombine.low %v2174, %v2181
        %v2183 = vcombine.low %v1680, %v1682
        %v2184 = vcombine.low %v1690, %v1698
        %v2186 = vunpack.c.l.s4 1983009808
        %v2187 = vunpack.c.0.s8 %v2186
        %v2188 = vlaneseq
        %v2189 = vshrl.u32 %v2188, 7
        %v2190 = vsub.s32 %v2187, %v2189
        %v2191 = vrot.slane %v2183, %v2190
        %v2193 = vunpack.c.l.s4 1983009808
        %v2194 = vunpack.c.0.s8 %v2193
        %v2195 = vlaneseq
        %v2196 = vshrl.u32 %v2195, 7
        %v2197 = vsub.s32 %v2194, %v2196
        %v2198 = vrot.slane %v2184, %v2197
        %v2199 = vcombine.low %v2191, %v2198
        %v2201 = vunpack.c.l.s4 1983009808
        %v2202 = vunpack.c.0.s8 %v2201
        %v2203 = vlaneseq
        %v2204 = vshrl.u32 %v2203, 7
        %v2205 = vsub.s32 %v2202, %v2204
        %v2206 = vrot.slane %v1697, %v2205
        %v2207 = vcombine.low %v1699, %v1707
        %v2208 = vcombine.low %v1715, %v1714
        %v2210 = vunpack.c.l.s4 1983009808
        %v2211 = vunpack.c.0.s8 %v2210
        %v2212 = vlaneseq
        %v2213 = vshrl.u32 %v2212, 7
        %v2214 = vsub.s32 %v2211, %v2213
        %v2215 = vrot.slane %v2207, %v2214
        %v2217 = vunpack.c.l.s4 1983009808
        %v2218 = vunpack.c.0.s8 %v2217
        %v2219 = vlaneseq
        %v2220 = vshrl.u32 %v2219, 7
        %v2221 = vsub.s32 %v2218, %v2220
        %v2222 = vrot.slane %v2208, %v2221
        %v2223 = vcombine.low %v2215, %v2222
        %v2224 = vcombine.low %v1716, %v1724
        %v2225 = vcombine.low %v1732, %v1731
        %v2227 = vunpack.c.l.s4 1983009808
        %v2228 = vunpack.c.0.s8 %v2227
        %v2229 = vlaneseq
        %v2230 = vshrl.u32 %v2229, 7
        %v2231 = vsub.s32 %v2228, %v2230
        %v2232 = vrot.slane %v2224, %v2231
        %v2234 = vunpack.c.l.s4 1983009808
        %v2235 = vunpack.c.0.s8 %v2234
        %v2236 = vlaneseq
        %v2237 = vshrl.u32 %v2236, 7
        %v2238 = vsub.s32 %v2235, %v2237
        %v2239 = vrot.slane %v2225, %v2238
        %v2240 = vcombine.low %v2232, %v2239
        %v2242 = vunpack.c.l.s4 1983009808
        %v2243 = vunpack.c.0.s8 %v2242
        %v2244 = vlaneseq
        %v2245 = vshrl.u32 %v2244, 7
        %v2246 = vsub.s32 %v2243, %v2245
        %v2247 = vrot.slane %v1733, %v2246
        %v2248 = vcombine.low %v1741, %v1749
        %v2249 = vcombine.low %v1748, %v1750
        %v2251 = vunpack.c.l.s4 1983009808
        %v2252 = vunpack.c.0.s8 %v2251
        %v2253 = vlaneseq
        %v2254 = vshrl.u32 %v2253, 7
        %v2255 = vsub.s32 %v2252, %v2254
        %v2256 = vrot.slane %v2248, %v2255
        %v2258 = vunpack.c.l.s4 1983009808
        %v2259 = vunpack.c.0.s8 %v2258
        %v2260 = vlaneseq
        %v2261 = vshrl.u32 %v2260, 7
        %v2262 = vsub.s32 %v2259, %v2261
        %v2263 = vrot.slane %v2249, %v2262
        %v2264 = vcombine.low %v2256, %v2263
        %v2265 = vcombine.low %v1758, %v1766
        %v2266 = vcombine.low %v1765, %v1767
        %v2268 = vunpack.c.l.s4 1983009808
        %v2269 = vunpack.c.0.s8 %v2268
        %v2270 = vlaneseq
        %v2271 = vshrl.u32 %v2270, 7
        %v2272 = vsub.s32 %v2269, %v2271
        %v2273 = vrot.slane %v2265, %v2272
        %v2275 = vunpack.c.l.s4 1983009808
        %v2276 = vunpack.c.0.s8 %v2275
        %v2277 = vlaneseq
        %v2278 = vshrl.u32 %v2277, 7
        %v2279 = vsub.s32 %v2276, %v2278
        %v2280 = vrot.slane %v2266, %v2279
        %v2281 = vcombine.low %v2273, %v2280
        %v2283 = vunpack.c.l.s4 1983009808
        %v2284 = vunpack.c.0.s8 %v2283
        %v2285 = vlaneseq
        %v2286 = vshrl.u32 %v2285, 7
        %v2287 = vsub.s32 %v2284, %v2286
        %v2288 = vrot.slane %v1775, %v2287
        %v2289 = vcombine.low %v1783, %v1782
        %v2290 = vcombine.low %v1784, %v1792
        %v2292 = vunpack.c.l.s4 1983009808
        %v2293 = vunpack.c.0.s8 %v2292
        %v2294 = vlaneseq
        %v2295 = vshrl.u32 %v2294, 7
        %v2296 = vsub.s32 %v2293, %v2295
        %v2297 = vrot.slane %v2289, %v2296
        %v2299 = vunpack.c.l.s4 1983009808
        %v2300 = vunpack.c.0.s8 %v2299
        %v2301 = vlaneseq
        %v2302 = vshrl.u32 %v2301, 7
        %v2303 = vsub.s32 %v2300, %v2302
        %v2304 = vrot.slane %v2290, %v2303
        %v2305 = vcombine.low %v2297, %v2304
        %v2306 = vcombine.low %v1800, %v1799
        %v2307 = vcombine.low %v1801, %v1808
        %v2309 = vunpack.c.l.s4 1983009808
        %v2310 = vunpack.c.0.s8 %v2309
        %v2311 = vlaneseq
        %v2312 = vshrl.u32 %v2311, 7
        %v2313 = vsub.s32 %v2310, %v2312
        %v2314 = vrot.slane %v2306, %v2313
        %v2316 = vunpack.c.l.s4 1983009808
        %v2317 = vunpack.c.0.s8 %v2316
        %v2318 = vlaneseq
        %v2319 = vshrl.u32 %v2318, 7
        %v2320 = vsub.s32 %v2317, %v2319
        %v2321 = vrot.slane %v2307, %v2320
        %v2322 = vcombine.low %v2314, %v2321
        %v2324 = vunpack.c.l.s4 1983009808
        %v2325 = vunpack.c.0.s8 %v2324
        %v2326 = vlaneseq
        %v2327 = vshrl.u32 %v2326, 7
        %v2328 = vsub.s32 %v2325, %v2327
        %v2329 = vrot.slane %v1809, %v2328
        %v2360 = vsel %vm1890, %v1936, 0.0
        %v2361 = vsel %vm1891, %v1953, 0.0
        %v2362 = vsel %vm1892, %v1960, 0.0
        %v2363 = vsel %vm1893, %v1977, 0.0
        %v2364 = vsel %vm1894, %v1994, 0.0
        %v2365 = vsel %vm1895, %v2001, 0.0
        %v2366 = vsel %vm1896, %v2018, 0.0
        %v2367 = vsel %vm1897, %v2035, 0.0
        %v2368 = vsel %vm1898, %v2042, 0.0
        %v2369 = vsel %vm1899, %v2059, 0.0
        %v2370 = vsel %vm1900, %v2076, 0.0
        %v2371 = vsel %vm1901, %v2083, 0.0
        %v2372 = vsel %vm1902, %v2100, 0.0
        %v2373 = vsel %vm1903, %v2117, 0.0
        %v2374 = vsel %vm1904, %v2124, 0.0
        %v2375 = vsel %vm1905, %v2141, 0.0
        %v2376 = vsel %vm1906, %v2158, 0.0
        %v2377 = vsel %vm1907, %v2165, 0.0
        %v2378 = vsel %vm1908, %v2182, 0.0
        %v2379 = vsel %vm1909, %v2199, 0.0
        %v2380 = vsel %vm1910, %v2206, 0.0
        %v2381 = vsel %vm1911, %v2223, 0.0
        %v2382 = vsel %vm1912, %v2240, 0.0
        %v2383 = vsel %vm1913, %v2247, 0.0
        %v2384 = vsel %vm1914, %v2264, 0.0
        %v2385 = vsel %vm1915, %v2281, 0.0
        %v2386 = vsel %vm1916, %v2288, 0.0
        %v2387 = vsel %vm1917, %v2305, 0.0
        %v2388 = vsel %vm1918, %v2322, 0.0
        %v2389 = vsel %vm1919, %v2329, 0.0
        %2390 = vst [vmem:[#allocation2] sm:$0xff] %v2360
        %2391 = vst [vmem:[#allocation2 + $0x8] sm:$0xff] %v2361
        %2392 = vst [vmem:[#allocation2 + $0x10] sm:$0x3] %v2362
        %2393 = vst [vmem:[#allocation2 + $0x18] sm:$0xff] %v2363
        %2394 = vst [vmem:[#allocation2 + $0x20] sm:$0xff] %v2364
        %2395 = vst [vmem:[#allocation2 + $0x28] sm:$0x3] %v2365
        %2396 = vst [vmem:[#allocation2 + $0x30] sm:$0xff] %v2366
        %2397 = vst [vmem:[#allocation2 + $0x38] sm:$0xff] %v2367
        %2398 = vst [vmem:[#allocation2 + $0x40] sm:$0x3] %v2368
        %2399 = vst [vmem:[#allocation2 + $0x48] sm:$0xff] %v2369
        %2400 = vst [vmem:[#allocation2 + $0x50] sm:$0xff] %v2370
        %2401 = vst [vmem:[#allocation2 + $0x58] sm:$0x3] %v2371
        %2402 = vst [vmem:[#allocation2 + $0x60] sm:$0xff] %v2372
        %2403 = vst [vmem:[#allocation2 + $0x68] sm:$0xff] %v2373
        %2404 = vst [vmem:[#allocation2 + $0x70] sm:$0x3] %v2374
        %2405 = vst [vmem:[#allocation2 + $0x78] sm:$0xff] %v2375
        %2406 = vst [vmem:[#allocation2 + $0x80] sm:$0xff] %v2376
        %2407 = vst [vmem:[#allocation2 + $0x88] sm:$0x3] %v2377
        %2408 = vst [vmem:[#allocation2 + $0x90] sm:$0xff] %v2378
        %2409 = vst [vmem:[#allocation2 + $0x98] sm:$0xff] %v2379
        %2410 = vst [vmem:[#allocation2 + $0xa0] sm:$0x3] %v2380
        %2411 = vst [vmem:[#allocation2 + $0xa8] sm:$0xff] %v2381
        %2412 = vst [vmem:[#allocation2 + $0xb0] sm:$0xff] %v2382
        %2413 = vst [vmem:[#allocation2 + $0xb8] sm:$0x3] %v2383
        %2414 = vst [vmem:[#allocation2 + $0xc0] sm:$0xff] %v2384
        %2415 = vst [vmem:[#allocation2 + $0xc8] sm:$0xff] %v2385
        %2416 = vst [vmem:[#allocation2 + $0xd0] sm:$0x3] %v2386
        %2417 = vst [vmem:[#allocation2 + $0xd8] sm:$0xff] %v2387
        %2418 = vst [vmem:[#allocation2 + $0xe0] sm:$0xff] %v2388
        %2419 = vst [vmem:[#allocation2 + $0xe8] sm:$0x3] %v2389
        %v2420 = vld [vmem:[#allocation2] sm:$0xff]
        %v2421 = vld [vmem:[#allocation2 + $0x8] sm:$0xff]
        %v2422 = vld [vmem:[#allocation2 + $0x18] sm:$0xff]
        %v2423 = vld [vmem:[#allocation2 + $0x20] sm:$0xff]
        %v2424 = vld [vmem:[#allocation2 + $0x30] sm:$0xff]
        %v2425 = vld [vmem:[#allocation2 + $0x38] sm:$0xff]
        %v2426 = vld [vmem:[#allocation2 + $0x48] sm:$0xff]
        %v2427 = vld [vmem:[#allocation2 + $0x50] sm:$0xff]
        %v2428 = vld [vmem:[#allocation2 + $0x60] sm:$0xff]
        %v2429 = vld [vmem:[#allocation2 + $0x68] sm:$0xff]
        %v2430 = vld [vmem:[#allocation2 + $0x78] sm:$0xff]
        %v2431 = vld [vmem:[#allocation2 + $0x80] sm:$0xff]
        %v2432 = vld [vmem:[#allocation2 + $0x90] sm:$0xff]
        %v2433 = vld [vmem:[#allocation2 + $0x98] sm:$0xff]
        %v2434 = vld [vmem:[#allocation2 + $0xa8] sm:$0xff]
        %v2435 = vld [vmem:[#allocation2 + $0xb0] sm:$0xff]
        %v2436 = vpack.c.bf16 %v2421, %v2420
        %v2437 = vpack.c.bf16 %v2423, %v2422
        %v2438 = vpack.c.bf16 %v2425, %v2424
        %v2439 = vpack.c.bf16 %v2427, %v2426
        %v2440 = vpack.c.bf16 %v2429, %v2428
        %v2441 = vpack.c.bf16 %v2431, %v2430
        %v2442 = vpack.c.bf16 %v2433, %v2432
        %v2443 = vpack.c.bf16 %v2435, %v2434
        %v2444 = vld [vmem:[%s3] sm:$0xf]
        %v2445 = vld [vmem:[%s3 + $0x4] sm:$0xf]
        %v2446 = vld [vmem:[%s3 + $0x8] sm:$0xf]
        %v2447 = vld [vmem:[%s3 + $0xc] sm:$0xf]
        %v2448 = vld [vmem:[%s3 + $0x10] sm:$0xf]
        %v2449 = vld [vmem:[%s3 + $0x14] sm:$0xf]
        %v2450 = vld [vmem:[%s3 + $0x18] sm:$0xf]
        %v2451 = vld [vmem:[%s3 + $0x1c] sm:$0xf]
        %v2452 = vld [vmem:[%s3 + $0x20] sm:$0xf]
        %v2453 = vld [vmem:[%s3 + $0x24] sm:$0xf]
        %v2454 = vld [vmem:[%s3 + $0x28] sm:$0xf]
        %v2455 = vld [vmem:[%s3 + $0x2c] sm:$0xf]
        %v2456 = vld [vmem:[%s3 + $0x30] sm:$0xf]
        %v2457 = vld [vmem:[%s3 + $0x34] sm:$0xf]
        %v2458 = vld [vmem:[%s3 + $0x38] sm:$0xf]
        %v2459 = vld [vmem:[%s3 + $0x3c] sm:$0xf]
        %v2460 = vld [vmem:[#allocation2 + $0x1] sm:$0xff]
        %v2461 = vld [vmem:[#allocation2 + $0x9] sm:$0xff]
        %v2462 = vld [vmem:[#allocation2 + $0x19] sm:$0xff]
        %v2463 = vld [vmem:[#allocation2 + $0x21] sm:$0xff]
        %v2464 = vld [vmem:[#allocation2 + $0x31] sm:$0xff]
        %v2465 = vld [vmem:[#allocation2 + $0x39] sm:$0xff]
        %v2466 = vld [vmem:[#allocation2 + $0x49] sm:$0xff]
        %v2467 = vld [vmem:[#allocation2 + $0x51] sm:$0xff]
        %v2468 = vld [vmem:[#allocation2 + $0x61] sm:$0xff]
        %v2469 = vld [vmem:[#allocation2 + $0x69] sm:$0xff]
        %v2470 = vld [vmem:[#allocation2 + $0x79] sm:$0xff]
        %v2471 = vld [vmem:[#allocation2 + $0x81] sm:$0xff]
        %v2472 = vld [vmem:[#allocation2 + $0x91] sm:$0xff]
        %v2473 = vld [vmem:[#allocation2 + $0x99] sm:$0xff]
        %v2474 = vld [vmem:[#allocation2 + $0xa9] sm:$0xff]
        %v2475 = vld [vmem:[#allocation2 + $0xb1] sm:$0xff]
        %v2476 = vpack.c.bf16 %v2461, %v2460
        %v2477 = vpack.c.bf16 %v2463, %v2462
        %v2478 = vpack.c.bf16 %v2465, %v2464
        %v2479 = vpack.c.bf16 %v2467, %v2466
        %v2480 = vpack.c.bf16 %v2469, %v2468
        %v2481 = vpack.c.bf16 %v2471, %v2470
        %v2482 = vpack.c.bf16 %v2473, %v2472
        %v2483 = vpack.c.bf16 %v2475, %v2474
        %s2484 = scalar_lea.vmem %s3, 64
        %v2485 = vld [vmem:[%s2484] sm:$0xf]
        %v2486 = vld [vmem:[%s2484 + $0x4] sm:$0xf]
        %v2487 = vld [vmem:[%s2484 + $0x8] sm:$0xf]
        %v2488 = vld [vmem:[%s2484 + $0xc] sm:$0xf]
        %v2489 = vld [vmem:[%s2484 + $0x10] sm:$0xf]
        %v2490 = vld [vmem:[%s2484 + $0x14] sm:$0xf]
        %v2491 = vld [vmem:[%s2484 + $0x18] sm:$0xf]
        %v2492 = vld [vmem:[%s2484 + $0x1c] sm:$0xf]
        %v2493 = vld [vmem:[%s2484 + $0x20] sm:$0xf]
        %v2494 = vld [vmem:[%s2484 + $0x24] sm:$0xf]
        %v2495 = vld [vmem:[%s2484 + $0x28] sm:$0xf]
        %v2496 = vld [vmem:[%s2484 + $0x2c] sm:$0xf]
        %v2497 = vld [vmem:[%s2484 + $0x30] sm:$0xf]
        %v2498 = vld [vmem:[%s2484 + $0x34] sm:$0xf]
        %v2499 = vld [vmem:[%s2484 + $0x38] sm:$0xf]
        %v2500 = vld [vmem:[%s2484 + $0x3c] sm:$0xf]
        %v2517 = vunpack.c.l.b16 %v2485
        %v2518 = vunpack.c.l.b16 %v2486
        %v2519 = vunpack.c.l.b16 %v2487
        %v2520 = vunpack.c.l.b16 %v2488
        %v2521 = vunpack.c.l.b16 %v2489
        %v2522 = vunpack.c.l.b16 %v2490
        %v2523 = vunpack.c.l.b16 %v2491
        %v2524 = vunpack.c.l.b16 %v2492
        %v2525 = vunpack.c.l.b16 %v2493
        %v2526 = vunpack.c.l.b16 %v2494
        %v2527 = vunpack.c.l.b16 %v2495
        %v2528 = vunpack.c.l.b16 %v2496
        %v2529 = vunpack.c.l.b16 %v2497
        %v2530 = vunpack.c.l.b16 %v2498
        %v2531 = vunpack.c.l.b16 %v2499
        %v2532 = vunpack.c.l.b16 %v2500
        %v2533 = vpack.c.b16 %v2518, %v2517
        %v2534 = vpack.c.b16 %v2520, %v2519
        %v2535 = vpack.c.b16 %v2522, %v2521
        %v2536 = vpack.c.b16 %v2524, %v2523
        %v2537 = vpack.c.b16 %v2526, %v2525
        %v2538 = vpack.c.b16 %v2528, %v2527
        %v2539 = vpack.c.b16 %v2530, %v2529
        %v2540 = vpack.c.b16 %v2532, %v2531
        %2549 = vmatprep.subr.bf16.mxu0 0
        %2550 = vmatpush1.bf16.msra.mxu0 %v2533
        %2551 = vmatprep.subr.bf16.mxu0 0
        %2552 = vmatpush1.bf16.msra.mxu0 %v2534
        %2553 = vmatprep.subr.bf16.mxu0 0
        %2554 = vmatpush1.bf16.msra.mxu0 %v2535
        %2555 = vmatprep.subr.bf16.mxu0 0
        %2556 = vmatpush1.bf16.msra.mxu0 %v2536
        %2557 = vmatprep.subr.bf16.mxu0 0
        %2558 = vmatpush1.bf16.msra.mxu0 %v2537
        %2559 = vmatprep.subr.bf16.mxu0 0
        %2560 = vmatpush1.bf16.msra.mxu0 %v2538
        %2561 = vmatprep.subr.bf16.mxu0 0
        %2562 = vmatpush1.bf16.msra.mxu0 %v2539
        %2563 = vmatprep.subr.bf16.mxu0 0
        %2564 = vmatpush1.bf16.msra.mxu0 %v2540
        %2565 = vmatprep.subr.bf16.mxu0 0
        %2566 = vmatpush1.bf16.msra.mxu0 0
        %2567 = vmatprep.subr.bf16.mxu0 0
        %2568 = vmatpush1.bf16.msra.mxu0 0
        %2569 = vmatprep.subr.bf16.mxu0 0
        %2570 = vmatpush1.bf16.msra.mxu0 0
        %2571 = vmatprep.subr.bf16.mxu0 0
        %2572 = vmatpush1.bf16.msra.mxu0 0
        %2573 = vmatprep.subr.bf16.mxu0 0
        %2574 = vmatpush1.bf16.msra.mxu0 0
        %2575 = vmatprep.subr.bf16.mxu0 0
        %2576 = vmatpush1.bf16.msra.mxu0 0
        %2577 = vmatprep.subr.bf16.mxu0 0
        %2578 = vmatpush1.bf16.msra.mxu0 0
        %2579 = vmatprep.subr.bf16.mxu0 0
        %2580 = vmatpush1.bf16.msra.mxu0 0
        %2581 = vmatprep.mubr.bf16.mxu0 0
        %2582 = vmatmul.mubr.bf16.gmra.mrb[0].mxu0 %v2476
        %v2583 = vpop.f32.mrb[0].mxu0
        %v2584 = vadd.f32 0.0, %v2583
        %v2585 = vpop.f32.mrb[0].mxu0
        %v2586 = vpop.f32.mrb[0].mxu0
        %v2587 = vadd.f32 0.0, %v2586
        %v2588 = vpop.f32.mrb[0].mxu0
        %2589 = vmatprep.mubr.bf16.mxu0 0
        %2590 = vmatmul.mubr.bf16.gmra.mrb[0].mxu0 %v2477
        %v2591 = vpop.f32.mrb[0].mxu0
        %v2592 = vadd.f32 0.0, %v2591
        %v2593 = vpop.f32.mrb[0].mxu0
        %v2594 = vpop.f32.mrb[0].mxu0
        %v2595 = vadd.f32 0.0, %v2594
        %v2596 = vpop.f32.mrb[0].mxu0
        %2597 = vmatprep.mubr.bf16.mxu0 0
        %2598 = vmatmul.mubr.bf16.gmra.mrb[0].mxu0 %v2478
        %v2599 = vpop.f32.mrb[0].mxu0
        %v2600 = vadd.f32 0.0, %v2599
        %v2601 = vpop.f32.mrb[0].mxu0
        %v2602 = vpop.f32.mrb[0].mxu0
        %v2603 = vadd.f32 0.0, %v2602
        %v2604 = vpop.f32.mrb[0].mxu0
        %2605 = vmatprep.mubr.bf16.mxu0 0
        %2606 = vmatmul.mubr.bf16.gmra.mrb[0].mxu0 %v2479
        %v2607 = vpop.f32.mrb[0].mxu0
        %v2608 = vadd.f32 0.0, %v2607
        %v2609 = vpop.f32.mrb[0].mxu0
        %v2610 = vpop.f32.mrb[0].mxu0
        %v2611 = vadd.f32 0.0, %v2610
        %v2612 = vpop.f32.mrb[0].mxu0
        %2613 = vmatprep.mubr.bf16.mxu0 0
        %2614 = vmatmul.mubr.bf16.gmra.mrb[0].mxu0 %v2480
        %v2615 = vpop.f32.mrb[0].mxu0
        %v2616 = vadd.f32 0.0, %v2615
        %v2617 = vpop.f32.mrb[0].mxu0
        %v2618 = vpop.f32.mrb[0].mxu0
        %v2619 = vadd.f32 0.0, %v2618
        %v2620 = vpop.f32.mrb[0].mxu0
        %2621 = vmatprep.mubr.bf16.mxu0 0
        %2622 = vmatmul.mubr.bf16.gmra.mrb[0].mxu0 %v2481
        %v2623 = vpop.f32.mrb[0].mxu0
        %v2624 = vadd.f32 0.0, %v2623
        %v2625 = vpop.f32.mrb[0].mxu0
        %v2626 = vpop.f32.mrb[0].mxu0
        %v2627 = vadd.f32 0.0, %v2626
        %v2628 = vpop.f32.mrb[0].mxu0
        %2629 = vmatprep.mubr.bf16.mxu0 0
        %2630 = vmatmul.mubr.bf16.gmra.mrb[0].mxu0 %v2482
        %v2631 = vpop.f32.mrb[0].mxu0
        %v2632 = vadd.f32 0.0, %v2631
        %v2633 = vpop.f32.mrb[0].mxu0
        %v2634 = vpop.f32.mrb[0].mxu0
        %v2635 = vadd.f32 0.0, %v2634
        %v2636 = vpop.f32.mrb[0].mxu0
        %2637 = vmatprep.mubr.bf16.mxu0 0
        %2638 = vmatmul.mubr.bf16.gmra.mrb[0].mxu0 %v2483
        %v2639 = vpop.f32.mrb[0].mxu0
        %v2640 = vadd.f32 0.0, %v2639
        %v2641 = vpop.f32.mrb[0].mxu0
        %v2642 = vpop.f32.mrb[0].mxu0
        %v2643 = vadd.f32 0.0, %v2642
        %v2644 = vpop.f32.mrb[0].mxu0
        %2645 = vdwg.mxu0
        %v2662 = vunpack.c.l.b16 %v2444
        %v2663 = vunpack.c.l.b16 %v2445
        %v2664 = vunpack.c.l.b16 %v2446
        %v2665 = vunpack.c.l.b16 %v2447
        %v2666 = vunpack.c.l.b16 %v2448
        %v2667 = vunpack.c.l.b16 %v2449
        %v2668 = vunpack.c.l.b16 %v2450
        %v2669 = vunpack.c.l.b16 %v2451
        %v2670 = vunpack.c.l.b16 %v2452
        %v2671 = vunpack.c.l.b16 %v2453
        %v2672 = vunpack.c.l.b16 %v2454
        %v2673 = vunpack.c.l.b16 %v2455
        %v2674 = vunpack.c.l.b16 %v2456
        %v2675 = vunpack.c.l.b16 %v2457
        %v2676 = vunpack.c.l.b16 %v2458
        %v2677 = vunpack.c.l.b16 %v2459
        %v2678 = vpack.c.b16 %v2663, %v2662
        %v2679 = vpack.c.b16 %v2665, %v2664
        %v2680 = vpack.c.b16 %v2667, %v2666
        %v2681 = vpack.c.b16 %v2669, %v2668
        %v2682 = vpack.c.b16 %v2671, %v2670
        %v2683 = vpack.c.b16 %v2673, %v2672
        %v2684 = vpack.c.b16 %v2675, %v2674
        %v2685 = vpack.c.b16 %v2677, %v2676
        %2694 = vmatprep.subr.bf16.mxu0 0
        %2695 = vmatpush1.bf16.msra.mxu0 %v2678
        %2696 = vmatprep.subr.bf16.mxu0 0
        %2697 = vmatpush1.bf16.msra.mxu0 %v2679
        %2698 = vmatprep.subr.bf16.mxu0 0
        %2699 = vmatpush1.bf16.msra.mxu0 %v2680
        %2700 = vmatprep.subr.bf16.mxu0 0
        %2701 = vmatpush1.bf16.msra.mxu0 %v2681
        %2702 = vmatprep.subr.bf16.mxu0 0
        %2703 = vmatpush1.bf16.msra.mxu0 %v2682
        %2704 = vmatprep.subr.bf16.mxu0 0
        %2705 = vmatpush1.bf16.msra.mxu0 %v2683
        %2706 = vmatprep.subr.bf16.mxu0 0
        %2707 = vmatpush1.bf16.msra.mxu0 %v2684
        %2708 = vmatprep.subr.bf16.mxu0 0
        %2709 = vmatpush1.bf16.msra.mxu0 %v2685
        %2710 = vmatprep.subr.bf16.mxu0 0
        %2711 = vmatpush1.bf16.msra.mxu0 0
        %2712 = vmatprep.subr.bf16.mxu0 0
        %2713 = vmatpush1.bf16.msra.mxu0 0
        %2714 = vmatprep.subr.bf16.mxu0 0
        %2715 = vmatpush1.bf16.msra.mxu0 0
        %2716 = vmatprep.subr.bf16.mxu0 0
        %2717 = vmatpush1.bf16.msra.mxu0 0
        %2718 = vmatprep.subr.bf16.mxu0 0
        %2719 = vmatpush1.bf16.msra.mxu0 0
        %2720 = vmatprep.subr.bf16.mxu0 0
        %2721 = vmatpush1.bf16.msra.mxu0 0
        %2722 = vmatprep.subr.bf16.mxu0 0
        %2723 = vmatpush1.bf16.msra.mxu0 0
        %2724 = vmatprep.subr.bf16.mxu0 0
        %2725 = vmatpush1.bf16.msra.mxu0 0
        %2726 = vmatprep.mubr.bf16.mxu0 0
        %2727 = vmatmul.mubr.bf16.gmra.mrb[0].mxu0 %v2436
        %v2728 = vpop.f32.mrb[0].mxu0
        %v2729 = vadd.f32 %v2584, %v2728
        %v2730 = vpop.f32.mrb[0].mxu0
        %v2731 = vpop.f32.mrb[0].mxu0
        %v2732 = vadd.f32 %v2587, %v2731
        %v2733 = vpop.f32.mrb[0].mxu0
        %2734 = vmatprep.mubr.bf16.mxu0 0
        %2735 = vmatmul.mubr.bf16.gmra.mrb[0].mxu0 %v2437
        %v2736 = vpop.f32.mrb[0].mxu0
        %v2737 = vadd.f32 %v2592, %v2736
        %v2738 = vpop.f32.mrb[0].mxu0
        %v2739 = vpop.f32.mrb[0].mxu0
        %v2740 = vadd.f32 %v2595, %v2739
        %v2741 = vpop.f32.mrb[0].mxu0
        %2742 = vmatprep.mubr.bf16.mxu0 0
        %2743 = vmatmul.mubr.bf16.gmra.mrb[0].mxu0 %v2438
        %v2744 = vpop.f32.mrb[0].mxu0
        %v2745 = vadd.f32 %v2600, %v2744
        %v2746 = vpop.f32.mrb[0].mxu0
        %v2747 = vpop.f32.mrb[0].mxu0
        %v2748 = vadd.f32 %v2603, %v2747
        %v2749 = vpop.f32.mrb[0].mxu0
        %2750 = vmatprep.mubr.bf16.mxu0 0
        %2751 = vmatmul.mubr.bf16.gmra.mrb[0].mxu0 %v2439
        %v2752 = vpop.f32.mrb[0].mxu0
        %v2753 = vadd.f32 %v2608, %v2752
        %v2754 = vpop.f32.mrb[0].mxu0
        %v2755 = vpop.f32.mrb[0].mxu0
        %v2756 = vadd.f32 %v2611, %v2755
        %v2757 = vpop.f32.mrb[0].mxu0
        %2758 = vmatprep.mubr.bf16.mxu0 0
        %2759 = vmatmul.mubr.bf16.gmra.mrb[0].mxu0 %v2440
        %v2760 = vpop.f32.mrb[0].mxu0
        %v2761 = vadd.f32 %v2616, %v2760
        %v2762 = vpop.f32.mrb[0].mxu0
        %v2763 = vpop.f32.mrb[0].mxu0
        %v2764 = vadd.f32 %v2619, %v2763
        %v2765 = vpop.f32.mrb[0].mxu0
        %2766 = vmatprep.mubr.bf16.mxu0 0
        %2767 = vmatmul.mubr.bf16.gmra.mrb[0].mxu0 %v2441
        %v2768 = vpop.f32.mrb[0].mxu0
        %v2769 = vadd.f32 %v2624, %v2768
        %v2770 = vpop.f32.mrb[0].mxu0
        %v2771 = vpop.f32.mrb[0].mxu0
        %v2772 = vadd.f32 %v2627, %v2771
        %v2773 = vpop.f32.mrb[0].mxu0
        %2774 = vmatprep.mubr.bf16.mxu0 0
        %2775 = vmatmul.mubr.bf16.gmra.mrb[0].mxu0 %v2442
        %v2776 = vpop.f32.mrb[0].mxu0
        %v2777 = vadd.f32 %v2632, %v2776
        %v2778 = vpop.f32.mrb[0].mxu0
        %v2779 = vpop.f32.mrb[0].mxu0
        %v2780 = vadd.f32 %v2635, %v2779
        %v2781 = vpop.f32.mrb[0].mxu0
        %2782 = vmatprep.mubr.bf16.mxu0 0
        %2783 = vmatmul.mubr.bf16.gmra.mrb[0].mxu0 %v2443
        %v2784 = vpop.f32.mrb[0].mxu0
        %v2785 = vadd.f32 %v2640, %v2784
        %v2786 = vpop.f32.mrb[0].mxu0
        %v2787 = vpop.f32.mrb[0].mxu0
        %v2788 = vadd.f32 %v2643, %v2787
        %v2789 = vpop.f32.mrb[0].mxu0
        %2790 = vdwg.mxu0
        %v2791 = vld [vmem:[#allocation2 + $0x2] sm:$0xff]
        %v2792 = vld [vmem:[#allocation2 + $0xa] sm:$0xff]
        %v2793 = vld [vmem:[#allocation2 + $0x1a] sm:$0xff]
        %v2794 = vld [vmem:[#allocation2 + $0x22] sm:$0xff]
        %v2795 = vld [vmem:[#allocation2 + $0x32] sm:$0xff]
        %v2796 = vld [vmem:[#allocation2 + $0x3a] sm:$0xff]
        %v2797 = vld [vmem:[#allocation2 + $0x4a] sm:$0xff]
        %v2798 = vld [vmem:[#allocation2 + $0x52] sm:$0xff]
        %v2799 = vld [vmem:[#allocation2 + $0x62] sm:$0xff]
        %v2800 = vld [vmem:[#allocation2 + $0x6a] sm:$0xff]
        %v2801 = vld [vmem:[#allocation2 + $0x7a] sm:$0xff]
        %v2802 = vld [vmem:[#allocation2 + $0x82] sm:$0xff]
        %v2803 = vld [vmem:[#allocation2 + $0x92] sm:$0xff]
        %v2804 = vld [vmem:[#allocation2 + $0x9a] sm:$0xff]
        %v2805 = vld [vmem:[#allocation2 + $0xaa] sm:$0xff]
        %v2806 = vld [vmem:[#allocation2 + $0xb2] sm:$0xff]
        %v2807 = vpack.c.bf16 %v2792, %v2791
        %v2808 = vpack.c.bf16 %v2794, %v2793
        %v2809 = vpack.c.bf16 %v2796, %v2795
        %v2810 = vpack.c.bf16 %v2798, %v2797
        %v2811 = vpack.c.bf16 %v2800, %v2799
        %v2812 = vpack.c.bf16 %v2802, %v2801
        %v2813 = vpack.c.bf16 %v2804, %v2803
        %v2814 = vpack.c.bf16 %v2806, %v2805
        %s2815 = scalar_lea.vmem %s3, 128
        %v2816 = vld [vmem:[%s2815] sm:$0xf]
        %v2817 = vld [vmem:[%s2815 + $0x4] sm:$0xf]
        %v2818 = vld [vmem:[%s2815 + $0x8] sm:$0xf]
        %v2819 = vld [vmem:[%s2815 + $0xc] sm:$0xf]
        %v2820 = vld [vmem:[%s2815 + $0x10] sm:$0xf]
        %v2821 = vld [vmem:[%s2815 + $0x14] sm:$0xf]
        %v2822 = vld [vmem:[%s2815 + $0x18] sm:$0xf]
        %v2823 = vld [vmem:[%s2815 + $0x1c] sm:$0xf]
        %v2824 = vld [vmem:[%s2815 + $0x20] sm:$0xf]
        %v2825 = vld [vmem:[%s2815 + $0x24] sm:$0xf]
        %v2826 = vld [vmem:[%s2815 + $0x28] sm:$0xf]
        %v2827 = vld [vmem:[%s2815 + $0x2c] sm:$0xf]
        %v2828 = vld [vmem:[%s2815 + $0x30] sm:$0xf]
        %v2829 = vld [vmem:[%s2815 + $0x34] sm:$0xf]
        %v2830 = vld [vmem:[%s2815 + $0x38] sm:$0xf]
        %v2831 = vld [vmem:[%s2815 + $0x3c] sm:$0xf]
        %v2848 = vunpack.c.l.b16 %v2816
        %v2849 = vunpack.c.l.b16 %v2817
        %v2850 = vunpack.c.l.b16 %v2818
        %v2851 = vunpack.c.l.b16 %v2819
        %v2852 = vunpack.c.l.b16 %v2820
        %v2853 = vunpack.c.l.b16 %v2821
        %v2854 = vunpack.c.l.b16 %v2822
        %v2855 = vunpack.c.l.b16 %v2823
        %v2856 = vunpack.c.l.b16 %v2824
        %v2857 = vunpack.c.l.b16 %v2825
        %v2858 = vunpack.c.l.b16 %v2826
        %v2859 = vunpack.c.l.b16 %v2827
        %v2860 = vunpack.c.l.b16 %v2828
        %v2861 = vunpack.c.l.b16 %v2829
        %v2862 = vunpack.c.l.b16 %v2830
        %v2863 = vunpack.c.l.b16 %v2831
        %v2864 = vpack.c.b16 %v2849, %v2848
        %v2865 = vpack.c.b16 %v2851, %v2850
        %v2866 = vpack.c.b16 %v2853, %v2852
        %v2867 = vpack.c.b16 %v2855, %v2854
        %v2868 = vpack.c.b16 %v2857, %v2856
        %v2869 = vpack.c.b16 %v2859, %v2858
        %v2870 = vpack.c.b16 %v2861, %v2860
        %v2871 = vpack.c.b16 %v2863, %v2862
        %2880 = vmatprep.subr.bf16.mxu0 0
        %2881 = vmatpush1.bf16.msra.mxu0 %v2864
        %2882 = vmatprep.subr.bf16.mxu0 0
        %2883 = vmatpush1.bf16.msra.mxu0 %v2865
        %2884 = vmatprep.subr.bf16.mxu0 0
        %2885 = vmatpush1.bf16.msra.mxu0 %v2866
        %2886 = vmatprep.subr.bf16.mxu0 0
        %2887 = vmatpush1.bf16.msra.mxu0 %v2867
        %2888 = vmatprep.subr.bf16.mxu0 0
        %2889 = vmatpush1.bf16.msra.mxu0 %v2868
        %2890 = vmatprep.subr.bf16.mxu0 0
        %2891 = vmatpush1.bf16.msra.mxu0 %v2869
        %2892 = vmatprep.subr.bf16.mxu0 0
        %2893 = vmatpush1.bf16.msra.mxu0 %v2870
        %2894 = vmatprep.subr.bf16.mxu0 0
        %2895 = vmatpush1.bf16.msra.mxu0 %v2871
        %2896 = vmatprep.subr.bf16.mxu0 0
        %2897 = vmatpush1.bf16.msra.mxu0 0
        %2898 = vmatprep.subr.bf16.mxu0 0
        %2899 = vmatpush1.bf16.msra.mxu0 0
        %2900 = vmatprep.subr.bf16.mxu0 0
        %2901 = vmatpush1.bf16.msra.mxu0 0
        %2902 = vmatprep.subr.bf16.mxu0 0
        %2903 = vmatpush1.bf16.msra.mxu0 0
        %2904 = vmatprep.subr.bf16.mxu0 0
        %2905 = vmatpush1.bf16.msra.mxu0 0
        %2906 = vmatprep.subr.bf16.mxu0 0
        %2907 = vmatpush1.bf16.msra.mxu0 0
        %2908 = vmatprep.subr.bf16.mxu0 0
        %2909 = vmatpush1.bf16.msra.mxu0 0
        %2910 = vmatprep.subr.bf16.mxu0 0
        %2911 = vmatpush1.bf16.msra.mxu0 0
        %2912 = vmatprep.mubr.bf16.mxu0 0
        %2913 = vmatmul.mubr.bf16.gmra.mrb[0].mxu0 %v2807
        %v2914 = vpop.f32.mrb[0].mxu0
        %v2915 = vadd.f32 0.0, %v2914
        %v2916 = vpop.f32.mrb[0].mxu0
        %v2917 = vpop.f32.mrb[0].mxu0
        %v2918 = vadd.f32 0.0, %v2917
        %v2919 = vpop.f32.mrb[0].mxu0
        %2920 = vmatprep.mubr.bf16.mxu0 0
        %2921 = vmatmul.mubr.bf16.gmra.mrb[0].mxu0 %v2808
        %v2922 = vpop.f32.mrb[0].mxu0
        %v2923 = vadd.f32 0.0, %v2922
        %v2924 = vpop.f32.mrb[0].mxu0
        %v2925 = vpop.f32.mrb[0].mxu0
        %v2926 = vadd.f32 0.0, %v2925
        %v2927 = vpop.f32.mrb[0].mxu0
        %2928 = vmatprep.mubr.bf16.mxu0 0
        %2929 = vmatmul.mubr.bf16.gmra.mrb[0].mxu0 %v2809
        %v2930 = vpop.f32.mrb[0].mxu0
        %v2931 = vadd.f32 0.0, %v2930
        %v2932 = vpop.f32.mrb[0].mxu0
        %v2933 = vpop.f32.mrb[0].mxu0
        %v2934 = vadd.f32 0.0, %v2933
        %v2935 = vpop.f32.mrb[0].mxu0
        %2936 = vmatprep.mubr.bf16.mxu0 0
        %2937 = vmatmul.mubr.bf16.gmra.mrb[0].mxu0 %v2810
        %v2938 = vpop.f32.mrb[0].mxu0
        %v2939 = vadd.f32 0.0, %v2938
        %v2940 = vpop.f32.mrb[0].mxu0
        %v2941 = vpop.f32.mrb[0].mxu0
        %v2942 = vadd.f32 0.0, %v2941
        %v2943 = vpop.f32.mrb[0].mxu0
        %2944 = vmatprep.mubr.bf16.mxu0 0
        %2945 = vmatmul.mubr.bf16.gmra.mrb[0].mxu0 %v2811
        %v2946 = vpop.f32.mrb[0].mxu0
        %v2947 = vadd.f32 0.0, %v2946
        %v2948 = vpop.f32.mrb[0].mxu0
        %v2949 = vpop.f32.mrb[0].mxu0
        %v2950 = vadd.f32 0.0, %v2949
        %v2951 = vpop.f32.mrb[0].mxu0
        %2952 = vmatprep.mubr.bf16.mxu0 0
        %2953 = vmatmul.mubr.bf16.gmra.mrb[0].mxu0 %v2812
        %v2954 = vpop.f32.mrb[0].mxu0
        %v2955 = vadd.f32 0.0, %v2954
        %v2956 = vpop.f32.mrb[0].mxu0
        %v2957 = vpop.f32.mrb[0].mxu0
        %v2958 = vadd.f32 0.0, %v2957
        %v2959 = vpop.f32.mrb[0].mxu0
        %2960 = vmatprep.mubr.bf16.mxu0 0
        %2961 = vmatmul.mubr.bf16.gmra.mrb[0].mxu0 %v2813
        %v2962 = vpop.f32.mrb[0].mxu0
        %v2963 = vadd.f32 0.0, %v2962
        %v2964 = vpop.f32.mrb[0].mxu0
        %v2965 = vpop.f32.mrb[0].mxu0
        %v2966 = vadd.f32 0.0, %v2965
        %v2967 = vpop.f32.mrb[0].mxu0
        %2968 = vmatprep.mubr.bf16.mxu0 0
        %2969 = vmatmul.mubr.bf16.gmra.mrb[0].mxu0 %v2814
        %v2970 = vpop.f32.mrb[0].mxu0
        %v2971 = vadd.f32 0.0, %v2970
        %v2972 = vpop.f32.mrb[0].mxu0
        %v2973 = vpop.f32.mrb[0].mxu0
        %v2974 = vadd.f32 0.0, %v2973
        %v2975 = vpop.f32.mrb[0].mxu0
        %2976 = vdwg.mxu0
        %v2977 = vadd.f32 %v2729, %v2915
        %v2978 = vadd.f32 %v2732, %v2918
        %v2979 = vadd.f32 %v2737, %v2923
        %v2980 = vadd.f32 %v2740, %v2926
        %v2981 = vadd.f32 %v2745, %v2931
        %v2982 = vadd.f32 %v2748, %v2934
        %v2983 = vadd.f32 %v2753, %v2939
        %v2984 = vadd.f32 %v2756, %v2942
        %v2985 = vadd.f32 %v2761, %v2947
        %v2986 = vadd.f32 %v2764, %v2950
        %v2987 = vadd.f32 %v2769, %v2955
        %v2988 = vadd.f32 %v2772, %v2958
        %v2989 = vadd.f32 %v2777, %v2963
        %v2990 = vadd.f32 %v2780, %v2966
        %v2991 = vadd.f32 %v2785, %v2971
        %v2992 = vadd.f32 %v2788, %v2974
        %s2993 = scalar_lea.vmem [#allocation2], 24
        %v2994 = vld [vmem:[%s2993] sm:$0xff]
        %v2995 = vld [vmem:[%s2993 + $0x8] sm:$0xff]
        %v2996 = vld [vmem:[%s2993 + $0x18] sm:$0xff]
        %v2997 = vld [vmem:[%s2993 + $0x20] sm:$0xff]
        %v2998 = vld [vmem:[%s2993 + $0x30] sm:$0xff]
        %v2999 = vld [vmem:[%s2993 + $0x38] sm:$0xff]
        %v3000 = vld [vmem:[%s2993 + $0x48] sm:$0xff]
        %v3001 = vld [vmem:[%s2993 + $0x50] sm:$0xff]
        %v3002 = vld [vmem:[%s2993 + $0x60] sm:$0xff]
        %v3003 = vld [vmem:[%s2993 + $0x68] sm:$0xff]
        %v3004 = vld [vmem:[%s2993 + $0x78] sm:$0xff]
        %v3005 = vld [vmem:[%s2993 + $0x80] sm:$0xff]
        %v3006 = vld [vmem:[%s2993 + $0x90] sm:$0xff]
        %v3007 = vld [vmem:[%s2993 + $0x98] sm:$0xff]
        %v3008 = vld [vmem:[%s2993 + $0xa8] sm:$0xff]
        %v3009 = vld [vmem:[%s2993 + $0xb0] sm:$0xff]
        %v3010 = vpack.c.bf16 %v2995, %v2994
        %v3011 = vpack.c.bf16 %v2997, %v2996
        %v3012 = vpack.c.bf16 %v2999, %v2998
        %v3013 = vpack.c.bf16 %v3001, %v3000
        %v3014 = vpack.c.bf16 %v3003, %v3002
        %v3015 = vpack.c.bf16 %v3005, %v3004
        %v3016 = vpack.c.bf16 %v3007, %v3006
        %v3017 = vpack.c.bf16 %v3009, %v3008
        %s3018 = scalar_lea.vmem %s3, 192
        %v3019 = vld [vmem:[%s3018] sm:$0xf]
        %v3020 = vld [vmem:[%s3018 + $0x4] sm:$0xf]
        %v3021 = vld [vmem:[%s3018 + $0x8] sm:$0xf]
        %v3022 = vld [vmem:[%s3018 + $0xc] sm:$0xf]
        %v3023 = vld [vmem:[%s3018 + $0x10] sm:$0xf]
        %v3024 = vld [vmem:[%s3018 + $0x14] sm:$0xf]
        %v3025 = vld [vmem:[%s3018 + $0x18] sm:$0xf]
        %v3026 = vld [vmem:[%s3018 + $0x1c] sm:$0xf]
        %v3027 = vld [vmem:[%s3018 + $0x20] sm:$0xf]
        %v3028 = vld [vmem:[%s3018 + $0x24] sm:$0xf]
        %v3029 = vld [vmem:[%s3018 + $0x28] sm:$0xf]
        %v3030 = vld [vmem:[%s3018 + $0x2c] sm:$0xf]
        %v3031 = vld [vmem:[%s3018 + $0x30] sm:$0xf]
        %v3032 = vld [vmem:[%s3018 + $0x34] sm:$0xf]
        %v3033 = vld [vmem:[%s3018 + $0x38] sm:$0xf]
        %v3034 = vld [vmem:[%s3018 + $0x3c] sm:$0xf]
        %v3051 = vunpack.c.l.b16 %v3019
        %v3052 = vunpack.c.l.b16 %v3020
        %v3053 = vunpack.c.l.b16 %v3021
        %v3054 = vunpack.c.l.b16 %v3022
        %v3055 = vunpack.c.l.b16 %v3023
        %v3056 = vunpack.c.l.b16 %v3024
        %v3057 = vunpack.c.l.b16 %v3025
        %v3058 = vunpack.c.l.b16 %v3026
        %v3059 = vunpack.c.l.b16 %v3027
        %v3060 = vunpack.c.l.b16 %v3028
        %v3061 = vunpack.c.l.b16 %v3029
        %v3062 = vunpack.c.l.b16 %v3030
        %v3063 = vunpack.c.l.b16 %v3031
        %v3064 = vunpack.c.l.b16 %v3032
        %v3065 = vunpack.c.l.b16 %v3033
        %v3066 = vunpack.c.l.b16 %v3034
        %v3067 = vpack.c.b16 %v3052, %v3051
        %v3068 = vpack.c.b16 %v3054, %v3053
        %v3069 = vpack.c.b16 %v3056, %v3055
        %v3070 = vpack.c.b16 %v3058, %v3057
        %v3071 = vpack.c.b16 %v3060, %v3059
        %v3072 = vpack.c.b16 %v3062, %v3061
        %v3073 = vpack.c.b16 %v3064, %v3063
        %v3074 = vpack.c.b16 %v3066, %v3065
        %3083 = vmatprep.subr.bf16.mxu0 0
        %3084 = vmatpush1.bf16.msra.mxu0 %v3067
        %3085 = vmatprep.subr.bf16.mxu0 0
        %3086 = vmatpush1.bf16.msra.mxu0 %v3068
        %3087 = vmatprep.subr.bf16.mxu0 0
        %3088 = vmatpush1.bf16.msra.mxu0 %v3069
        %3089 = vmatprep.subr.bf16.mxu0 0
        %3090 = vmatpush1.bf16.msra.mxu0 %v3070
        %3091 = vmatprep.subr.bf16.mxu0 0
        %3092 = vmatpush1.bf16.msra.mxu0 %v3071
        %3093 = vmatprep.subr.bf16.mxu0 0
        %3094 = vmatpush1.bf16.msra.mxu0 %v3072
        %3095 = vmatprep.subr.bf16.mxu0 0
        %3096 = vmatpush1.bf16.msra.mxu0 %v3073
        %3097 = vmatprep.subr.bf16.mxu0 0
        %3098 = vmatpush1.bf16.msra.mxu0 %v3074
        %3099 = vmatprep.subr.bf16.mxu0 0
        %3100 = vmatpush1.bf16.msra.mxu0 0
        %3101 = vmatprep.subr.bf16.mxu0 0
        %3102 = vmatpush1.bf16.msra.mxu0 0
        %3103 = vmatprep.subr.bf16.mxu0 0
        %3104 = vmatpush1.bf16.msra.mxu0 0
        %3105 = vmatprep.subr.bf16.mxu0 0
        %3106 = vmatpush1.bf16.msra.mxu0 0
        %3107 = vmatprep.subr.bf16.mxu0 0
        %3108 = vmatpush1.bf16.msra.mxu0 0
        %3109 = vmatprep.subr.bf16.mxu0 0
        %3110 = vmatpush1.bf16.msra.mxu0 0
        %3111 = vmatprep.subr.bf16.mxu0 0
        %3112 = vmatpush1.bf16.msra.mxu0 0
        %3113 = vmatprep.subr.bf16.mxu0 0
        %3114 = vmatpush1.bf16.msra.mxu0 0
        %3115 = vmatprep.mubr.bf16.mxu0 0
        %3116 = vmatmul.mubr.bf16.gmra.mrb[0].mxu0 %v3010
        %v3117 = vpop.f32.mrb[0].mxu0
        %v3118 = vadd.f32 0.0, %v3117
        %v3119 = vpop.f32.mrb[0].mxu0
        %v3120 = vpop.f32.mrb[0].mxu0
        %v3121 = vadd.f32 0.0, %v3120
        %v3122 = vpop.f32.mrb[0].mxu0
        %3123 = vmatprep.mubr.bf16.mxu0 0
        %3124 = vmatmul.mubr.bf16.gmra.mrb[0].mxu0 %v3011
        %v3125 = vpop.f32.mrb[0].mxu0
        %v3126 = vadd.f32 0.0, %v3125
        %v3127 = vpop.f32.mrb[0].mxu0
        %v3128 = vpop.f32.mrb[0].mxu0
        %v3129 = vadd.f32 0.0, %v3128
        %v3130 = vpop.f32.mrb[0].mxu0
        %3131 = vmatprep.mubr.bf16.mxu0 0
        %3132 = vmatmul.mubr.bf16.gmra.mrb[0].mxu0 %v3012
        %v3133 = vpop.f32.mrb[0].mxu0
        %v3134 = vadd.f32 0.0, %v3133
        %v3135 = vpop.f32.mrb[0].mxu0
        %v3136 = vpop.f32.mrb[0].mxu0
        %v3137 = vadd.f32 0.0, %v3136
        %v3138 = vpop.f32.mrb[0].mxu0
        %3139 = vmatprep.mubr.bf16.mxu0 0
        %3140 = vmatmul.mubr.bf16.gmra.mrb[0].mxu0 %v3013
        %v3141 = vpop.f32.mrb[0].mxu0
        %v3142 = vadd.f32 0.0, %v3141
        %v3143 = vpop.f32.mrb[0].mxu0
        %v3144 = vpop.f32.mrb[0].mxu0
        %v3145 = vadd.f32 0.0, %v3144
        %v3146 = vpop.f32.mrb[0].mxu0
        %3147 = vmatprep.mubr.bf16.mxu0 0
        %3148 = vmatmul.mubr.bf16.gmra.mrb[0].mxu0 %v3014
        %v3149 = vpop.f32.mrb[0].mxu0
        %v3150 = vadd.f32 0.0, %v3149
        %v3151 = vpop.f32.mrb[0].mxu0
        %v3152 = vpop.f32.mrb[0].mxu0
        %v3153 = vadd.f32 0.0, %v3152
        %v3154 = vpop.f32.mrb[0].mxu0
        %3155 = vmatprep.mubr.bf16.mxu0 0
        %3156 = vmatmul.mubr.bf16.gmra.mrb[0].mxu0 %v3015
        %v3157 = vpop.f32.mrb[0].mxu0
        %v3158 = vadd.f32 0.0, %v3157
        %v3159 = vpop.f32.mrb[0].mxu0
        %v3160 = vpop.f32.mrb[0].mxu0
        %v3161 = vadd.f32 0.0, %v3160
        %v3162 = vpop.f32.mrb[0].mxu0
        %3163 = vmatprep.mubr.bf16.mxu0 0
        %3164 = vmatmul.mubr.bf16.gmra.mrb[0].mxu0 %v3016
        %v3165 = vpop.f32.mrb[0].mxu0
        %v3166 = vadd.f32 0.0, %v3165
        %v3167 = vpop.f32.mrb[0].mxu0
        %v3168 = vpop.f32.mrb[0].mxu0
        %v3169 = vadd.f32 0.0, %v3168
        %v3170 = vpop.f32.mrb[0].mxu0
        %3171 = vmatprep.mubr.bf16.mxu0 0
        %3172 = vmatmul.mubr.bf16.gmra.mrb[0].mxu0 %v3017
        %v3173 = vpop.f32.mrb[0].mxu0
        %v3174 = vadd.f32 0.0, %v3173
        %v3175 = vpop.f32.mrb[0].mxu0
        %v3176 = vpop.f32.mrb[0].mxu0
        %v3177 = vadd.f32 0.0, %v3176
        %v3178 = vpop.f32.mrb[0].mxu0
        %3179 = vdwg.mxu0
        %v3180 = vadd.f32 %v2977, %v3118
        %v3181 = vadd.f32 %v2978, %v3121
        %v3182 = vadd.f32 %v2979, %v3126
        %v3183 = vadd.f32 %v2980, %v3129
        %v3184 = vadd.f32 %v2981, %v3134
        %v3185 = vadd.f32 %v2982, %v3137
        %v3186 = vadd.f32 %v2983, %v3142
        %v3187 = vadd.f32 %v2984, %v3145
        %v3188 = vadd.f32 %v2985, %v3150
        %v3189 = vadd.f32 %v2986, %v3153
        %v3190 = vadd.f32 %v2987, %v3158
        %v3191 = vadd.f32 %v2988, %v3161
        %v3192 = vadd.f32 %v2989, %v3166
        %v3193 = vadd.f32 %v2990, %v3169
        %v3194 = vadd.f32 %v2991, %v3174
        %v3195 = vadd.f32 %v2992, %v3177
        %v3196 = vld [vmem:[%s2993 + $0x1] sm:$0xff]
        %v3197 = vld [vmem:[%s2993 + $0x9] sm:$0xff]
        %v3198 = vld [vmem:[%s2993 + $0x19] sm:$0xff]
        %v3199 = vld [vmem:[%s2993 + $0x21] sm:$0xff]
        %v3200 = vld [vmem:[%s2993 + $0x31] sm:$0xff]
        %v3201 = vld [vmem:[%s2993 + $0x39] sm:$0xff]
        %v3202 = vld [vmem:[%s2993 + $0x49] sm:$0xff]
        %v3203 = vld [vmem:[%s2993 + $0x51] sm:$0xff]
        %v3204 = vld [vmem:[%s2993 + $0x61] sm:$0xff]
        %v3205 = vld [vmem:[%s2993 + $0x69] sm:$0xff]
        %v3206 = vld [vmem:[%s2993 + $0x79] sm:$0xff]
        %v3207 = vld [vmem:[%s2993 + $0x81] sm:$0xff]
        %v3208 = vld [vmem:[%s2993 + $0x91] sm:$0xff]
        %v3209 = vld [vmem:[%s2993 + $0x99] sm:$0xff]
        %v3210 = vld [vmem:[%s2993 + $0xa9] sm:$0xff]
        %v3211 = vld [vmem:[%s2993 + $0xb1] sm:$0xff]
        %v3212 = vpack.c.bf16 %v3197, %v3196
        %v3213 = vpack.c.bf16 %v3199, %v3198
        %v3214 = vpack.c.bf16 %v3201, %v3200
        %v3215 = vpack.c.bf16 %v3203, %v3202
        %v3216 = vpack.c.bf16 %v3205, %v3204
        %v3217 = vpack.c.bf16 %v3207, %v3206
        %v3218 = vpack.c.bf16 %v3209, %v3208
        %v3219 = vpack.c.bf16 %v3211, %v3210
        %s3220 = scalar_lea.vmem %s3, 256
        %v3221 = vld [vmem:[%s3220] sm:$0xf]
        %v3222 = vld [vmem:[%s3220 + $0x4] sm:$0xf]
        %v3223 = vld [vmem:[%s3220 + $0x8] sm:$0xf]
        %v3224 = vld [vmem:[%s3220 + $0xc] sm:$0xf]
        %v3225 = vld [vmem:[%s3220 + $0x10] sm:$0xf]
        %v3226 = vld [vmem:[%s3220 + $0x14] sm:$0xf]
        %v3227 = vld [vmem:[%s3220 + $0x18] sm:$0xf]
        %v3228 = vld [vmem:[%s3220 + $0x1c] sm:$0xf]
        %v3229 = vld [vmem:[%s3220 + $0x20] sm:$0xf]
        %v3230 = vld [vmem:[%s3220 + $0x24] sm:$0xf]
        %v3231 = vld [vmem:[%s3220 + $0x28] sm:$0xf]
        %v3232 = vld [vmem:[%s3220 + $0x2c] sm:$0xf]
        %v3233 = vld [vmem:[%s3220 + $0x30] sm:$0xf]
        %v3234 = vld [vmem:[%s3220 + $0x34] sm:$0xf]
        %v3235 = vld [vmem:[%s3220 + $0x38] sm:$0xf]
        %v3236 = vld [vmem:[%s3220 + $0x3c] sm:$0xf]
        %v3253 = vunpack.c.l.b16 %v3221
        %v3254 = vunpack.c.l.b16 %v3222
        %v3255 = vunpack.c.l.b16 %v3223
        %v3256 = vunpack.c.l.b16 %v3224
        %v3257 = vunpack.c.l.b16 %v3225
        %v3258 = vunpack.c.l.b16 %v3226
        %v3259 = vunpack.c.l.b16 %v3227
        %v3260 = vunpack.c.l.b16 %v3228
        %v3261 = vunpack.c.l.b16 %v3229
        %v3262 = vunpack.c.l.b16 %v3230
        %v3263 = vunpack.c.l.b16 %v3231
        %v3264 = vunpack.c.l.b16 %v3232
        %v3265 = vunpack.c.l.b16 %v3233
        %v3266 = vunpack.c.l.b16 %v3234
        %v3267 = vunpack.c.l.b16 %v3235
        %v3268 = vunpack.c.l.b16 %v3236
        %v3269 = vpack.c.b16 %v3254, %v3253
        %v3270 = vpack.c.b16 %v3256, %v3255
        %v3271 = vpack.c.b16 %v3258, %v3257
        %v3272 = vpack.c.b16 %v3260, %v3259
        %v3273 = vpack.c.b16 %v3262, %v3261
        %v3274 = vpack.c.b16 %v3264, %v3263
        %v3275 = vpack.c.b16 %v3266, %v3265
        %v3276 = vpack.c.b16 %v3268, %v3267
        %3285 = vmatprep.subr.bf16.mxu0 0
        %3286 = vmatpush1.bf16.msra.mxu0 %v3269
        %3287 = vmatprep.subr.bf16.mxu0 0
        %3288 = vmatpush1.bf16.msra.mxu0 %v3270
        %3289 = vmatprep.subr.bf16.mxu0 0
        %3290 = vmatpush1.bf16.msra.mxu0 %v3271
        %3291 = vmatprep.subr.bf16.mxu0 0
        %3292 = vmatpush1.bf16.msra.mxu0 %v3272
        %3293 = vmatprep.subr.bf16.mxu0 0
        %3294 = vmatpush1.bf16.msra.mxu0 %v3273
        %3295 = vmatprep.subr.bf16.mxu0 0
        %3296 = vmatpush1.bf16.msra.mxu0 %v3274
        %3297 = vmatprep.subr.bf16.mxu0 0
        %3298 = vmatpush1.bf16.msra.mxu0 %v3275
        %3299 = vmatprep.subr.bf16.mxu0 0
        %3300 = vmatpush1.bf16.msra.mxu0 %v3276
        %3301 = vmatprep.subr.bf16.mxu0 0
        %3302 = vmatpush1.bf16.msra.mxu0 0
        %3303 = vmatprep.subr.bf16.mxu0 0
        %3304 = vmatpush1.bf16.msra.mxu0 0
        %3305 = vmatprep.subr.bf16.mxu0 0
        %3306 = vmatpush1.bf16.msra.mxu0 0
        %3307 = vmatprep.subr.bf16.mxu0 0
        %3308 = vmatpush1.bf16.msra.mxu0 0
        %3309 = vmatprep.subr.bf16.mxu0 0
        %3310 = vmatpush1.bf16.msra.mxu0 0
        %3311 = vmatprep.subr.bf16.mxu0 0
        %3312 = vmatpush1.bf16.msra.mxu0 0
        %3313 = vmatprep.subr.bf16.mxu0 0
        %3314 = vmatpush1.bf16.msra.mxu0 0
        %3315 = vmatprep.subr.bf16.mxu0 0
        %3316 = vmatpush1.bf16.msra.mxu0 0
        %3317 = vmatprep.mubr.bf16.mxu0 0
        %3318 = vmatmul.mubr.bf16.gmra.mrb[0].mxu0 %v3212
        %v3319 = vpop.f32.mrb[0].mxu0
        %v3320 = vadd.f32 0.0, %v3319
        %v3321 = vpop.f32.mrb[0].mxu0
        %v3322 = vpop.f32.mrb[0].mxu0
        %v3323 = vadd.f32 0.0, %v3322
        %v3324 = vpop.f32.mrb[0].mxu0
        %3325 = vmatprep.mubr.bf16.mxu0 0
        %3326 = vmatmul.mubr.bf16.gmra.mrb[0].mxu0 %v3213
        %v3327 = vpop.f32.mrb[0].mxu0
        %v3328 = vadd.f32 0.0, %v3327
        %v3329 = vpop.f32.mrb[0].mxu0
        %v3330 = vpop.f32.mrb[0].mxu0
        %v3331 = vadd.f32 0.0, %v3330
        %v3332 = vpop.f32.mrb[0].mxu0
        %3333 = vmatprep.mubr.bf16.mxu0 0
        %3334 = vmatmul.mubr.bf16.gmra.mrb[0].mxu0 %v3214
        %v3335 = vpop.f32.mrb[0].mxu0
        %v3336 = vadd.f32 0.0, %v3335
        %v3337 = vpop.f32.mrb[0].mxu0
        %v3338 = vpop.f32.mrb[0].mxu0
        %v3339 = vadd.f32 0.0, %v3338
        %v3340 = vpop.f32.mrb[0].mxu0
        %3341 = vmatprep.mubr.bf16.mxu0 0
        %3342 = vmatmul.mubr.bf16.gmra.mrb[0].mxu0 %v3215
        %v3343 = vpop.f32.mrb[0].mxu0
        %v3344 = vadd.f32 0.0, %v3343
        %v3345 = vpop.f32.mrb[0].mxu0
        %v3346 = vpop.f32.mrb[0].mxu0
        %v3347 = vadd.f32 0.0, %v3346
        %v3348 = vpop.f32.mrb[0].mxu0
        %3349 = vmatprep.mubr.bf16.mxu0 0
        %3350 = vmatmul.mubr.bf16.gmra.mrb[0].mxu0 %v3216
        %v3351 = vpop.f32.mrb[0].mxu0
        %v3352 = vadd.f32 0.0, %v3351
        %v3353 = vpop.f32.mrb[0].mxu0
        %v3354 = vpop.f32.mrb[0].mxu0
        %v3355 = vadd.f32 0.0, %v3354
        %v3356 = vpop.f32.mrb[0].mxu0
        %3357 = vmatprep.mubr.bf16.mxu0 0
        %3358 = vmatmul.mubr.bf16.gmra.mrb[0].mxu0 %v3217
        %v3359 = vpop.f32.mrb[0].mxu0
        %v3360 = vadd.f32 0.0, %v3359
        %v3361 = vpop.f32.mrb[0].mxu0
        %v3362 = vpop.f32.mrb[0].mxu0
        %v3363 = vadd.f32 0.0, %v3362
        %v3364 = vpop.f32.mrb[0].mxu0
        %3365 = vmatprep.mubr.bf16.mxu0 0
        %3366 = vmatmul.mubr.bf16.gmra.mrb[0].mxu0 %v3218
        %v3367 = vpop.f32.mrb[0].mxu0
        %v3368 = vadd.f32 0.0, %v3367
        %v3369 = vpop.f32.mrb[0].mxu0
        %v3370 = vpop.f32.mrb[0].mxu0
        %v3371 = vadd.f32 0.0, %v3370
        %v3372 = vpop.f32.mrb[0].mxu0
        %3373 = vmatprep.mubr.bf16.mxu0 0
        %3374 = vmatmul.mubr.bf16.gmra.mrb[0].mxu0 %v3219
        %v3375 = vpop.f32.mrb[0].mxu0
        %v3376 = vadd.f32 0.0, %v3375
        %v3377 = vpop.f32.mrb[0].mxu0
        %v3378 = vpop.f32.mrb[0].mxu0
        %v3379 = vadd.f32 0.0, %v3378
        %v3380 = vpop.f32.mrb[0].mxu0
        %3381 = vdwg.mxu0
        %v3382 = vadd.f32 %v3180, %v3320
        %v3383 = vadd.f32 %v3181, %v3323
        %v3384 = vadd.f32 %v3182, %v3328
        %v3385 = vadd.f32 %v3183, %v3331
        %v3386 = vadd.f32 %v3184, %v3336
        %v3387 = vadd.f32 %v3185, %v3339
        %v3388 = vadd.f32 %v3186, %v3344
        %v3389 = vadd.f32 %v3187, %v3347
        %v3390 = vadd.f32 %v3188, %v3352
        %v3391 = vadd.f32 %v3189, %v3355
        %v3392 = vadd.f32 %v3190, %v3360
        %v3393 = vadd.f32 %v3191, %v3363
        %v3394 = vadd.f32 %v3192, %v3368
        %v3395 = vadd.f32 %v3193, %v3371
        %v3396 = vadd.f32 %v3194, %v3376
        %v3397 = vadd.f32 %v3195, %v3379
        %v3398 = vld [vmem:[%s2993 + $0x2] sm:$0xff]
        %v3399 = vld [vmem:[%s2993 + $0xa] sm:$0xff]
        %v3400 = vld [vmem:[%s2993 + $0x1a] sm:$0xff]
        %v3401 = vld [vmem:[%s2993 + $0x22] sm:$0xff]
        %v3402 = vld [vmem:[%s2993 + $0x32] sm:$0xff]
        %v3403 = vld [vmem:[%s2993 + $0x3a] sm:$0xff]
        %v3404 = vld [vmem:[%s2993 + $0x4a] sm:$0xff]
        %v3405 = vld [vmem:[%s2993 + $0x52] sm:$0xff]
        %v3406 = vld [vmem:[%s2993 + $0x62] sm:$0xff]
        %v3407 = vld [vmem:[%s2993 + $0x6a] sm:$0xff]
        %v3408 = vld [vmem:[%s2993 + $0x7a] sm:$0xff]
        %v3409 = vld [vmem:[%s2993 + $0x82] sm:$0xff]
        %v3410 = vld [vmem:[%s2993 + $0x92] sm:$0xff]
        %v3411 = vld [vmem:[%s2993 + $0x9a] sm:$0xff]
        %v3412 = vld [vmem:[%s2993 + $0xaa] sm:$0xff]
        %v3413 = vld [vmem:[%s2993 + $0xb2] sm:$0xff]
        %v3414 = vpack.c.bf16 %v3399, %v3398
        %v3415 = vpack.c.bf16 %v3401, %v3400
        %v3416 = vpack.c.bf16 %v3403, %v3402
        %v3417 = vpack.c.bf16 %v3405, %v3404
        %v3418 = vpack.c.bf16 %v3407, %v3406
        %v3419 = vpack.c.bf16 %v3409, %v3408
        %v3420 = vpack.c.bf16 %v3411, %v3410
        %v3421 = vpack.c.bf16 %v3413, %v3412
        %s3422 = scalar_lea.vmem %s3, 320
        %v3423 = vld [vmem:[%s3422] sm:$0xf]
        %v3424 = vld [vmem:[%s3422 + $0x4] sm:$0xf]
        %v3425 = vld [vmem:[%s3422 + $0x8] sm:$0xf]
        %v3426 = vld [vmem:[%s3422 + $0xc] sm:$0xf]
        %v3427 = vld [vmem:[%s3422 + $0x10] sm:$0xf]
        %v3428 = vld [vmem:[%s3422 + $0x14] sm:$0xf]
        %v3429 = vld [vmem:[%s3422 + $0x18] sm:$0xf]
        %v3430 = vld [vmem:[%s3422 + $0x1c] sm:$0xf]
        %v3431 = vld [vmem:[%s3422 + $0x20] sm:$0xf]
        %v3432 = vld [vmem:[%s3422 + $0x24] sm:$0xf]
        %v3433 = vld [vmem:[%s3422 + $0x28] sm:$0xf]
        %v3434 = vld [vmem:[%s3422 + $0x2c] sm:$0xf]
        %v3435 = vld [vmem:[%s3422 + $0x30] sm:$0xf]
        %v3436 = vld [vmem:[%s3422 + $0x34] sm:$0xf]
        %v3437 = vld [vmem:[%s3422 + $0x38] sm:$0xf]
        %v3438 = vld [vmem:[%s3422 + $0x3c] sm:$0xf]
        %v3455 = vunpack.c.l.b16 %v3423
        %v3456 = vunpack.c.l.b16 %v3424
        %v3457 = vunpack.c.l.b16 %v3425
        %v3458 = vunpack.c.l.b16 %v3426
        %v3459 = vunpack.c.l.b16 %v3427
        %v3460 = vunpack.c.l.b16 %v3428
        %v3461 = vunpack.c.l.b16 %v3429
        %v3462 = vunpack.c.l.b16 %v3430
        %v3463 = vunpack.c.l.b16 %v3431
        %v3464 = vunpack.c.l.b16 %v3432
        %v3465 = vunpack.c.l.b16 %v3433
        %v3466 = vunpack.c.l.b16 %v3434
        %v3467 = vunpack.c.l.b16 %v3435
        %v3468 = vunpack.c.l.b16 %v3436
        %v3469 = vunpack.c.l.b16 %v3437
        %v3470 = vunpack.c.l.b16 %v3438
        %v3471 = vpack.c.b16 %v3456, %v3455
        %v3472 = vpack.c.b16 %v3458, %v3457
        %v3473 = vpack.c.b16 %v3460, %v3459
        %v3474 = vpack.c.b16 %v3462, %v3461
        %v3475 = vpack.c.b16 %v3464, %v3463
        %v3476 = vpack.c.b16 %v3466, %v3465
        %v3477 = vpack.c.b16 %v3468, %v3467
        %v3478 = vpack.c.b16 %v3470, %v3469
        %3487 = vmatprep.subr.bf16.mxu0 0
        %3488 = vmatpush1.bf16.msra.mxu0 %v3471
        %3489 = vmatprep.subr.bf16.mxu0 0
        %3490 = vmatpush1.bf16.msra.mxu0 %v3472
        %3491 = vmatprep.subr.bf16.mxu0 0
        %3492 = vmatpush1.bf16.msra.mxu0 %v3473
        %3493 = vmatprep.subr.bf16.mxu0 0
        %3494 = vmatpush1.bf16.msra.mxu0 %v3474
        %3495 = vmatprep.subr.bf16.mxu0 0
        %3496 = vmatpush1.bf16.msra.mxu0 %v3475
        %3497 = vmatprep.subr.bf16.mxu0 0
        %3498 = vmatpush1.bf16.msra.mxu0 %v3476
        %3499 = vmatprep.subr.bf16.mxu0 0
        %3500 = vmatpush1.bf16.msra.mxu0 %v3477
        %3501 = vmatprep.subr.bf16.mxu0 0
        %3502 = vmatpush1.bf16.msra.mxu0 %v3478
        %3503 = vmatprep.subr.bf16.mxu0 0
        %3504 = vmatpush1.bf16.msra.mxu0 0
        %3505 = vmatprep.subr.bf16.mxu0 0
        %3506 = vmatpush1.bf16.msra.mxu0 0
        %3507 = vmatprep.subr.bf16.mxu0 0
        %3508 = vmatpush1.bf16.msra.mxu0 0
        %3509 = vmatprep.subr.bf16.mxu0 0
        %3510 = vmatpush1.bf16.msra.mxu0 0
        %3511 = vmatprep.subr.bf16.mxu0 0
        %3512 = vmatpush1.bf16.msra.mxu0 0
        %3513 = vmatprep.subr.bf16.mxu0 0
        %3514 = vmatpush1.bf16.msra.mxu0 0
        %3515 = vmatprep.subr.bf16.mxu0 0
        %3516 = vmatpush1.bf16.msra.mxu0 0
        %3517 = vmatprep.subr.bf16.mxu0 0
        %3518 = vmatpush1.bf16.msra.mxu0 0
        %3519 = vmatprep.mubr.bf16.mxu0 0
        %3520 = vmatmul.mubr.bf16.gmra.mrb[0].mxu0 %v3414
        %v3521 = vpop.f32.mrb[0].mxu0
        %v3522 = vadd.f32 0.0, %v3521
        %v3523 = vpop.f32.mrb[0].mxu0
        %v3524 = vpop.f32.mrb[0].mxu0
        %v3525 = vadd.f32 0.0, %v3524
        %v3526 = vpop.f32.mrb[0].mxu0
        %3527 = vmatprep.mubr.bf16.mxu0 0
        %3528 = vmatmul.mubr.bf16.gmra.mrb[0].mxu0 %v3415
        %v3529 = vpop.f32.mrb[0].mxu0
        %v3530 = vadd.f32 0.0, %v3529
        %v3531 = vpop.f32.mrb[0].mxu0
        %v3532 = vpop.f32.mrb[0].mxu0
        %v3533 = vadd.f32 0.0, %v3532
        %v3534 = vpop.f32.mrb[0].mxu0
        %3535 = vmatprep.mubr.bf16.mxu0 0
        %3536 = vmatmul.mubr.bf16.gmra.mrb[0].mxu0 %v3416
        %v3537 = vpop.f32.mrb[0].mxu0
        %v3538 = vadd.f32 0.0, %v3537
        %v3539 = vpop.f32.mrb[0].mxu0
        %v3540 = vpop.f32.mrb[0].mxu0
        %v3541 = vadd.f32 0.0, %v3540
        %v3542 = vpop.f32.mrb[0].mxu0
        %3543 = vmatprep.mubr.bf16.mxu0 0
        %3544 = vmatmul.mubr.bf16.gmra.mrb[0].mxu0 %v3417
        %v3545 = vpop.f32.mrb[0].mxu0
        %v3546 = vadd.f32 0.0, %v3545
        %v3547 = vpop.f32.mrb[0].mxu0
        %v3548 = vpop.f32.mrb[0].mxu0
        %v3549 = vadd.f32 0.0, %v3548
        %v3550 = vpop.f32.mrb[0].mxu0
        %3551 = vmatprep.mubr.bf16.mxu0 0
        %3552 = vmatmul.mubr.bf16.gmra.mrb[0].mxu0 %v3418
        %v3553 = vpop.f32.mrb[0].mxu0
        %v3554 = vadd.f32 0.0, %v3553
        %v3555 = vpop.f32.mrb[0].mxu0
        %v3556 = vpop.f32.mrb[0].mxu0
        %v3557 = vadd.f32 0.0, %v3556
        %v3558 = vpop.f32.mrb[0].mxu0
        %3559 = vmatprep.mubr.bf16.mxu0 0
        %3560 = vmatmul.mubr.bf16.gmra.mrb[0].mxu0 %v3419
        %v3561 = vpop.f32.mrb[0].mxu0
        %v3562 = vadd.f32 0.0, %v3561
        %v3563 = vpop.f32.mrb[0].mxu0
        %v3564 = vpop.f32.mrb[0].mxu0
        %v3565 = vadd.f32 0.0, %v3564
        %v3566 = vpop.f32.mrb[0].mxu0
        %3567 = vmatprep.mubr.bf16.mxu0 0
        %3568 = vmatmul.mubr.bf16.gmra.mrb[0].mxu0 %v3420
        %v3569 = vpop.f32.mrb[0].mxu0
        %v3570 = vadd.f32 0.0, %v3569
        %v3571 = vpop.f32.mrb[0].mxu0
        %v3572 = vpop.f32.mrb[0].mxu0
        %v3573 = vadd.f32 0.0, %v3572
        %v3574 = vpop.f32.mrb[0].mxu0
        %3575 = vmatprep.mubr.bf16.mxu0 0
        %3576 = vmatmul.mubr.bf16.gmra.mrb[0].mxu0 %v3421
        %v3577 = vpop.f32.mrb[0].mxu0
        %v3578 = vadd.f32 0.0, %v3577
        %v3579 = vpop.f32.mrb[0].mxu0
        %v3580 = vpop.f32.mrb[0].mxu0
        %v3581 = vadd.f32 0.0, %v3580
        %v3582 = vpop.f32.mrb[0].mxu0
        %3583 = vdwg.mxu0
        %v3584 = vadd.f32 %v3382, %v3522
        %v3585 = vadd.f32 %v3383, %v3525
        %v3586 = vadd.f32 %v3384, %v3530
        %v3587 = vadd.f32 %v3385, %v3533
        %v3588 = vadd.f32 %v3386, %v3538
        %v3589 = vadd.f32 %v3387, %v3541
        %v3590 = vadd.f32 %v3388, %v3546
        %v3591 = vadd.f32 %v3389, %v3549
        %v3592 = vadd.f32 %v3390, %v3554
        %v3593 = vadd.f32 %v3391, %v3557
        %v3594 = vadd.f32 %v3392, %v3562
        %v3595 = vadd.f32 %v3393, %v3565
        %v3596 = vadd.f32 %v3394, %v3570
        %v3597 = vadd.f32 %v3395, %v3573
        %v3598 = vadd.f32 %v3396, %v3578
        %v3599 = vadd.f32 %v3397, %v3581
        %s3600 = scalar_lea.vmem [#allocation2], 48
        %v3601 = vld [vmem:[%s3600] sm:$0xff]
        %v3602 = vld [vmem:[%s3600 + $0x8] sm:$0xff]
        %v3603 = vld [vmem:[%s3600 + $0x18] sm:$0xff]
        %v3604 = vld [vmem:[%s3600 + $0x20] sm:$0xff]
        %v3605 = vld [vmem:[%s3600 + $0x30] sm:$0xff]
        %v3606 = vld [vmem:[%s3600 + $0x38] sm:$0xff]
        %v3607 = vld [vmem:[%s3600 + $0x48] sm:$0xff]
        %v3608 = vld [vmem:[%s3600 + $0x50] sm:$0xff]
        %v3609 = vld [vmem:[%s3600 + $0x60] sm:$0xff]
        %v3610 = vld [vmem:[%s3600 + $0x68] sm:$0xff]
        %v3611 = vld [vmem:[%s3600 + $0x78] sm:$0xff]
        %v3612 = vld [vmem:[%s3600 + $0x80] sm:$0xff]
        %v3613 = vld [vmem:[%s3600 + $0x90] sm:$0xff]
        %v3614 = vld [vmem:[%s3600 + $0x98] sm:$0xff]
        %v3615 = vld [vmem:[%s3600 + $0xa8] sm:$0xff]
        %v3616 = vld [vmem:[%s3600 + $0xb0] sm:$0xff]
        %v3617 = vpack.c.bf16 %v3602, %v3601
        %v3618 = vpack.c.bf16 %v3604, %v3603
        %v3619 = vpack.c.bf16 %v3606, %v3605
        %v3620 = vpack.c.bf16 %v3608, %v3607
        %v3621 = vpack.c.bf16 %v3610, %v3609
        %v3622 = vpack.c.bf16 %v3612, %v3611
        %v3623 = vpack.c.bf16 %v3614, %v3613
        %v3624 = vpack.c.bf16 %v3616, %v3615
        %s3625 = scalar_lea.vmem %s3, 384
        %v3626 = vld [vmem:[%s3625] sm:$0xf]
        %v3627 = vld [vmem:[%s3625 + $0x4] sm:$0xf]
        %v3628 = vld [vmem:[%s3625 + $0x8] sm:$0xf]
        %v3629 = vld [vmem:[%s3625 + $0xc] sm:$0xf]
        %v3630 = vld [vmem:[%s3625 + $0x10] sm:$0xf]
        %v3631 = vld [vmem:[%s3625 + $0x14] sm:$0xf]
        %v3632 = vld [vmem:[%s3625 + $0x18] sm:$0xf]
        %v3633 = vld [vmem:[%s3625 + $0x1c] sm:$0xf]
        %v3634 = vld [vmem:[%s3625 + $0x20] sm:$0xf]
        %v3635 = vld [vmem:[%s3625 + $0x24] sm:$0xf]
        %v3636 = vld [vmem:[%s3625 + $0x28] sm:$0xf]
        %v3637 = vld [vmem:[%s3625 + $0x2c] sm:$0xf]
        %v3638 = vld [vmem:[%s3625 + $0x30] sm:$0xf]
        %v3639 = vld [vmem:[%s3625 + $0x34] sm:$0xf]
        %v3640 = vld [vmem:[%s3625 + $0x38] sm:$0xf]
        %v3641 = vld [vmem:[%s3625 + $0x3c] sm:$0xf]
        %v3658 = vunpack.c.l.b16 %v3626
        %v3659 = vunpack.c.l.b16 %v3627
        %v3660 = vunpack.c.l.b16 %v3628
        %v3661 = vunpack.c.l.b16 %v3629
        %v3662 = vunpack.c.l.b16 %v3630
        %v3663 = vunpack.c.l.b16 %v3631
        %v3664 = vunpack.c.l.b16 %v3632
        %v3665 = vunpack.c.l.b16 %v3633
        %v3666 = vunpack.c.l.b16 %v3634
        %v3667 = vunpack.c.l.b16 %v3635
        %v3668 = vunpack.c.l.b16 %v3636
        %v3669 = vunpack.c.l.b16 %v3637
        %v3670 = vunpack.c.l.b16 %v3638
        %v3671 = vunpack.c.l.b16 %v3639
        %v3672 = vunpack.c.l.b16 %v3640
        %v3673 = vunpack.c.l.b16 %v3641
        %v3674 = vpack.c.b16 %v3659, %v3658
        %v3675 = vpack.c.b16 %v3661, %v3660
        %v3676 = vpack.c.b16 %v3663, %v3662
        %v3677 = vpack.c.b16 %v3665, %v3664
        %v3678 = vpack.c.b16 %v3667, %v3666
        %v3679 = vpack.c.b16 %v3669, %v3668
        %v3680 = vpack.c.b16 %v3671, %v3670
        %v3681 = vpack.c.b16 %v3673, %v3672
        %3690 = vmatprep.subr.bf16.mxu0 0
        %3691 = vmatpush1.bf16.msra.mxu0 %v3674
        %3692 = vmatprep.subr.bf16.mxu0 0
        %3693 = vmatpush1.bf16.msra.mxu0 %v3675
        %3694 = vmatprep.subr.bf16.mxu0 0
        %3695 = vmatpush1.bf16.msra.mxu0 %v3676
        %3696 = vmatprep.subr.bf16.mxu0 0
        %3697 = vmatpush1.bf16.msra.mxu0 %v3677
        %3698 = vmatprep.subr.bf16.mxu0 0
        %3699 = vmatpush1.bf16.msra.mxu0 %v3678
        %3700 = vmatprep.subr.bf16.mxu0 0
        %3701 = vmatpush1.bf16.msra.mxu0 %v3679
        %3702 = vmatprep.subr.bf16.mxu0 0
        %3703 = vmatpush1.bf16.msra.mxu0 %v3680
        %3704 = vmatprep.subr.bf16.mxu0 0
        %3705 = vmatpush1.bf16.msra.mxu0 %v3681
        %3706 = vmatprep.subr.bf16.mxu0 0
        %3707 = vmatpush1.bf16.msra.mxu0 0
        %3708 = vmatprep.subr.bf16.mxu0 0
        %3709 = vmatpush1.bf16.msra.mxu0 0
        %3710 = vmatprep.subr.bf16.mxu0 0
        %3711 = vmatpush1.bf16.msra.mxu0 0
        %3712 = vmatprep.subr.bf16.mxu0 0
        %3713 = vmatpush1.bf16.msra.mxu0 0
        %3714 = vmatprep.subr.bf16.mxu0 0
        %3715 = vmatpush1.bf16.msra.mxu0 0
        %3716 = vmatprep.subr.bf16.mxu0 0
        %3717 = vmatpush1.bf16.msra.mxu0 0
        %3718 = vmatprep.subr.bf16.mxu0 0
        %3719 = vmatpush1.bf16.msra.mxu0 0
        %3720 = vmatprep.subr.bf16.mxu0 0
        %3721 = vmatpush1.bf16.msra.mxu0 0
        %3722 = vmatprep.mubr.bf16.mxu0 0
        %3723 = vmatmul.mubr.bf16.gmra.mrb[0].mxu0 %v3617
        %v3724 = vpop.f32.mrb[0].mxu0
        %v3725 = vadd.f32 0.0, %v3724
        %v3726 = vpop.f32.mrb[0].mxu0
        %v3727 = vpop.f32.mrb[0].mxu0
        %v3728 = vadd.f32 0.0, %v3727
        %v3729 = vpop.f32.mrb[0].mxu0
        %3730 = vmatprep.mubr.bf16.mxu0 0
        %3731 = vmatmul.mubr.bf16.gmra.mrb[0].mxu0 %v3618
        %v3732 = vpop.f32.mrb[0].mxu0
        %v3733 = vadd.f32 0.0, %v3732
        %v3734 = vpop.f32.mrb[0].mxu0
        %v3735 = vpop.f32.mrb[0].mxu0
        %v3736 = vadd.f32 0.0, %v3735
        %v3737 = vpop.f32.mrb[0].mxu0
        %3738 = vmatprep.mubr.bf16.mxu0 0
        %3739 = vmatmul.mubr.bf16.gmra.mrb[0].mxu0 %v3619
        %v3740 = vpop.f32.mrb[0].mxu0
        %v3741 = vadd.f32 0.0, %v3740
        %v3742 = vpop.f32.mrb[0].mxu0
        %v3743 = vpop.f32.mrb[0].mxu0
        %v3744 = vadd.f32 0.0, %v3743
        %v3745 = vpop.f32.mrb[0].mxu0
        %3746 = vmatprep.mubr.bf16.mxu0 0
        %3747 = vmatmul.mubr.bf16.gmra.mrb[0].mxu0 %v3620
        %v3748 = vpop.f32.mrb[0].mxu0
        %v3749 = vadd.f32 0.0, %v3748
        %v3750 = vpop.f32.mrb[0].mxu0
        %v3751 = vpop.f32.mrb[0].mxu0
        %v3752 = vadd.f32 0.0, %v3751
        %v3753 = vpop.f32.mrb[0].mxu0
        %3754 = vmatprep.mubr.bf16.mxu0 0
        %3755 = vmatmul.mubr.bf16.gmra.mrb[0].mxu0 %v3621
        %v3756 = vpop.f32.mrb[0].mxu0
        %v3757 = vadd.f32 0.0, %v3756
        %v3758 = vpop.f32.mrb[0].mxu0
        %v3759 = vpop.f32.mrb[0].mxu0
        %v3760 = vadd.f32 0.0, %v3759
        %v3761 = vpop.f32.mrb[0].mxu0
        %3762 = vmatprep.mubr.bf16.mxu0 0
        %3763 = vmatmul.mubr.bf16.gmra.mrb[0].mxu0 %v3622
        %v3764 = vpop.f32.mrb[0].mxu0
        %v3765 = vadd.f32 0.0, %v3764
        %v3766 = vpop.f32.mrb[0].mxu0
        %v3767 = vpop.f32.mrb[0].mxu0
        %v3768 = vadd.f32 0.0, %v3767
        %v3769 = vpop.f32.mrb[0].mxu0
        %3770 = vmatprep.mubr.bf16.mxu0 0
        %3771 = vmatmul.mubr.bf16.gmra.mrb[0].mxu0 %v3623
        %v3772 = vpop.f32.mrb[0].mxu0
        %v3773 = vadd.f32 0.0, %v3772
        %v3774 = vpop.f32.mrb[0].mxu0
        %v3775 = vpop.f32.mrb[0].mxu0
        %v3776 = vadd.f32 0.0, %v3775
        %v3777 = vpop.f32.mrb[0].mxu0
        %3778 = vmatprep.mubr.bf16.mxu0 0
        %3779 = vmatmul.mubr.bf16.gmra.mrb[0].mxu0 %v3624
        %v3780 = vpop.f32.mrb[0].mxu0
        %v3781 = vadd.f32 0.0, %v3780
        %v3782 = vpop.f32.mrb[0].mxu0
        %v3783 = vpop.f32.mrb[0].mxu0
        %v3784 = vadd.f32 0.0, %v3783
        %v3785 = vpop.f32.mrb[0].mxu0
        %3786 = vdwg.mxu0
        %v3787 = vadd.f32 %v3584, %v3725
        %v3788 = vadd.f32 %v3585, %v3728
        %v3789 = vadd.f32 %v3586, %v3733
        %v3790 = vadd.f32 %v3587, %v3736
        %v3791 = vadd.f32 %v3588, %v3741
        %v3792 = vadd.f32 %v3589, %v3744
        %v3793 = vadd.f32 %v3590, %v3749
        %v3794 = vadd.f32 %v3591, %v3752
        %v3795 = vadd.f32 %v3592, %v3757
        %v3796 = vadd.f32 %v3593, %v3760
        %v3797 = vadd.f32 %v3594, %v3765
        %v3798 = vadd.f32 %v3595, %v3768
        %v3799 = vadd.f32 %v3596, %v3773
        %v3800 = vadd.f32 %v3597, %v3776
        %v3801 = vadd.f32 %v3598, %v3781
        %v3802 = vadd.f32 %v3599, %v3784
        %v3803 = vld [vmem:[%s3600 + $0x1] sm:$0xff]
        %v3804 = vld [vmem:[%s3600 + $0x9] sm:$0xff]
        %v3805 = vld [vmem:[%s3600 + $0x19] sm:$0xff]
        %v3806 = vld [vmem:[%s3600 + $0x21] sm:$0xff]
        %v3807 = vld [vmem:[%s3600 + $0x31] sm:$0xff]
        %v3808 = vld [vmem:[%s3600 + $0x39] sm:$0xff]
        %v3809 = vld [vmem:[%s3600 + $0x49] sm:$0xff]
        %v3810 = vld [vmem:[%s3600 + $0x51] sm:$0xff]
        %v3811 = vld [vmem:[%s3600 + $0x61] sm:$0xff]
        %v3812 = vld [vmem:[%s3600 + $0x69] sm:$0xff]
        %v3813 = vld [vmem:[%s3600 + $0x79] sm:$0xff]
        %v3814 = vld [vmem:[%s3600 + $0x81] sm:$0xff]
        %v3815 = vld [vmem:[%s3600 + $0x91] sm:$0xff]
        %v3816 = vld [vmem:[%s3600 + $0x99] sm:$0xff]
        %v3817 = vld [vmem:[%s3600 + $0xa9] sm:$0xff]
        %v3818 = vld [vmem:[%s3600 + $0xb1] sm:$0xff]
        %v3819 = vpack.c.bf16 %v3804, %v3803
        %v3820 = vpack.c.bf16 %v3806, %v3805
        %v3821 = vpack.c.bf16 %v3808, %v3807
        %v3822 = vpack.c.bf16 %v3810, %v3809
        %v3823 = vpack.c.bf16 %v3812, %v3811
        %v3824 = vpack.c.bf16 %v3814, %v3813
        %v3825 = vpack.c.bf16 %v3816, %v3815
        %v3826 = vpack.c.bf16 %v3818, %v3817
        %s3827 = scalar_lea.vmem %s3, 448
        %v3828 = vld [vmem:[%s3827] sm:$0xf]
        %v3829 = vld [vmem:[%s3827 + $0x4] sm:$0xf]
        %v3830 = vld [vmem:[%s3827 + $0x8] sm:$0xf]
        %v3831 = vld [vmem:[%s3827 + $0xc] sm:$0xf]
        %v3832 = vld [vmem:[%s3827 + $0x10] sm:$0xf]
        %v3833 = vld [vmem:[%s3827 + $0x14] sm:$0xf]
        %v3834 = vld [vmem:[%s3827 + $0x18] sm:$0xf]
        %v3835 = vld [vmem:[%s3827 + $0x1c] sm:$0xf]
        %v3836 = vld [vmem:[%s3827 + $0x20] sm:$0xf]
        %v3837 = vld [vmem:[%s3827 + $0x24] sm:$0xf]
        %v3838 = vld [vmem:[%s3827 + $0x28] sm:$0xf]
        %v3839 = vld [vmem:[%s3827 + $0x2c] sm:$0xf]
        %v3840 = vld [vmem:[%s3827 + $0x30] sm:$0xf]
        %v3841 = vld [vmem:[%s3827 + $0x34] sm:$0xf]
        %v3842 = vld [vmem:[%s3827 + $0x38] sm:$0xf]
        %v3843 = vld [vmem:[%s3827 + $0x3c] sm:$0xf]
        %v3860 = vunpack.c.l.b16 %v3828
        %v3861 = vunpack.c.l.b16 %v3829
        %v3862 = vunpack.c.l.b16 %v3830
        %v3863 = vunpack.c.l.b16 %v3831
        %v3864 = vunpack.c.l.b16 %v3832
        %v3865 = vunpack.c.l.b16 %v3833
        %v3866 = vunpack.c.l.b16 %v3834
        %v3867 = vunpack.c.l.b16 %v3835
        %v3868 = vunpack.c.l.b16 %v3836
        %v3869 = vunpack.c.l.b16 %v3837
        %v3870 = vunpack.c.l.b16 %v3838
        %v3871 = vunpack.c.l.b16 %v3839
        %v3872 = vunpack.c.l.b16 %v3840
        %v3873 = vunpack.c.l.b16 %v3841
        %v3874 = vunpack.c.l.b16 %v3842
        %v3875 = vunpack.c.l.b16 %v3843
        %v3876 = vpack.c.b16 %v3861, %v3860
        %v3877 = vpack.c.b16 %v3863, %v3862
        %v3878 = vpack.c.b16 %v3865, %v3864
        %v3879 = vpack.c.b16 %v3867, %v3866
        %v3880 = vpack.c.b16 %v3869, %v3868
        %v3881 = vpack.c.b16 %v3871, %v3870
        %v3882 = vpack.c.b16 %v3873, %v3872
        %v3883 = vpack.c.b16 %v3875, %v3874
        %3892 = vmatprep.subr.bf16.mxu0 0
        %3893 = vmatpush1.bf16.msra.mxu0 %v3876
        %3894 = vmatprep.subr.bf16.mxu0 0
        %3895 = vmatpush1.bf16.msra.mxu0 %v3877
        %3896 = vmatprep.subr.bf16.mxu0 0
        %3897 = vmatpush1.bf16.msra.mxu0 %v3878
        %3898 = vmatprep.subr.bf16.mxu0 0
        %3899 = vmatpush1.bf16.msra.mxu0 %v3879
        %3900 = vmatprep.subr.bf16.mxu0 0
        %3901 = vmatpush1.bf16.msra.mxu0 %v3880
        %3902 = vmatprep.subr.bf16.mxu0 0
        %3903 = vmatpush1.bf16.msra.mxu0 %v3881
        %3904 = vmatprep.subr.bf16.mxu0 0
        %3905 = vmatpush1.bf16.msra.mxu0 %v3882
        %3906 = vmatprep.subr.bf16.mxu0 0
        %3907 = vmatpush1.bf16.msra.mxu0 %v3883
        %3908 = vmatprep.subr.bf16.mxu0 0
        %3909 = vmatpush1.bf16.msra.mxu0 0
        %3910 = vmatprep.subr.bf16.mxu0 0
        %3911 = vmatpush1.bf16.msra.mxu0 0
        %3912 = vmatprep.subr.bf16.mxu0 0
        %3913 = vmatpush1.bf16.msra.mxu0 0
        %3914 = vmatprep.subr.bf16.mxu0 0
        %3915 = vmatpush1.bf16.msra.mxu0 0
        %3916 = vmatprep.subr.bf16.mxu0 0
        %3917 = vmatpush1.bf16.msra.mxu0 0
        %3918 = vmatprep.subr.bf16.mxu0 0
        %3919 = vmatpush1.bf16.msra.mxu0 0
        %3920 = vmatprep.subr.bf16.mxu0 0
        %3921 = vmatpush1.bf16.msra.mxu0 0
        %3922 = vmatprep.subr.bf16.mxu0 0
        %3923 = vmatpush1.bf16.msra.mxu0 0
        %3924 = vmatprep.mubr.bf16.mxu0 0
        %3925 = vmatmul.mubr.bf16.gmra.mrb[0].mxu0 %v3819
        %v3926 = vpop.f32.mrb[0].mxu0
        %v3927 = vadd.f32 0.0, %v3926
        %v3928 = vpop.f32.mrb[0].mxu0
        %v3929 = vpop.f32.mrb[0].mxu0
        %v3930 = vadd.f32 0.0, %v3929
        %v3931 = vpop.f32.mrb[0].mxu0
        %3932 = vmatprep.mubr.bf16.mxu0 0
        %3933 = vmatmul.mubr.bf16.gmra.mrb[0].mxu0 %v3820
        %v3934 = vpop.f32.mrb[0].mxu0
        %v3935 = vadd.f32 0.0, %v3934
        %v3936 = vpop.f32.mrb[0].mxu0
        %v3937 = vpop.f32.mrb[0].mxu0
        %v3938 = vadd.f32 0.0, %v3937
        %v3939 = vpop.f32.mrb[0].mxu0
        %3940 = vmatprep.mubr.bf16.mxu0 0
        %3941 = vmatmul.mubr.bf16.gmra.mrb[0].mxu0 %v3821
        %v3942 = vpop.f32.mrb[0].mxu0
        %v3943 = vadd.f32 0.0, %v3942
        %v3944 = vpop.f32.mrb[0].mxu0
        %v3945 = vpop.f32.mrb[0].mxu0
        %v3946 = vadd.f32 0.0, %v3945
        %v3947 = vpop.f32.mrb[0].mxu0
        %3948 = vmatprep.mubr.bf16.mxu0 0
        %3949 = vmatmul.mubr.bf16.gmra.mrb[0].mxu0 %v3822
        %v3950 = vpop.f32.mrb[0].mxu0
        %v3951 = vadd.f32 0.0, %v3950
        %v3952 = vpop.f32.mrb[0].mxu0
        %v3953 = vpop.f32.mrb[0].mxu0
        %v3954 = vadd.f32 0.0, %v3953
        %v3955 = vpop.f32.mrb[0].mxu0
        %3956 = vmatprep.mubr.bf16.mxu0 0
        %3957 = vmatmul.mubr.bf16.gmra.mrb[0].mxu0 %v3823
        %v3958 = vpop.f32.mrb[0].mxu0
        %v3959 = vadd.f32 0.0, %v3958
        %v3960 = vpop.f32.mrb[0].mxu0
        %v3961 = vpop.f32.mrb[0].mxu0
        %v3962 = vadd.f32 0.0, %v3961
        %v3963 = vpop.f32.mrb[0].mxu0
        %3964 = vmatprep.mubr.bf16.mxu0 0
        %3965 = vmatmul.mubr.bf16.gmra.mrb[0].mxu0 %v3824
        %v3966 = vpop.f32.mrb[0].mxu0
        %v3967 = vadd.f32 0.0, %v3966
        %v3968 = vpop.f32.mrb[0].mxu0
        %v3969 = vpop.f32.mrb[0].mxu0
        %v3970 = vadd.f32 0.0, %v3969
        %v3971 = vpop.f32.mrb[0].mxu0
        %3972 = vmatprep.mubr.bf16.mxu0 0
        %3973 = vmatmul.mubr.bf16.gmra.mrb[0].mxu0 %v3825
        %v3974 = vpop.f32.mrb[0].mxu0
        %v3975 = vadd.f32 0.0, %v3974
        %v3976 = vpop.f32.mrb[0].mxu0
        %v3977 = vpop.f32.mrb[0].mxu0
        %v3978 = vadd.f32 0.0, %v3977
        %v3979 = vpop.f32.mrb[0].mxu0
        %3980 = vmatprep.mubr.bf16.mxu0 0
        %3981 = vmatmul.mubr.bf16.gmra.mrb[0].mxu0 %v3826
        %v3982 = vpop.f32.mrb[0].mxu0
        %v3983 = vadd.f32 0.0, %v3982
        %v3984 = vpop.f32.mrb[0].mxu0
        %v3985 = vpop.f32.mrb[0].mxu0
        %v3986 = vadd.f32 0.0, %v3985
        %v3987 = vpop.f32.mrb[0].mxu0
        %3988 = vdwg.mxu0
        %v3989 = vadd.f32 %v3787, %v3927
        %v3990 = vadd.f32 %v3788, %v3930
        %v3991 = vadd.f32 %v3789, %v3935
        %v3992 = vadd.f32 %v3790, %v3938
        %v3993 = vadd.f32 %v3791, %v3943
        %v3994 = vadd.f32 %v3792, %v3946
        %v3995 = vadd.f32 %v3793, %v3951
        %v3996 = vadd.f32 %v3794, %v3954
        %v3997 = vadd.f32 %v3795, %v3959
        %v3998 = vadd.f32 %v3796, %v3962
        %v3999 = vadd.f32 %v3797, %v3967
        %v4000 = vadd.f32 %v3798, %v3970
        %v4001 = vadd.f32 %v3799, %v3975
        %v4002 = vadd.f32 %v3800, %v3978
        %v4003 = vadd.f32 %v3801, %v3983
        %v4004 = vadd.f32 %v3802, %v3986
        %v4005 = vld [vmem:[%s3600 + $0x2] sm:$0xff]
        %v4006 = vld [vmem:[%s3600 + $0xa] sm:$0xff]
        %v4007 = vld [vmem:[%s3600 + $0x1a] sm:$0xff]
        %v4008 = vld [vmem:[%s3600 + $0x22] sm:$0xff]
        %v4009 = vld [vmem:[%s3600 + $0x32] sm:$0xff]
        %v4010 = vld [vmem:[%s3600 + $0x3a] sm:$0xff]
        %v4011 = vld [vmem:[%s3600 + $0x4a] sm:$0xff]
        %v4012 = vld [vmem:[%s3600 + $0x52] sm:$0xff]
        %v4013 = vld [vmem:[%s3600 + $0x62] sm:$0xff]
        %v4014 = vld [vmem:[%s3600 + $0x6a] sm:$0xff]
        %v4015 = vld [vmem:[%s3600 + $0x7a] sm:$0xff]
        %v4016 = vld [vmem:[%s3600 + $0x82] sm:$0xff]
        %v4017 = vld [vmem:[%s3600 + $0x92] sm:$0xff]
        %v4018 = vld [vmem:[%s3600 + $0x9a] sm:$0xff]
        %v4019 = vld [vmem:[%s3600 + $0xaa] sm:$0xff]
        %v4020 = vld [vmem:[%s3600 + $0xb2] sm:$0xff]
        %v4021 = vpack.c.bf16 %v4006, %v4005
        %v4022 = vpack.c.bf16 %v4008, %v4007
        %v4023 = vpack.c.bf16 %v4010, %v4009
        %v4024 = vpack.c.bf16 %v4012, %v4011
        %v4025 = vpack.c.bf16 %v4014, %v4013
        %v4026 = vpack.c.bf16 %v4016, %v4015
        %v4027 = vpack.c.bf16 %v4018, %v4017
        %v4028 = vpack.c.bf16 %v4020, %v4019
        %s4029 = scalar_lea.vmem %s3, 512
        %v4030 = vld [vmem:[%s4029] sm:$0xf]
        %v4031 = vld [vmem:[%s4029 + $0x4] sm:$0xf]
        %v4032 = vld [vmem:[%s4029 + $0x8] sm:$0xf]
        %v4033 = vld [vmem:[%s4029 + $0xc] sm:$0xf]
        %v4034 = vld [vmem:[%s4029 + $0x10] sm:$0xf]
        %v4035 = vld [vmem:[%s4029 + $0x14] sm:$0xf]
        %v4036 = vld [vmem:[%s4029 + $0x18] sm:$0xf]
        %v4037 = vld [vmem:[%s4029 + $0x1c] sm:$0xf]
        %v4038 = vld [vmem:[%s4029 + $0x20] sm:$0xf]
        %v4039 = vld [vmem:[%s4029 + $0x24] sm:$0xf]
        %v4040 = vld [vmem:[%s4029 + $0x28] sm:$0xf]
        %v4041 = vld [vmem:[%s4029 + $0x2c] sm:$0xf]
        %v4042 = vld [vmem:[%s4029 + $0x30] sm:$0xf]
        %v4043 = vld [vmem:[%s4029 + $0x34] sm:$0xf]
        %v4044 = vld [vmem:[%s4029 + $0x38] sm:$0xf]
        %v4045 = vld [vmem:[%s4029 + $0x3c] sm:$0xf]
        %v4062 = vunpack.c.l.b16 %v4030
        %v4063 = vunpack.c.l.b16 %v4031
        %v4064 = vunpack.c.l.b16 %v4032
        %v4065 = vunpack.c.l.b16 %v4033
        %v4066 = vunpack.c.l.b16 %v4034
        %v4067 = vunpack.c.l.b16 %v4035
        %v4068 = vunpack.c.l.b16 %v4036
        %v4069 = vunpack.c.l.b16 %v4037
        %v4070 = vunpack.c.l.b16 %v4038
        %v4071 = vunpack.c.l.b16 %v4039
        %v4072 = vunpack.c.l.b16 %v4040
        %v4073 = vunpack.c.l.b16 %v4041
        %v4074 = vunpack.c.l.b16 %v4042
        %v4075 = vunpack.c.l.b16 %v4043
        %v4076 = vunpack.c.l.b16 %v4044
        %v4077 = vunpack.c.l.b16 %v4045
        %v4078 = vpack.c.b16 %v4063, %v4062
        %v4079 = vpack.c.b16 %v4065, %v4064
        %v4080 = vpack.c.b16 %v4067, %v4066
        %v4081 = vpack.c.b16 %v4069, %v4068
        %v4082 = vpack.c.b16 %v4071, %v4070
        %v4083 = vpack.c.b16 %v4073, %v4072
        %v4084 = vpack.c.b16 %v4075, %v4074
        %v4085 = vpack.c.b16 %v4077, %v4076
        %4094 = vmatprep.subr.bf16.mxu0 0
        %4095 = vmatpush1.bf16.msra.mxu0 %v4078
        %4096 = vmatprep.subr.bf16.mxu0 0
        %4097 = vmatpush1.bf16.msra.mxu0 %v4079
        %4098 = vmatprep.subr.bf16.mxu0 0
        %4099 = vmatpush1.bf16.msra.mxu0 %v4080
        %4100 = vmatprep.subr.bf16.mxu0 0
        %4101 = vmatpush1.bf16.msra.mxu0 %v4081
        %4102 = vmatprep.subr.bf16.mxu0 0
        %4103 = vmatpush1.bf16.msra.mxu0 %v4082
        %4104 = vmatprep.subr.bf16.mxu0 0
        %4105 = vmatpush1.bf16.msra.mxu0 %v4083
        %4106 = vmatprep.subr.bf16.mxu0 0
        %4107 = vmatpush1.bf16.msra.mxu0 %v4084
        %4108 = vmatprep.subr.bf16.mxu0 0
        %4109 = vmatpush1.bf16.msra.mxu0 %v4085
        %4110 = vmatprep.subr.bf16.mxu0 0
        %4111 = vmatpush1.bf16.msra.mxu0 0
        %4112 = vmatprep.subr.bf16.mxu0 0
        %4113 = vmatpush1.bf16.msra.mxu0 0
        %4114 = vmatprep.subr.bf16.mxu0 0
        %4115 = vmatpush1.bf16.msra.mxu0 0
        %4116 = vmatprep.subr.bf16.mxu0 0
        %4117 = vmatpush1.bf16.msra.mxu0 0
        %4118 = vmatprep.subr.bf16.mxu0 0
        %4119 = vmatpush1.bf16.msra.mxu0 0
        %4120 = vmatprep.subr.bf16.mxu0 0
        %4121 = vmatpush1.bf16.msra.mxu0 0
        %4122 = vmatprep.subr.bf16.mxu0 0
        %4123 = vmatpush1.bf16.msra.mxu0 0
        %4124 = vmatprep.subr.bf16.mxu0 0
        %4125 = vmatpush1.bf16.msra.mxu0 0
        %4126 = vmatprep.mubr.bf16.mxu0 0
        %4127 = vmatmul.mubr.bf16.gmra.mrb[0].mxu0 %v4021
        %v4128 = vpop.f32.mrb[0].mxu0
        %v4129 = vadd.f32 0.0, %v4128
        %v4130 = vpop.f32.mrb[0].mxu0
        %v4131 = vpop.f32.mrb[0].mxu0
        %v4132 = vadd.f32 0.0, %v4131
        %v4133 = vpop.f32.mrb[0].mxu0
        %4134 = vmatprep.mubr.bf16.mxu0 0
        %4135 = vmatmul.mubr.bf16.gmra.mrb[0].mxu0 %v4022
        %v4136 = vpop.f32.mrb[0].mxu0
        %v4137 = vadd.f32 0.0, %v4136
        %v4138 = vpop.f32.mrb[0].mxu0
        %v4139 = vpop.f32.mrb[0].mxu0
        %v4140 = vadd.f32 0.0, %v4139
        %v4141 = vpop.f32.mrb[0].mxu0
        %4142 = vmatprep.mubr.bf16.mxu0 0
        %4143 = vmatmul.mubr.bf16.gmra.mrb[0].mxu0 %v4023
        %v4144 = vpop.f32.mrb[0].mxu0
        %v4145 = vadd.f32 0.0, %v4144
        %v4146 = vpop.f32.mrb[0].mxu0
        %v4147 = vpop.f32.mrb[0].mxu0
        %v4148 = vadd.f32 0.0, %v4147
        %v4149 = vpop.f32.mrb[0].mxu0
        %4150 = vmatprep.mubr.bf16.mxu0 0
        %4151 = vmatmul.mubr.bf16.gmra.mrb[0].mxu0 %v4024
        %v4152 = vpop.f32.mrb[0].mxu0
        %v4153 = vadd.f32 0.0, %v4152
        %v4154 = vpop.f32.mrb[0].mxu0
        %v4155 = vpop.f32.mrb[0].mxu0
        %v4156 = vadd.f32 0.0, %v4155
        %v4157 = vpop.f32.mrb[0].mxu0
        %4158 = vmatprep.mubr.bf16.mxu0 0
        %4159 = vmatmul.mubr.bf16.gmra.mrb[0].mxu0 %v4025
        %v4160 = vpop.f32.mrb[0].mxu0
        %v4161 = vadd.f32 0.0, %v4160
        %v4162 = vpop.f32.mrb[0].mxu0
        %v4163 = vpop.f32.mrb[0].mxu0
        %v4164 = vadd.f32 0.0, %v4163
        %v4165 = vpop.f32.mrb[0].mxu0
        %4166 = vmatprep.mubr.bf16.mxu0 0
        %4167 = vmatmul.mubr.bf16.gmra.mrb[0].mxu0 %v4026
        %v4168 = vpop.f32.mrb[0].mxu0
        %v4169 = vadd.f32 0.0, %v4168
        %v4170 = vpop.f32.mrb[0].mxu0
        %v4171 = vpop.f32.mrb[0].mxu0
        %v4172 = vadd.f32 0.0, %v4171
        %v4173 = vpop.f32.mrb[0].mxu0
        %4174 = vmatprep.mubr.bf16.mxu0 0
        %4175 = vmatmul.mubr.bf16.gmra.mrb[0].mxu0 %v4027
        %v4176 = vpop.f32.mrb[0].mxu0
        %v4177 = vadd.f32 0.0, %v4176
        %v4178 = vpop.f32.mrb[0].mxu0
        %v4179 = vpop.f32.mrb[0].mxu0
        %v4180 = vadd.f32 0.0, %v4179
        %v4181 = vpop.f32.mrb[0].mxu0
        %4182 = vmatprep.mubr.bf16.mxu0 0
        %4183 = vmatmul.mubr.bf16.gmra.mrb[0].mxu0 %v4028
        %v4184 = vpop.f32.mrb[0].mxu0
        %v4185 = vadd.f32 0.0, %v4184
        %v4186 = vpop.f32.mrb[0].mxu0
        %v4187 = vpop.f32.mrb[0].mxu0
        %v4188 = vadd.f32 0.0, %v4187
        %v4189 = vpop.f32.mrb[0].mxu0
        %4190 = vdwg.mxu0
        %v4191 = vadd.f32 %v3989, %v4129
        %v4192 = vadd.f32 %v3990, %v4132
        %v4193 = vadd.f32 %v3991, %v4137
        %v4194 = vadd.f32 %v3992, %v4140
        %v4195 = vadd.f32 %v3993, %v4145
        %v4196 = vadd.f32 %v3994, %v4148
        %v4197 = vadd.f32 %v3995, %v4153
        %v4198 = vadd.f32 %v3996, %v4156
        %v4199 = vadd.f32 %v3997, %v4161
        %v4200 = vadd.f32 %v3998, %v4164
        %v4201 = vadd.f32 %v3999, %v4169
        %v4202 = vadd.f32 %v4000, %v4172
        %v4203 = vadd.f32 %v4001, %v4177
        %v4204 = vadd.f32 %v4002, %v4180
        %v4205 = vadd.f32 %v4003, %v4185
        %v4206 = vadd.f32 %v4004, %v4188
        %v4207 = vld [vmem:[%s4] sm:$0x1]
        %v4209 = vlaneseq
        %v4210 = vshrl.u32 %v4209, 7
        %v4211 = vsub.s32 0, %v4210
        %v4212 = vrot.slane %v4207, %v4211
        %v4214 = vadd.f32 %v4191, %v4212
        %v4215 = vadd.f32 %v4192, %v4212
        %v4216 = vadd.f32 %v4193, %v4212
        %v4217 = vadd.f32 %v4194, %v4212
        %v4218 = vadd.f32 %v4195, %v4212
        %v4219 = vadd.f32 %v4196, %v4212
        %v4220 = vadd.f32 %v4197, %v4212
        %v4221 = vadd.f32 %v4198, %v4212
        %v4222 = vadd.f32 %v4199, %v4212
        %v4223 = vadd.f32 %v4200, %v4212
        %v4224 = vadd.f32 %v4201, %v4212
        %v4225 = vadd.f32 %v4202, %v4212
        %v4226 = vadd.f32 %v4203, %v4212
        %v4227 = vadd.f32 %v4204, %v4212
        %v4228 = vadd.f32 %v4205, %v4212
        %v4229 = vadd.f32 %v4206, %v4212
        %v4230 = vmax.f32 %v4214, 0.0
        %v4231 = vmax.f32 %v4215, 0.0
        %v4232 = vmax.f32 %v4216, 0.0
        %v4233 = vmax.f32 %v4217, 0.0
        %v4234 = vmax.f32 %v4218, 0.0
        %v4235 = vmax.f32 %v4219, 0.0
        %v4236 = vmax.f32 %v4220, 0.0
        %v4237 = vmax.f32 %v4221, 0.0
        %v4238 = vmax.f32 %v4222, 0.0
        %v4239 = vmax.f32 %v4223, 0.0
        %v4240 = vmax.f32 %v4224, 0.0
        %v4241 = vmax.f32 %v4225, 0.0
        %v4242 = vmax.f32 %v4226, 0.0
        %v4243 = vmax.f32 %v4227, 0.0
        %v4244 = vmax.f32 %v4228, 0.0
        %v4245 = vmax.f32 %v4229, 0.0
        %vm4246 = vcmask 1046528
        %v4247 = vrot.slane %v299, 1
        %v4248 = vrot.slane %v300, 1
        %v4249 = vsel %vm4246, %v4247, %v4248
        %v4250 = vrot.slane %v301, 1
        %v4251 = vsel %vm4246, %v4248, %v4250
        %v4252 = vrot.slane %v302, 1
        %v4253 = vrot.slane %v303, 1
        %v4254 = vsel %vm4246, %v4252, %v4253
        %v4255 = vrot.slane %v304, 1
        %v4256 = vsel %vm4246, %v4253, %v4255
        %v4257 = vrot.slane %v305, 1
        %v4258 = vrot.slane %v306, 1
        %v4259 = vsel %vm4246, %v4257, %v4258
        %v4260 = vrot.slane %v307, 1
        %v4261 = vsel %vm4246, %v4258, %v4260
        %v4262 = vrot.slane %v308, 1
        %v4263 = vrot.slane %v309, 1
        %v4264 = vsel %vm4246, %v4262, %v4263
        %v4265 = vrot.slane %v310, 1
        %v4266 = vsel %vm4246, %v4263, %v4265
        %v4267 = vrot.slane %v311, 1
        %v4268 = vrot.slane %v312, 1
        %v4269 = vsel %vm4246, %v4267, %v4268
        %v4270 = vrot.slane %v313, 1
        %v4271 = vsel %vm4246, %v4268, %v4270
        %v4272 = vrot.slane %v314, 1
        %v4273 = vrot.slane %v315, 1
        %v4274 = vsel %vm4246, %v4272, %v4273
        %v4275 = vrot.slane %v316, 1
        %v4276 = vsel %vm4246, %v4273, %v4275
        %v4277 = vrot.slane %v317, 1
        %v4278 = vrot.slane %v318, 1
        %v4279 = vsel %vm4246, %v4277, %v4278
        %v4280 = vrot.slane %v319, 1
        %v4281 = vsel %vm4246, %v4278, %v4280
        %v4282 = vrot.slane %v320, 1
        %v4283 = vrot.slane %v321, 1
        %v4284 = vsel %vm4246, %v4282, %v4283
        %v4285 = vrot.slane %v322, 1
        %v4286 = vsel %vm4246, %v4283, %v4285
        %v4303 = vpack.c.bf16 %v4231, %v4230
        %v4304 = vpack.c.bf16 %v4233, %v4232
        %v4305 = vpack.c.bf16 %v4235, %v4234
        %v4306 = vpack.c.bf16 %v4237, %v4236
        %v4307 = vpack.c.bf16 %v4239, %v4238
        %v4308 = vpack.c.bf16 %v4241, %v4240
        %v4309 = vpack.c.bf16 %v4243, %v4242
        %v4310 = vpack.c.bf16 %v4245, %v4244
        %v4311 = vld [vmem:[%s5] sm:$0xf]
        %v4312 = vld [vmem:[%s5 + $0x4] sm:$0xf]
        %v4313 = vld [vmem:[%s5 + $0x8] sm:$0xf]
        %v4314 = vld [vmem:[%s5 + $0xc] sm:$0xf]
        %v4315 = vld [vmem:[%s5 + $0x10] sm:$0xf]
        %v4316 = vld [vmem:[%s5 + $0x14] sm:$0xf]
        %v4317 = vld [vmem:[%s5 + $0x18] sm:$0xf]
        %v4318 = vld [vmem:[%s5 + $0x1c] sm:$0xf]
        %v4319 = vld [vmem:[%s5 + $0x20] sm:$0xf]
        %v4320 = vld [vmem:[%s5 + $0x24] sm:$0xf]
        %v4321 = vld [vmem:[%s5 + $0x28] sm:$0xf]
        %v4322 = vld [vmem:[%s5 + $0x2c] sm:$0xf]
        %v4323 = vld [vmem:[%s5 + $0x30] sm:$0xf]
        %v4324 = vld [vmem:[%s5 + $0x34] sm:$0xf]
        %v4325 = vld [vmem:[%s5 + $0x38] sm:$0xf]
        %v4326 = vld [vmem:[%s5 + $0x3c] sm:$0xf]
        %v4327 = vld [vmem:[%s6] sm:$0x1]
        %v4329 = vlaneseq
        %v4330 = vshrl.u32 %v4329, 7
        %v4331 = vsub.s32 0, %v4330
        %v4332 = vrot.slane %v4327, %v4331
        %v4350 = vunpack.c.l.b16 %v4311
        %v4351 = vunpack.c.l.b16 %v4312
        %v4352 = vunpack.c.l.b16 %v4313
        %v4353 = vunpack.c.l.b16 %v4314
        %v4354 = vunpack.c.l.b16 %v4315
        %v4355 = vunpack.c.l.b16 %v4316
        %v4356 = vunpack.c.l.b16 %v4317
        %v4357 = vunpack.c.l.b16 %v4318
        %v4358 = vunpack.c.l.b16 %v4319
        %v4359 = vunpack.c.l.b16 %v4320
        %v4360 = vunpack.c.l.b16 %v4321
        %v4361 = vunpack.c.l.b16 %v4322
        %v4362 = vunpack.c.l.b16 %v4323
        %v4363 = vunpack.c.l.b16 %v4324
        %v4364 = vunpack.c.l.b16 %v4325
        %v4365 = vunpack.c.l.b16 %v4326
        %v4366 = vpack.c.b16 %v4351, %v4350
        %v4367 = vpack.c.b16 %v4353, %v4352
        %v4368 = vpack.c.b16 %v4355, %v4354
        %v4369 = vpack.c.b16 %v4357, %v4356
        %v4370 = vpack.c.b16 %v4359, %v4358
        %v4371 = vpack.c.b16 %v4361, %v4360
        %v4372 = vpack.c.b16 %v4363, %v4362
        %v4373 = vpack.c.b16 %v4365, %v4364
        %4382 = vmatprep.subr.bf16.mxu0 0
        %4383 = vmatpush1.bf16.msra.mxu0 %v4366
        %4384 = vmatprep.subr.bf16.mxu0 0
        %4385 = vmatpush1.bf16.msra.mxu0 %v4367
        %4386 = vmatprep.subr.bf16.mxu0 0
        %4387 = vmatpush1.bf16.msra.mxu0 %v4368
        %4388 = vmatprep.subr.bf16.mxu0 0
        %4389 = vmatpush1.bf16.msra.mxu0 %v4369
        %4390 = vmatprep.subr.bf16.mxu0 0
        %4391 = vmatpush1.bf16.msra.mxu0 %v4370
        %4392 = vmatprep.subr.bf16.mxu0 0
        %4393 = vmatpush1.bf16.msra.mxu0 %v4371
        %4394 = vmatprep.subr.bf16.mxu0 0
        %4395 = vmatpush1.bf16.msra.mxu0 %v4372
        %4396 = vmatprep.subr.bf16.mxu0 0
        %4397 = vmatpush1.bf16.msra.mxu0 %v4373
        %4398 = vmatprep.subr.bf16.mxu0 0
        %4399 = vmatpush1.bf16.msra.mxu0 0
        %4400 = vmatprep.subr.bf16.mxu0 0
        %4401 = vmatpush1.bf16.msra.mxu0 0
        %4402 = vmatprep.subr.bf16.mxu0 0
        %4403 = vmatpush1.bf16.msra.mxu0 0
        %4404 = vmatprep.subr.bf16.mxu0 0
        %4405 = vmatpush1.bf16.msra.mxu0 0
        %4406 = vmatprep.subr.bf16.mxu0 0
        %4407 = vmatpush1.bf16.msra.mxu0 0
        %4408 = vmatprep.subr.bf16.mxu0 0
        %4409 = vmatpush1.bf16.msra.mxu0 0
        %4410 = vmatprep.subr.bf16.mxu0 0
        %4411 = vmatpush1.bf16.msra.mxu0 0
        %4412 = vmatprep.subr.bf16.mxu0 0
        %4413 = vmatpush1.bf16.msra.mxu0 0
        %4414 = vmatprep.mubr.bf16.mxu0 0
        %4415 = vmatmul.mubr.bf16.gmra.mrb[0].mxu0 %v4303
        %v4416 = vpop.f32.mrb[0].mxu0
        %v4417 = vadd.f32 %v4332, %v4416
        %v4418 = vpop.f32.mrb[0].mxu0
        %v4419 = vpop.f32.mrb[0].mxu0
        %v4420 = vadd.f32 %v4332, %v4419
        %v4421 = vpop.f32.mrb[0].mxu0
        %4422 = vmatprep.mubr.bf16.mxu0 0
        %4423 = vmatmul.mubr.bf16.gmra.mrb[0].mxu0 %v4304
        %v4424 = vpop.f32.mrb[0].mxu0
        %v4425 = vadd.f32 %v4332, %v4424
        %v4426 = vpop.f32.mrb[0].mxu0
        %v4427 = vpop.f32.mrb[0].mxu0
        %v4428 = vadd.f32 %v4332, %v4427
        %v4429 = vpop.f32.mrb[0].mxu0
        %4430 = vmatprep.mubr.bf16.mxu0 0
        %4431 = vmatmul.mubr.bf16.gmra.mrb[0].mxu0 %v4305
        %v4432 = vpop.f32.mrb[0].mxu0
        %v4433 = vadd.f32 %v4332, %v4432
        %v4434 = vpop.f32.mrb[0].mxu0
        %v4435 = vpop.f32.mrb[0].mxu0
        %v4436 = vadd.f32 %v4332, %v4435
        %v4437 = vpop.f32.mrb[0].mxu0
        %4438 = vmatprep.mubr.bf16.mxu0 0
        %4439 = vmatmul.mubr.bf16.gmra.mrb[0].mxu0 %v4306
        %v4440 = vpop.f32.mrb[0].mxu0
        %v4441 = vadd.f32 %v4332, %v4440
        %v4442 = vpop.f32.mrb[0].mxu0
        %v4443 = vpop.f32.mrb[0].mxu0
        %v4444 = vadd.f32 %v4332, %v4443
        %v4445 = vpop.f32.mrb[0].mxu0
        %4446 = vmatprep.mubr.bf16.mxu0 0
        %4447 = vmatmul.mubr.bf16.gmra.mrb[0].mxu0 %v4307
        %v4448 = vpop.f32.mrb[0].mxu0
        %v4449 = vadd.f32 %v4332, %v4448
        %v4450 = vpop.f32.mrb[0].mxu0
        %v4451 = vpop.f32.mrb[0].mxu0
        %v4452 = vadd.f32 %v4332, %v4451
        %v4453 = vpop.f32.mrb[0].mxu0
        %4454 = vmatprep.mubr.bf16.mxu0 0
        %4455 = vmatmul.mubr.bf16.gmra.mrb[0].mxu0 %v4308
        %v4456 = vpop.f32.mrb[0].mxu0
        %v4457 = vadd.f32 %v4332, %v4456
        %v4458 = vpop.f32.mrb[0].mxu0
        %v4459 = vpop.f32.mrb[0].mxu0
        %v4460 = vadd.f32 %v4332, %v4459
        %v4461 = vpop.f32.mrb[0].mxu0
        %4462 = vmatprep.mubr.bf16.mxu0 0
        %4463 = vmatmul.mubr.bf16.gmra.mrb[0].mxu0 %v4309
        %v4464 = vpop.f32.mrb[0].mxu0
        %v4465 = vadd.f32 %v4332, %v4464
        %v4466 = vpop.f32.mrb[0].mxu0
        %v4467 = vpop.f32.mrb[0].mxu0
        %v4468 = vadd.f32 %v4332, %v4467
        %v4469 = vpop.f32.mrb[0].mxu0
        %4470 = vmatprep.mubr.bf16.mxu0 0
        %4471 = vmatmul.mubr.bf16.gmra.mrb[0].mxu0 %v4310
        %v4472 = vpop.f32.mrb[0].mxu0
        %v4473 = vadd.f32 %v4332, %v4472
        %v4474 = vpop.f32.mrb[0].mxu0
        %v4475 = vpop.f32.mrb[0].mxu0
        %v4476 = vadd.f32 %v4332, %v4475
        %v4477 = vpop.f32.mrb[0].mxu0
        %4478 = vdwg.mxu0
        %v4479 = vadd.f32 %v4417, %v4249
        %v4480 = vadd.f32 %v4420, %v4251
        %v4481 = vadd.f32 %v4425, %v4254
        %v4482 = vadd.f32 %v4428, %v4256
        %v4483 = vadd.f32 %v4433, %v4259
        %v4484 = vadd.f32 %v4436, %v4261
        %v4485 = vadd.f32 %v4441, %v4264
        %v4486 = vadd.f32 %v4444, %v4266
        %v4487 = vadd.f32 %v4449, %v4269
        %v4488 = vadd.f32 %v4452, %v4271
        %v4489 = vadd.f32 %v4457, %v4274
        %v4490 = vadd.f32 %v4460, %v4276
        %v4491 = vadd.f32 %v4465, %v4279
        %v4492 = vadd.f32 %v4468, %v4281
        %v4493 = vadd.f32 %v4473, %v4284
        %v4494 = vadd.f32 %v4476, %v4286
        %v4495 = vmax.f32 %v4479, 0.0
        %v4496 = vmax.f32 %v4480, 0.0
        %v4497 = vmax.f32 %v4481, 0.0
        %v4498 = vmax.f32 %v4482, 0.0
        %v4499 = vmax.f32 %v4483, 0.0
        %v4500 = vmax.f32 %v4484, 0.0
        %v4501 = vmax.f32 %v4485, 0.0
        %v4502 = vmax.f32 %v4486, 0.0
        %v4503 = vmax.f32 %v4487, 0.0
        %v4504 = vmax.f32 %v4488, 0.0
        %v4505 = vmax.f32 %v4489, 0.0
        %v4506 = vmax.f32 %v4490, 0.0
        %v4507 = vmax.f32 %v4491, 0.0
        %v4508 = vmax.f32 %v4492, 0.0
        %v4509 = vmax.f32 %v4493, 0.0
        %v4510 = vmax.f32 %v4494, 0.0
        %4511 = vst [vmem:[%s285] sm:$0xff] %v4495
        %4512 = vst [vmem:[%s285 + $0x8] sm:$0xff] %v4496
        %4513 = vst [vmem:[%s285 + $0x10] sm:$0xff] %v4497
        %4514 = vst [vmem:[%s285 + $0x18] sm:$0xff] %v4498
        %4515 = vst [vmem:[%s285 + $0x20] sm:$0xff] %v4499
        %4516 = vst [vmem:[%s285 + $0x28] sm:$0xff] %v4500
        %4517 = vst [vmem:[%s285 + $0x30] sm:$0xff] %v4501
        %4518 = vst [vmem:[%s285 + $0x38] sm:$0xff] %v4502
        %4519 = vst [vmem:[%s285 + $0x40] sm:$0xff] %v4503
        %4520 = vst [vmem:[%s285 + $0x48] sm:$0xff] %v4504
        %4521 = vst [vmem:[%s285 + $0x50] sm:$0xff] %v4505
        %4522 = vst [vmem:[%s285 + $0x58] sm:$0xff] %v4506
        %4523 = vst [vmem:[%s285 + $0x60] sm:$0xff] %v4507
        %4524 = vst [vmem:[%s285 + $0x68] sm:$0xff] %v4508
        %4525 = vst [vmem:[%s285 + $0x70] sm:$0xff] %v4509
        %4526 = vst [vmem:[%s285 + $0x78] sm:$0xff] %v4510
        %s4527 = sand.u32 %s195, 1
        %s4528 = scalar_lea.sflag [#allocation4], %s4527
        %s4529 = sand.u32 %s195, 1
        %s4530 = smul.addr %s4529, 128
        %s4531 = scalar_lea.vmem [#allocation3], %s4530
        // Predicated region
        $region49: #{tpu_custom_call.1} parent=47 // pred_check
          %p4532 = pneg %p205
        $region50: #{tpu_custom_call.1} parent=47 // pred_check_branch
          %4534 = sbr.rel (%p4532) target = $region52
        $region51: #{tpu_custom_call.1} parent=47 // pred_region
          %s4535 = smul.u32 8, %s26
          %s4537 = ssub.s32 2048, 2048
          %4538 = vsyncadd %s4528, %s4537
          %s4539 = smul.addr %s4535, 2
          %s4540 = smul.addr %s25, 32
          %s4541 = sadd.s32 %s4539, %s4540
          %s4542 = smul.addr %s4541, 128
          %s4543 = scalar_lea.hbm %s7, %s4542
          %s4544 = sshll.u32 %s4531, 4
          %s4545 = int_to_ptr.vmem [resolvable:$true] %s4544
          %4550 = dma.vmem_to_hbm [thread:$0]  %s4545, 2048, %s4543, %s4528, 128, 128, 8
        $region52: #{tpu_custom_call.1} parent=47 // pred_fallthru
          _
      $region48: #{tpu_custom_call.1} parent=5 // pred_fallthru
        _
      %p4551 = scmp.le.s32.totalorder 2, %s16
      // Predicated region
      $region53: #{tpu_custom_call.1} parent=5 // pred_check
        %p4552 = pneg %p4551
      $region54: #{tpu_custom_call.1} parent=5 // pred_check_branch
        %4554 = sbr.rel (%p4552) target = $region56
      $region55: #{tpu_custom_call.1} parent=5 // pred_region
        %s4555 = ssub.s32 %s16, 2
        // Predicated region
        $region57: #{tpu_custom_call.1} parent=55 // pred_check
          %p4556 = pneg %p211
        $region58: #{tpu_custom_call.1} parent=55 // pred_check_branch
          %4558 = sbr.rel (%p4556) target = $region60
        $region59: #{tpu_custom_call.1} parent=55 // pred_region
          %s4559 = sand.u32 %s196, 1
          %s4560 = scalar_lea.sflag [#allocation4], %s4559
          %s4561 = sand.u32 %s196, 1
          %s4562 = smul.addr %s4561, 128
          %s4563 = scalar_lea.vmem [#allocation3], %s4562
          %4564 = dma.done %s4560, 2048
        $region60: #{tpu_custom_call.1} parent=55 // pred_fallthru
          _
      $region56: #{tpu_custom_call.1} parent=5 // pred_fallthru
        _
    $region6: #{tpu_custom_call.1} parent=1 // loop_footer
      %s20 = sadd.s32 1, %s16
    $region7: #{tpu_custom_call.1} parent=1 // loop_footer_branch
      %15 = sbr.rel target = $region3
    $region8: #{tpu_custom_call.1} parent=1 // loop_exit
      _
    %4565 = vsyncpa [#allocation4], 1
    %s4566 = scalar_lea.sflag [#allocation4], 1
    %4567 = vsyncpa %s4566, 1

</llo_original>
